<compile_context>
chip_gen: v6e
topology: v6e:2x2x1
jax: 0.10.0
libtpu: 0.0.40
codegen_flags: <defaults>
</compile_context>

<pallas_src>
import functools
import math

import jax
import jax.numpy as jnp
from jax.experimental import pallas as pl
from jax.experimental.pallas import tpu as pltpu


def _row_tile(n, target=256):
    """Largest row tile (multiple of 8, divides n, <= target) else full n."""
    if n <= target:
        return n
    for tm in (target, 128, 64, 32, 16, 8):
        if n % tm == 0:
            return tm
    return n


# ---------------------------------------------------------------------------
# Kernel 1/4: fused LayerNorm + matmul (used for LN1+attn projections and
#             LN2+router logits)
# ---------------------------------------------------------------------------

def _ln_matmul_kernel(x_ref, g_ref, b_ref, w_ref, bias_ref, o_ref, *, eps):
    x = x_ref[...].astype(jnp.float32)
    mu = jnp.mean(x, axis=-1, keepdims=True)
    var = jnp.mean((x - mu) ** 2, axis=-1, keepdims=True)
    xn = (x - mu) * jax.lax.rsqrt(var + eps)
    xn = (xn * g_ref[...] + b_ref[...]).astype(w_ref.dtype)     # bf16 MXU input
    y = jnp.dot(xn, w_ref[...], preferred_element_type=jnp.float32) + bias_ref[...]
    o_ref[...] = y.astype(o_ref.dtype)


def ln_matmul(x, gamma, beta, w, bias, out_dtype, eps=1e-5):
    N, D = x.shape
    P = w.shape[1]
    TM = _row_tile(N)
    return pl.pallas_call(
        functools.partial(_ln_matmul_kernel, eps=eps),
        out_shape=jax.ShapeDtypeStruct((N, P), out_dtype),
        grid=(N // TM,),
        in_specs=[pl.BlockSpec((TM, D), lambda i: (i, 0)),
                  pl.BlockSpec((1, D), lambda i: (0, 0)),
                  pl.BlockSpec((1, D), lambda i: (0, 0)),
                  pl.BlockSpec((D, P), lambda i: (0, 0)),
                  pl.BlockSpec((1, P), lambda i: (0, 0))],
        out_specs=pl.BlockSpec((TM, P), lambda i: (i, 0)),
        compiler_params=pltpu.CompilerParams(dimension_semantics=("parallel",)),
    )(x, gamma, beta, w, bias)


# ---------------------------------------------------------------------------
# Kernel 2: softmax attention (one (B*H) block per grid step)
# ---------------------------------------------------------------------------

def _attention_kernel(q_ref, k_ref, v_ref, o_ref, *, scale):
    q = q_ref[0]
    k = k_ref[0]
    v = v_ref[0]
    # contract last dims directly (no k.T -> no XLU transpose)
    s = jax.lax.dot_general(q, k, (((1,), (1,)), ((), ())),
                            preferred_element_type=jnp.float32) * scale
    s = s - jnp.max(s, axis=-1, keepdims=True)
    p = jnp.exp(s)
    denom = jnp.sum(p, axis=-1, keepdims=True)
    p = p * pl.reciprocal(denom, approx=True)                   # EUP, frees VALU
    o = jnp.dot(p.astype(v.dtype), v, preferred_element_type=jnp.float32)
    o_ref[0] = o.astype(o_ref.dtype)


def attention(q, k, v, scale):
    # TODO(synk): for large T convert to a flash-style kernel (KV grid axis with
    # online-softmax VMEM scratch) instead of materializing the (T, T) scores.
    BH, T, Dh = q.shape
    return pl.pallas_call(
        functools.partial(_attention_kernel, scale=scale),
        out_shape=jax.ShapeDtypeStruct((BH, T, Dh), jnp.bfloat16),
        grid=(BH,),
        in_specs=[pl.BlockSpec((1, T, Dh), lambda i: (i, 0, 0))] * 3,
        out_specs=pl.BlockSpec((1, T, Dh), lambda i: (i, 0, 0)),
        compiler_params=pltpu.CompilerParams(dimension_semantics=("parallel",)),
    )(q, k, v)


# ---------------------------------------------------------------------------
# Kernel 3: fused SwitchHead output projection + residual add.
# Gates are folded into the activation in JAX, so the per-(head,expert) output
# projections become one lane-dense (N, H*E*Dh) x (H*E*Dh, D) matmul.
# ---------------------------------------------------------------------------

def _out_proj_residual_kernel(ag_ref, wo_ref, go_ref, bo_ref, x_ref, o_ref):
    acc = jnp.dot(ag_ref[...], wo_ref[...], preferred_element_type=jnp.float32)
    acc = acc + jnp.dot(go_ref[...], bo_ref[...], preferred_element_type=jnp.float32)
    o_ref[...] = (acc + x_ref[...].astype(jnp.float32)).astype(o_ref.dtype)


def out_proj_residual(ag, wo, go, bo, x):
    N, K = ag.shape
    D = wo.shape[1]
    HE = go.shape[1]
    TM = _row_tile(N)
    return pl.pallas_call(
        _out_proj_residual_kernel,
        out_shape=jax.ShapeDtypeStruct((N, D), jnp.float32),
        grid=(N // TM,),
        in_specs=[pl.BlockSpec((TM, K), lambda i: (i, 0)),
                  pl.BlockSpec((K, D), lambda i: (0, 0)),
                  pl.BlockSpec((TM, HE), lambda i: (i, 0)),
                  pl.BlockSpec((HE, D), lambda i: (0, 0)),
                  pl.BlockSpec((TM, D), lambda i: (i, 0))],
        out_specs=pl.BlockSpec((TM, D), lambda i: (i, 0)),
        compiler_params=pltpu.CompilerParams(dimension_semantics=("parallel",)),
    )(ag, wo, go, bo, x)


# ---------------------------------------------------------------------------
# Kernel 5: fused LN2 + MoE expert FFN + residual add.
# grid = (row_tiles, experts). LN is computed once per row tile (e==0) into a
# bf16 VMEM scratch; accumulation happens in an f32 VMEM scratch; output (and
# residual add) is written only at the last expert step.
# ---------------------------------------------------------------------------

def _moe_ffn_kernel(x_ref, g_ref, b_ref, gate_ref, w1_ref, b1_ref, w2_ref, b2_ref,
                    o_ref, xn_s, acc_s, *, eps):
    e = pl.program_id(1)
    n_exp = pl.num_programs(1)

    @pl.when(e == 0)
    def _():
        x = x_ref[...].astype(jnp.float32)
        mu = jnp.mean(x, axis=-1, keepdims=True)
        var = jnp.mean((x - mu) ** 2, axis=-1, keepdims=True)
        xn = (x - mu) * jax.lax.rsqrt(var + eps)
        xn_s[...] = (xn * g_ref[...] + b_ref[...]).astype(xn_s.dtype)
        acc_s[...] = jnp.zeros_like(acc_s)

    # lane-dense (TM, E) gate tile; select column e with a one-hot lane mask.
    gates = gate_ref[...]
    lane = jax.lax.broadcasted_iota(jnp.int32, gates.shape, 1)
    g_e = jnp.sum(jnp.where(lane == e, gates, 0.0), axis=-1, keepdims=True)  # (TM,1)

    # TODO(synk): dense over all experts; a PrefetchScalarGridSpec token-routing
    # variant would skip unselected (token, expert) pairs (E/top_k FLOP saving).
    # TODO(synk): for large d_ff, add an F ("arbitrary") grid axis so w1/w2 are
    # K-tiled and the working set fits v7x's 64 MiB VMEM / v5e's 16 MiB default.
    h = jnp.dot(xn_s[...], w1_ref[0], preferred_element_type=jnp.float32) + b1_ref[0]
    h = jax.nn.gelu(h)
    h = (h * g_e).astype(w2_ref.dtype)          # fold gate into the activation
    y = jnp.dot(h, w2_ref[0], preferred_element_type=jnp.float32)
    acc_s[...] += y + g_e * b2_ref[0]

    @pl.when(e == n_exp - 1)
    def _():
        o_ref[...] = (acc_s[...] + x_ref[...].astype(jnp.float32)).astype(o_ref.dtype)


def moe_ffn_fused(x, gamma, beta, gates, w1, b1, w2, b2, eps=1e-5):
    N, D = x.shape
    E, _, F = w1.shape
    TM = _row_tile(N)
    return pl.pallas_call(
        functools.partial(_moe_ffn_kernel, eps=eps),
        out_shape=jax.ShapeDtypeStruct((N, D), jnp.float32),
        grid=(N // TM, E),
        in_specs=[pl.BlockSpec((TM, D), lambda i, e: (i, 0)),
                  pl.BlockSpec((1, D), lambda i, e: (0, 0)),
                  pl.BlockSpec((1, D), lambda i, e: (0, 0)),
                  pl.BlockSpec((TM, E), lambda i, e: (i, 0)),
                  pl.BlockSpec((1, D, F), lambda i, e: (e, 0, 0)),
                  pl.BlockSpec((1, 1, F), lambda i, e: (e, 0, 0)),
                  pl.BlockSpec((1, F, D), lambda i, e: (e, 0, 0)),
                  pl.BlockSpec((1, 1, D), lambda i, e: (e, 0, 0))],
        out_specs=pl.BlockSpec((TM, D), lambda i, e: (i, 0)),
        scratch_shapes=[pltpu.VMEM((TM, D), jnp.bfloat16),
                        pltpu.VMEM((TM, D), jnp.float32)],
        # Expert axis MUST stay "arbitrary": the scratch accumulator and the
        # last-step write rely on sequential expert visits per row tile.
        compiler_params=pltpu.CompilerParams(
            dimension_semantics=("parallel", "arbitrary")),
    )(x, gamma, beta, gates, w1, b1, w2, b2)


# ---------------------------------------------------------------------------
# Routing glue (JAX, runs under jit)
# ---------------------------------------------------------------------------

def topk_mask(scores, k):
    E = scores.shape[-1]
    _, idx = jax.lax.top_k(scores, k)
    return jnp.sum(jax.nn.one_hot(idx, E, dtype=scores.dtype), axis=-2)


def switchhead_attention(x2d, p, *, B, T, n_heads, d_head, n_experts, sel_experts):
    # TODO(synk): context_mask support omitted — Encoder is called with context_mask=None.
    N, dim = x2d.shape
    H, Dh, E = n_heads, d_head, n_experts
    qk = H * Dh

    # fused LN1 + [q | k | gv | go | per-(head,expert) value] projection
    proj = ln_matmul(x2d, p["ln1_g"], p["ln1_b"], p["w_attn_in"], p["b_attn_in"],
                     jnp.bfloat16)
    o = 0
    q = proj[:, o:o + qk]; o += qk
    k = proj[:, o:o + qk]; o += qk
    gv_l = proj[:, o:o + H * E]; o += H * E
    go_l = proj[:, o:o + H * E]; o += H * E
    v_raw = proj[:, o:o + H * E * Dh].reshape(N, H, E, Dh)

    gv = jax.nn.sigmoid(gv_l.astype(jnp.float32)).reshape(N, H, E)
    gv = gv * topk_mask(gv, sel_experts)            # sigma-MoE gating (no renorm)
    go = jax.nn.sigmoid(go_l.astype(jnp.float32)).reshape(N, H, E)
    go = go * topk_mask(go, sel_experts)

    # gate-weighted reduction over experts for the value projection (one VPU pass)
    v = jnp.einsum("nhed,nhe->nhd", v_raw.astype(jnp.float32), gv)

    def to_bh(t):                                   # (N, H, Dh) -> (B*H, T, Dh)
        return t.reshape(B, T, H, Dh).transpose(0, 2, 1, 3).reshape(B * H, T, Dh)

    qh = to_bh(q.reshape(N, H, Dh)).astype(jnp.bfloat16)
    kh = to_bh(k.reshape(N, H, Dh)).astype(jnp.bfloat16)
    vh = to_bh(v).astype(jnp.bfloat16)
    ah = attention(qh, kh, vh, 1.0 / math.sqrt(Dh))           # (B*H, T, Dh) bf16
    a = ah.reshape(B, H, T, Dh).transpose(0, 2, 1, 3).reshape(N, H, Dh)

    # fold output gates into the activation -> single lane-dense matmul + residual
    ag = jnp.einsum("nhd,nhe->nhed", a.astype(jnp.float32), go)
    ag = ag.reshape(N, H * E * Dh).astype(jnp.bfloat16)
    go_flat = go.reshape(N, H * E).astype(jnp.bfloat16)
    return out_proj_residual(ag, p["w_attn_out"], go_flat, p["b_attn_out"], x2d)


def moe_block(x2d, p, *, sel_experts):
    logits = ln_matmul(x2d, p["ln2_g"], p["ln2_b"], p["w_router"], p["b_router"],
                       jnp.float32)
    gates = jax.nn.softmax(logits, axis=-1)
    gates = gates * topk_mask(gates, sel_experts)
    gates = gates / jnp.sum(gates, axis=-1, keepdims=True)
    return moe_ffn_fused(x2d, p["ln2_g"], p["ln2_b"], gates.astype(jnp.float32),
                         p["w1"], p["b1"], p["w2"], p["b2"])


def encoder_forward(x, params, cfg):
    B, T, D = x.shape
    x2d = x.reshape(B * T, D)
    for p in params:
        x2d = switchhead_attention(
            x2d, p, B=B, T=T, n_heads=cfg["n_heads"], d_head=cfg["d_head"],
            n_experts=cfg["n_experts"], sel_experts=cfg["sel_experts"])
        x2d = moe_block(x2d, p, sel_experts=cfg["sel_experts"])
    return x2d.reshape(B, T, D)


# ---------------------------------------------------------------------------
# Parameter init (raw, f32) + inference-time preparation (fusing + bf16 cast)
# ---------------------------------------------------------------------------

def init_layer_params(key, dim, n_heads, d_head, n_experts, d_ff):
    ks = jax.random.split(key, 10)
    s = 0.02
    nrm = lambda k, shp: (s * jax.random.normal(k, shp)).astype(jnp.float32)
    z = lambda shp: jnp.zeros(shp, jnp.float32)
    return {
        "ln1_g": jnp.ones((1, dim), jnp.float32), "ln1_b": z((1, dim)),
        "ln2_g": jnp.ones((1, dim), jnp.float32), "ln2_b": z((1, dim)),
        "wq": nrm(ks[0], (dim, n_heads * d_head)), "bq": z((1, n_heads * d_head)),
        "wk": nrm(ks[1], (dim, n_heads * d_head)), "bk": z((1, n_heads * d_head)),
        "wgv": nrm(ks[2], (dim, n_heads * n_experts)), "bgv": z((1, n_heads * n_experts)),
        "wgo": nrm(ks[3], (dim, n_heads * n_experts)), "bgo": z((1, n_heads * n_experts)),
        "wv": nrm(ks[4], (n_heads, n_experts, dim, d_head)),
        "bv": z((n_heads, n_experts, 1, d_head)),
        "wo": nrm(ks[5], (n_heads, n_experts, d_head, dim)),
        "bo": z((n_heads, n_experts, 1, dim)),
        "wg_moe": nrm(ks[6], (dim, n_experts)), "bg_moe": z((1, n_experts)),
        "w1": nrm(ks[7], (n_experts, dim, d_ff)), "b1": z((n_experts, 1, d_ff)),
        "w2": nrm(ks[8], (n_experts, d_ff, dim)), "b2": z((n_experts, 1, dim)),
    }


def prepare_layer_params(p, dim, n_heads, d_head, n_experts):
    H, E, Dh = n_heads, n_experts, d_head
    wv_flat = p["wv"].transpose(2, 0, 1, 3).reshape(dim, H * E * Dh)   # (D, H*E*Dh)
    bv_flat = p["bv"].reshape(1, H * E * Dh)
    w_attn_in = jnp.concatenate(
        [p["wq"], p["wk"], p["wgv"], p["wgo"], wv_flat], axis=1).astype(jnp.bfloat16)
    b_attn_in = jnp.concatenate(
        [p["bq"], p["bk"], p["bgv"], p["bgo"], bv_flat], axis=1).astype(jnp.float32)
    return {
        "ln1_g": p["ln1_g"], "ln1_b": p["ln1_b"],
        "ln2_g": p["ln2_g"], "ln2_b": p["ln2_b"],
        "w_attn_in": w_attn_in, "b_attn_in": b_attn_in,
        "w_attn_out": p["wo"].reshape(H * E * Dh, dim).astype(jnp.bfloat16),
        "b_attn_out": p["bo"].reshape(H * E, dim).astype(jnp.bfloat16),
        "w_router": p["wg_moe"].astype(jnp.bfloat16), "b_router": p["bg_moe"],
        "w1": p["w1"].astype(jnp.bfloat16), "b1": p["b1"],
        "w2": p["w2"].astype(jnp.bfloat16), "b2": p["b2"],
    }


# ---------------------------------------------------------------------------
# Main
# ---------------------------------------------------------------------------

if __name__ == "__main__":
    cfg = dict(dim=32, n_heads=2, d_head=16, depth=2,
               n_experts=4, sel_experts=2, d_ff=64)
    B, T = 2, 16

    root = jax.random.PRNGKey(0)
    x_key, *layer_keys = jax.random.split(root, cfg["depth"] + 1)
    x = jax.random.normal(x_key, (B, T, cfg["dim"]), jnp.float32)

    raw = [init_layer_params(k, cfg["dim"], cfg["n_heads"], cfg["d_head"],
                             cfg["n_experts"], cfg["d_ff"]) for k in layer_keys]
    params = [prepare_layer_params(p, cfg["dim"], cfg["n_heads"], cfg["d_head"],
                                   cfg["n_experts"]) for p in raw]

    fwd = jax.jit(functools.partial(encoder_forward, cfg=cfg))
    out = fwd(x, params)
    out = jax.block_until_ready(out)
    assert out.shape == (B, T, cfg["dim"]), out.shape
    assert bool(jnp.all(jnp.isfinite(out)))
    print("KERNEL_OK")
</pallas_src>

<mosaic_0001>
module attributes {stable_mosaic.version = 11 : i64} {
  func.func @_ln_matmul_kernel(%arg0: i32, %arg1: memref<32x32xf32, #tpu.memory_space<vmem>>, %arg2: memref<1x32xf32, #tpu.memory_space<vmem>>, %arg3: memref<1x32xf32, #tpu.memory_space<vmem>>, %arg4: memref<32x208xbf16, #tpu.memory_space<vmem>>, %arg5: memref<1x208xf32, #tpu.memory_space<vmem>>, %arg6: memref<32x208xbf16, #tpu.memory_space<vmem>>) attributes {dimension_semantics = [#tpu.dimension_semantics<parallel>], iteration_bounds = array<i64: 1>, scalar_prefetch = 0 : i64, scratch_operands = 0 : i64, tpu.core_type = #tpu.core_type<tc>, window_params = [{transform_indices = @transform_0, window_bounds = array<i64: 32, 32>}, {pipeline_mode = #tpu.pipeline_mode<synchronous>, transform_indices = @transform_1, window_bounds = array<i64: 1, 32>}, {pipeline_mode = #tpu.pipeline_mode<synchronous>, transform_indices = @transform_2, window_bounds = array<i64: 1, 32>}, {pipeline_mode = #tpu.pipeline_mode<synchronous>, transform_indices = @transform_3, window_bounds = array<i64: 32, 208>}, {pipeline_mode = #tpu.pipeline_mode<synchronous>, transform_indices = @transform_4, window_bounds = array<i64: 1, 208>}, {transform_indices = @transform_5, window_bounds = array<i64: 32, 208>}]} {
    %c0 = arith.constant 0 : index
    %c0_0 = arith.constant 0 : index
    %0 = vector.load %arg1[%c0, %c0_0] : memref<32x32xf32, #tpu.memory_space<vmem>>, vector<32x32xf32>
    %cst = arith.constant dense<0.000000e+00> : vector<32xf32>
    %1 = vector.multi_reduction <add>, %0, %cst [1] : vector<32x32xf32> to vector<32xf32>
    %2 = vector.shape_cast %1 : vector<32xf32> to vector<32x1xf32>
    %cst_1 = arith.constant 3.200000e+01 : f32
    %3 = vector.broadcast %cst_1 : f32 to vector<32x1xf32>
    %4 = arith.divf %2, %3 : vector<32x1xf32>
    %5 = vector.broadcast %4 : vector<32x1xf32> to vector<32x32xf32>
    %6 = arith.subf %0, %5 : vector<32x32xf32>
    %7 = arith.mulf %6, %6 : vector<32x32xf32>
    %cst_2 = arith.constant dense<0.000000e+00> : vector<32xf32>
    %8 = vector.multi_reduction <add>, %7, %cst_2 [1] : vector<32x32xf32> to vector<32xf32>
    %9 = vector.shape_cast %8 : vector<32xf32> to vector<32x1xf32>
    %cst_3 = arith.constant 3.200000e+01 : f32
    %10 = vector.broadcast %cst_3 : f32 to vector<32x1xf32>
    %11 = arith.divf %9, %10 : vector<32x1xf32>
    %12 = vector.broadcast %4 : vector<32x1xf32> to vector<32x32xf32>
    %13 = arith.subf %0, %12 : vector<32x32xf32>
    %cst_4 = arith.constant 9.99999974E-6 : f32
    %14 = vector.broadcast %cst_4 : f32 to vector<32x1xf32>
    %15 = arith.addf %11, %14 : vector<32x1xf32>
    %16 = math.rsqrt %15 : vector<32x1xf32>
    %17 = vector.broadcast %16 : vector<32x1xf32> to vector<32x32xf32>
    %18 = arith.mulf %13, %17 : vector<32x32xf32>
    %c0_5 = arith.constant 0 : index
    %c0_6 = arith.constant 0 : index
    %19 = vector.load %arg2[%c0_5, %c0_6] : memref<1x32xf32, #tpu.memory_space<vmem>>, vector<1x32xf32>
    %20 = vector.broadcast %19 : vector<1x32xf32> to vector<32x32xf32>
    %21 = arith.mulf %18, %20 : vector<32x32xf32>
    %c0_7 = arith.constant 0 : index
    %c0_8 = arith.constant 0 : index
    %22 = vector.load %arg3[%c0_7, %c0_8] : memref<1x32xf32, #tpu.memory_space<vmem>>, vector<1x32xf32>
    %23 = vector.broadcast %22 : vector<1x32xf32> to vector<32x32xf32>
    %24 = arith.addf %21, %23 : vector<32x32xf32>
    %25 = arith.truncf %24 : vector<32x32xf32> to vector<32x32xbf16>
    %c0_9 = arith.constant 0 : index
    %c0_10 = arith.constant 0 : index
    %26 = vector.load %arg4[%c0_9, %c0_10] : memref<32x208xbf16, #tpu.memory_space<vmem>>, vector<32x208xbf16>
    %cst_11 = arith.constant dense<0.000000e+00> : vector<32x208xf32>
    %27 = tpu.matmul %25, %26, %cst_11 {dimension_numbers = #tpu.dot_dimension_numbers<[1], [0], [0], [1], [0, 0, 1, 1], [], []>} : vector<32x32xbf16>, vector<32x208xbf16>, vector<32x208xf32> -> vector<32x208xf32>
    %c0_12 = arith.constant 0 : index
    %c0_13 = arith.constant 0 : index
    %28 = vector.load %arg5[%c0_12, %c0_13] : memref<1x208xf32, #tpu.memory_space<vmem>>, vector<1x208xf32>
    %29 = vector.broadcast %28 : vector<1x208xf32> to vector<32x208xf32>
    %30 = arith.addf %27, %29 : vector<32x208xf32>
    %31 = arith.truncf %30 : vector<32x208xf32> to vector<32x208xbf16>
    %c0_14 = arith.constant 0 : index
    %c0_15 = arith.constant 0 : index
    %32 = vector.load %arg6[%c0_14, %c0_15] : memref<32x208xbf16, #tpu.memory_space<vmem>>, vector<32x208xbf16>
    tpu.vector_store %arg6[%c0_14, %c0_15], %31 {strides = array<i32>} : memref<32x208xbf16, #tpu.memory_space<vmem>>, vector<32x208xbf16>,
    return
  }
  func.func @transform_0(%arg0: i32) -> (i32, i32) {
    %c0_i32 = arith.constant 0 : i32
    %c0_i32_0 = arith.constant 0 : i32
    return %arg0, %c0_i32 : i32, i32
  }
  func.func @transform_1(%arg0: i32) -> (i32, i32) {
    %c0_i32 = arith.constant 0 : i32
    %c0_i32_0 = arith.constant 0 : i32
    %c0_i32_1 = arith.constant 0 : i32
    return %c0_i32, %c0_i32_0 : i32, i32
  }
  func.func @transform_2(%arg0: i32) -> (i32, i32) {
    %c0_i32 = arith.constant 0 : i32
    %c0_i32_0 = arith.constant 0 : i32
    %c0_i32_1 = arith.constant 0 : i32
    return %c0_i32, %c0_i32_0 : i32, i32
  }
  func.func @transform_3(%arg0: i32) -> (i32, i32) {
    %c0_i32 = arith.constant 0 : i32
    %c0_i32_0 = arith.constant 0 : i32
    %c0_i32_1 = arith.constant 0 : i32
    return %c0_i32, %c0_i32_0 : i32, i32
  }
  func.func @transform_4(%arg0: i32) -> (i32, i32) {
    %c0_i32 = arith.constant 0 : i32
    %c0_i32_0 = arith.constant 0 : i32
    %c0_i32_1 = arith.constant 0 : i32
    return %c0_i32, %c0_i32_0 : i32, i32
  }
  func.func @transform_5(%arg0: i32) -> (i32, i32) {
    %c0_i32 = arith.constant 0 : i32
    %c0_i32_0 = arith.constant 0 : i32
    return %arg0, %c0_i32 : i32, i32
  }
}

module attributes {stable_mosaic.version = 11 : i64} {
  func.func @_attention_kernel(%arg0: i32, %arg1: memref<1x16x16xbf16, #tpu.memory_space<vmem>>, %arg2: memref<1x16x16xbf16, #tpu.memory_space<vmem>>, %arg3: memref<1x16x16xbf16, #tpu.memory_space<vmem>>, %arg4: memref<1x16x16xbf16, #tpu.memory_space<vmem>>) attributes {dimension_semantics = [#tpu.dimension_semantics<parallel>], iteration_bounds = array<i64: 4>, scalar_prefetch = 0 : i64, scratch_operands = 0 : i64, tpu.core_type = #tpu.core_type<tc>, window_params = [{transform_indices = @transform_0, window_bounds = array<i64: 1, 16, 16>}, {transform_indices = @transform_1, window_bounds = array<i64: 1, 16, 16>}, {transform_indices = @transform_2, window_bounds = array<i64: 1, 16, 16>}, {transform_indices = @transform_3, window_bounds = array<i64: 1, 16, 16>}]} {
    %c0 = arith.constant 0 : index
    %c0_0 = arith.constant 0 : index
    %c0_1 = arith.constant 0 : index
    %0 = vector.load %arg1[%c0, %c0_0, %c0_1] : memref<1x16x16xbf16, #tpu.memory_space<vmem>>, vector<1x16x16xbf16>
    %1 = vector.shape_cast %0 : vector<1x16x16xbf16> to vector<16x16xbf16>
    %c0_2 = arith.constant 0 : index
    %c0_3 = arith.constant 0 : index
    %c0_4 = arith.constant 0 : index
    %2 = vector.load %arg2[%c0_2, %c0_3, %c0_4] : memref<1x16x16xbf16, #tpu.memory_space<vmem>>, vector<1x16x16xbf16>
    %3 = vector.shape_cast %2 : vector<1x16x16xbf16> to vector<16x16xbf16>
    %c0_5 = arith.constant 0 : index
    %c0_6 = arith.constant 0 : index
    %c0_7 = arith.constant 0 : index
    %4 = vector.load %arg3[%c0_5, %c0_6, %c0_7] : memref<1x16x16xbf16, #tpu.memory_space<vmem>>, vector<1x16x16xbf16>
    %5 = vector.shape_cast %4 : vector<1x16x16xbf16> to vector<16x16xbf16>
    %cst = arith.constant dense<0.000000e+00> : vector<16x16xf32>
    %6 = tpu.matmul %1, %3, %cst {dimension_numbers = #tpu.dot_dimension_numbers<[1], [1], [0], [0], [0, 0, 1, 0], [], []>} : vector<16x16xbf16>, vector<16x16xbf16>, vector<16x16xf32> -> vector<16x16xf32>
    %cst_8 = arith.constant 2.500000e-01 : f32
    %7 = vector.broadcast %cst_8 : f32 to vector<16x16xf32>
    %8 = arith.mulf %6, %7 : vector<16x16xf32>
    %cst_9 = arith.constant dense<0xFF800000> : vector<16xf32>
    %9 = vector.multi_reduction <maximumf>, %8, %cst_9 [1] : vector<16x16xf32> to vector<16xf32>
    %10 = vector.shape_cast %9 : vector<16xf32> to vector<16x1xf32>
    %11 = vector.broadcast %10 : vector<16x1xf32> to vector<16x16xf32>
    %12 = arith.subf %8, %11 : vector<16x16xf32>
    %13 = math.exp %12 : vector<16x16xf32>
    %cst_10 = arith.constant dense<0.000000e+00> : vector<16xf32>
    %14 = vector.multi_reduction <add>, %13, %cst_10 [1] : vector<16x16xf32> to vector<16xf32>
    %15 = vector.shape_cast %14 : vector<16xf32> to vector<16x1xf32>
    %16 = tpu.reciprocal %15 {approx = true} : vector<16x1xf32> -> vector<16x1xf32>
    %17 = vector.broadcast %16 : vector<16x1xf32> to vector<16x16xf32>
    %18 = arith.mulf %13, %17 : vector<16x16xf32>
    %19 = arith.truncf %18 : vector<16x16xf32> to vector<16x16xbf16>
    %cst_11 = arith.constant dense<0.000000e+00> : vector<16x16xf32>
    %20 = tpu.matmul %19, %5, %cst_11 {dimension_numbers = #tpu.dot_dimension_numbers<[1], [0], [0], [1], [0, 0, 1, 1], [], []>} : vector<16x16xbf16>, vector<16x16xbf16>, vector<16x16xf32> -> vector<16x16xf32>
    %21 = arith.truncf %20 : vector<16x16xf32> to vector<16x16xbf16>
    %c0_12 = arith.constant 0 : index
    %c0_13 = arith.constant 0 : index
    %c0_14 = arith.constant 0 : index
    %22 = vector.load %arg4[%c0_12, %c0_13, %c0_14] : memref<1x16x16xbf16, #tpu.memory_space<vmem>>, vector<1x16x16xbf16>
    %23 = vector.shape_cast %22 : vector<1x16x16xbf16> to vector<16x16xbf16>
    %24 = vector.shape_cast %21 : vector<16x16xbf16> to vector<1x16x16xbf16>
    tpu.vector_store %arg4[%c0_12, %c0_13, %c0_14], %24 {strides = array<i32>} : memref<1x16x16xbf16, #tpu.memory_space<vmem>>, vector<1x16x16xbf16>,
    return
  }
  func.func @transform_0(%arg0: i32) -> (i32, i32, i32) {
    %c0_i32 = arith.constant 0 : i32
    %c0_i32_0 = arith.constant 0 : i32
    %c0_i32_1 = arith.constant 0 : i32
    return %arg0, %c0_i32, %c0_i32_0 : i32, i32, i32
  }
  func.func @transform_1(%arg0: i32) -> (i32, i32, i32) {
    %c0_i32 = arith.constant 0 : i32
    %c0_i32_0 = arith.constant 0 : i32
    %c0_i32_1 = arith.constant 0 : i32
    return %arg0, %c0_i32, %c0_i32_0 : i32, i32, i32
  }
  func.func @transform_2(%arg0: i32) -> (i32, i32, i32) {
    %c0_i32 = arith.constant 0 : i32
    %c0_i32_0 = arith.constant 0 : i32
    %c0_i32_1 = arith.constant 0 : i32
    return %arg0, %c0_i32, %c0_i32_0 : i32, i32, i32
  }
  func.func @transform_3(%arg0: i32) -> (i32, i32, i32) {
    %c0_i32 = arith.constant 0 : i32
    %c0_i32_0 = arith.constant 0 : i32
    %c0_i32_1 = arith.constant 0 : i32
    return %arg0, %c0_i32, %c0_i32_0 : i32, i32, i32
  }
}

module attributes {stable_mosaic.version = 11 : i64} {
  func.func @_ln_matmul_kernel(%arg0: i32, %arg1: memref<32x32xf32, #tpu.memory_space<vmem>>, %arg2: memref<1x32xf32, #tpu.memory_space<vmem>>, %arg3: memref<1x32xf32, #tpu.memory_space<vmem>>, %arg4: memref<32x4xbf16, #tpu.memory_space<vmem>>, %arg5: memref<1x4xf32, #tpu.memory_space<vmem>>, %arg6: memref<32x4xf32, #tpu.memory_space<vmem>>) attributes {dimension_semantics = [#tpu.dimension_semantics<parallel>], iteration_bounds = array<i64: 1>, scalar_prefetch = 0 : i64, scratch_operands = 0 : i64, tpu.core_type = #tpu.core_type<tc>, window_params = [{transform_indices = @transform_0, window_bounds = array<i64: 32, 32>}, {pipeline_mode = #tpu.pipeline_mode<synchronous>, transform_indices = @transform_1, window_bounds = array<i64: 1, 32>}, {pipeline_mode = #tpu.pipeline_mode<synchronous>, transform_indices = @transform_2, window_bounds = array<i64: 1, 32>}, {pipeline_mode = #tpu.pipeline_mode<synchronous>, transform_indices = @transform_3, window_bounds = array<i64: 32, 4>}, {pipeline_mode = #tpu.pipeline_mode<synchronous>, transform_indices = @transform_4, window_bounds = array<i64: 1, 4>}, {transform_indices = @transform_5, window_bounds = array<i64: 32, 4>}]} {
    %c0 = arith.constant 0 : index
    %c0_0 = arith.constant 0 : index
    %0 = vector.load %arg1[%c0, %c0_0] : memref<32x32xf32, #tpu.memory_space<vmem>>, vector<32x32xf32>
    %cst = arith.constant dense<0.000000e+00> : vector<32xf32>
    %1 = vector.multi_reduction <add>, %0, %cst [1] : vector<32x32xf32> to vector<32xf32>
    %2 = vector.shape_cast %1 : vector<32xf32> to vector<32x1xf32>
    %cst_1 = arith.constant 3.200000e+01 : f32
    %3 = vector.broadcast %cst_1 : f32 to vector<32x1xf32>
    %4 = arith.divf %2, %3 : vector<32x1xf32>
    %5 = vector.broadcast %4 : vector<32x1xf32> to vector<32x32xf32>
    %6 = arith.subf %0, %5 : vector<32x32xf32>
    %7 = arith.mulf %6, %6 : vector<32x32xf32>
    %cst_2 = arith.constant dense<0.000000e+00> : vector<32xf32>
    %8 = vector.multi_reduction <add>, %7, %cst_2 [1] : vector<32x32xf32> to vector<32xf32>
    %9 = vector.shape_cast %8 : vector<32xf32> to vector<32x1xf32>
    %cst_3 = arith.constant 3.200000e+01 : f32
    %10 = vector.broadcast %cst_3 : f32 to vector<32x1xf32>
    %11 = arith.divf %9, %10 : vector<32x1xf32>
    %12 = vector.broadcast %4 : vector<32x1xf32> to vector<32x32xf32>
    %13 = arith.subf %0, %12 : vector<32x32xf32>
    %cst_4 = arith.constant 9.99999974E-6 : f32
    %14 = vector.broadcast %cst_4 : f32 to vector<32x1xf32>
    %15 = arith.addf %11, %14 : vector<32x1xf32>
    %16 = math.rsqrt %15 : vector<32x1xf32>
    %17 = vector.broadcast %16 : vector<32x1xf32> to vector<32x32xf32>
    %18 = arith.mulf %13, %17 : vector<32x32xf32>
    %c0_5 = arith.constant 0 : index
    %c0_6 = arith.constant 0 : index
    %19 = vector.load %arg2[%c0_5, %c0_6] : memref<1x32xf32, #tpu.memory_space<vmem>>, vector<1x32xf32>
    %20 = vector.broadcast %19 : vector<1x32xf32> to vector<32x32xf32>
    %21 = arith.mulf %18, %20 : vector<32x32xf32>
    %c0_7 = arith.constant 0 : index
    %c0_8 = arith.constant 0 : index
    %22 = vector.load %arg3[%c0_7, %c0_8] : memref<1x32xf32, #tpu.memory_space<vmem>>, vector<1x32xf32>
    %23 = vector.broadcast %22 : vector<1x32xf32> to vector<32x32xf32>
    %24 = arith.addf %21, %23 : vector<32x32xf32>
    %25 = arith.truncf %24 : vector<32x32xf32> to vector<32x32xbf16>
    %c0_9 = arith.constant 0 : index
    %c0_10 = arith.constant 0 : index
    %26 = vector.load %arg4[%c0_9, %c0_10] : memref<32x4xbf16, #tpu.memory_space<vmem>>, vector<32x4xbf16>
    %cst_11 = arith.constant dense<0.000000e+00> : vector<32x4xf32>
    %27 = tpu.matmul %25, %26, %cst_11 {dimension_numbers = #tpu.dot_dimension_numbers<[1], [0], [0], [1], [0, 0, 1, 1], [], []>} : vector<32x32xbf16>, vector<32x4xbf16>, vector<32x4xf32> -> vector<32x4xf32>
    %c0_12 = arith.constant 0 : index
    %c0_13 = arith.constant 0 : index
    %28 = vector.load %arg5[%c0_12, %c0_13] : memref<1x4xf32, #tpu.memory_space<vmem>>, vector<1x4xf32>
    %29 = vector.broadcast %28 : vector<1x4xf32> to vector<32x4xf32>
    %30 = arith.addf %27, %29 : vector<32x4xf32>
    %c0_14 = arith.constant 0 : index
    %c0_15 = arith.constant 0 : index
    %31 = vector.load %arg6[%c0_14, %c0_15] : memref<32x4xf32, #tpu.memory_space<vmem>>, vector<32x4xf32>
    tpu.vector_store %arg6[%c0_14, %c0_15], %30 {strides = array<i32>} : memref<32x4xf32, #tpu.memory_space<vmem>>, vector<32x4xf32>,
    return
  }
  func.func @transform_0(%arg0: i32) -> (i32, i32) {
    %c0_i32 = arith.constant 0 : i32
    %c0_i32_0 = arith.constant 0 : i32
    return %arg0, %c0_i32 : i32, i32
  }
  func.func @transform_1(%arg0: i32) -> (i32, i32) {
    %c0_i32 = arith.constant 0 : i32
    %c0_i32_0 = arith.constant 0 : i32
    %c0_i32_1 = arith.constant 0 : i32
    return %c0_i32, %c0_i32_0 : i32, i32
  }
  func.func @transform_2(%arg0: i32) -> (i32, i32) {
    %c0_i32 = arith.constant 0 : i32
    %c0_i32_0 = arith.constant 0 : i32
    %c0_i32_1 = arith.constant 0 : i32
    return %c0_i32, %c0_i32_0 : i32, i32
  }
  func.func @transform_3(%arg0: i32) -> (i32, i32) {
    %c0_i32 = arith.constant 0 : i32
    %c0_i32_0 = arith.constant 0 : i32
    %c0_i32_1 = arith.constant 0 : i32
    return %c0_i32, %c0_i32_0 : i32, i32
  }
  func.func @transform_4(%arg0: i32) -> (i32, i32) {
    %c0_i32 = arith.constant 0 : i32
    %c0_i32_0 = arith.constant 0 : i32
    %c0_i32_1 = arith.constant 0 : i32
    return %c0_i32, %c0_i32_0 : i32, i32
  }
  func.func @transform_5(%arg0: i32) -> (i32, i32) {
    %c0_i32 = arith.constant 0 : i32
    %c0_i32_0 = arith.constant 0 : i32
    return %arg0, %c0_i32 : i32, i32
  }
}

module attributes {stable_mosaic.version = 11 : i64} {
  func.func @_out_proj_residual_kernel(%arg0: i32, %arg1: memref<32x128xbf16, #tpu.memory_space<vmem>>, %arg2: memref<128x32xbf16, #tpu.memory_space<vmem>>, %arg3: memref<32x8xbf16, #tpu.memory_space<vmem>>, %arg4: memref<8x32xbf16, #tpu.memory_space<vmem>>, %arg5: memref<32x32xf32, #tpu.memory_space<vmem>>, %arg6: memref<32x32xf32, #tpu.memory_space<vmem>>) attributes {dimension_semantics = [#tpu.dimension_semantics<parallel>], iteration_bounds = array<i64: 1>, scalar_prefetch = 0 : i64, scratch_operands = 0 : i64, tpu.core_type = #tpu.core_type<tc>, window_params = [{transform_indices = @transform_0, window_bounds = array<i64: 32, 128>}, {pipeline_mode = #tpu.pipeline_mode<synchronous>, transform_indices = @transform_1, window_bounds = array<i64: 128, 32>}, {transform_indices = @transform_2, window_bounds = array<i64: 32, 8>}, {pipeline_mode = #tpu.pipeline_mode<synchronous>, transform_indices = @transform_3, window_bounds = array<i64: 8, 32>}, {transform_indices = @transform_4, window_bounds = array<i64: 32, 32>}, {transform_indices = @transform_5, window_bounds = array<i64: 32, 32>}]} {
    %c0 = arith.constant 0 : index
    %c0_0 = arith.constant 0 : index
    %0 = vector.load %arg1[%c0, %c0_0] : memref<32x128xbf16, #tpu.memory_space<vmem>>, vector<32x128xbf16>
    %c0_1 = arith.constant 0 : index
    %c0_2 = arith.constant 0 : index
    %1 = vector.load %arg2[%c0_1, %c0_2] : memref<128x32xbf16, #tpu.memory_space<vmem>>, vector<128x32xbf16>
    %cst = arith.constant dense<0.000000e+00> : vector<32x32xf32>
    %2 = tpu.matmul %0, %1, %cst {dimension_numbers = #tpu.dot_dimension_numbers<[1], [0], [0], [1], [0, 0, 1, 1], [], []>} : vector<32x128xbf16>, vector<128x32xbf16>, vector<32x32xf32> -> vector<32x32xf32>
    %c0_3 = arith.constant 0 : index
    %c0_4 = arith.constant 0 : index
    %3 = vector.load %arg3[%c0_3, %c0_4] : memref<32x8xbf16, #tpu.memory_space<vmem>>, vector<32x8xbf16>
    %c0_5 = arith.constant 0 : index
    %c0_6 = arith.constant 0 : index
    %4 = vector.load %arg4[%c0_5, %c0_6] : memref<8x32xbf16, #tpu.memory_space<vmem>>, vector<8x32xbf16>
    %cst_7 = arith.constant dense<0.000000e+00> : vector<32x32xf32>
    %5 = tpu.matmul %3, %4, %cst_7 {dimension_numbers = #tpu.dot_dimension_numbers<[1], [0], [0], [1], [0, 0, 1, 1], [], []>} : vector<32x8xbf16>, vector<8x32xbf16>, vector<32x32xf32> -> vector<32x32xf32>
    %6 = arith.addf %2, %5 : vector<32x32xf32>
    %c0_8 = arith.constant 0 : index
    %c0_9 = arith.constant 0 : index
    %7 = vector.load %arg5[%c0_8, %c0_9] : memref<32x32xf32, #tpu.memory_space<vmem>>, vector<32x32xf32>
    %8 = arith.addf %6, %7 : vector<32x32xf32>
    %c0_10 = arith.constant 0 : index
    %c0_11 = arith.constant 0 : index
    %9 = vector.load %arg6[%c0_10, %c0_11] : memref<32x32xf32, #tpu.memory_space<vmem>>, vector<32x32xf32>
    tpu.vector_store %arg6[%c0_10, %c0_11], %8 {strides = array<i32>} : memref<32x32xf32, #tpu.memory_space<vmem>>, vector<32x32xf32>,
    return
  }
  func.func @transform_0(%arg0: i32) -> (i32, i32) {
    %c0_i32 = arith.constant 0 : i32
    %c0_i32_0 = arith.constant 0 : i32
    return %arg0, %c0_i32 : i32, i32
  }
  func.func @transform_1(%arg0: i32) -> (i32, i32) {
    %c0_i32 = arith.constant 0 : i32
    %c0_i32_0 = arith.constant 0 : i32
    %c0_i32_1 = arith.constant 0 : i32
    return %c0_i32, %c0_i32_0 : i32, i32
  }
  func.func @transform_2(%arg0: i32) -> (i32, i32) {
    %c0_i32 = arith.constant 0 : i32
    %c0_i32_0 = arith.constant 0 : i32
    return %arg0, %c0_i32 : i32, i32
  }
  func.func @transform_3(%arg0: i32) -> (i32, i32) {
    %c0_i32 = arith.constant 0 : i32
    %c0_i32_0 = arith.constant 0 : i32
    %c0_i32_1 = arith.constant 0 : i32
    return %c0_i32, %c0_i32_0 : i32, i32
  }
  func.func @transform_4(%arg0: i32) -> (i32, i32) {
    %c0_i32 = arith.constant 0 : i32
    %c0_i32_0 = arith.constant 0 : i32
    return %arg0, %c0_i32 : i32, i32
  }
  func.func @transform_5(%arg0: i32) -> (i32, i32) {
    %c0_i32 = arith.constant 0 : i32
    %c0_i32_0 = arith.constant 0 : i32
    return %arg0, %c0_i32 : i32, i32
  }
}

module attributes {stable_mosaic.version = 11 : i64} {
  func.func @_ln_matmul_kernel(%arg0: i32, %arg1: memref<32x32xf32, #tpu.memory_space<vmem>>, %arg2: memref<1x32xf32, #tpu.memory_space<vmem>>, %arg3: memref<1x32xf32, #tpu.memory_space<vmem>>, %arg4: memref<32x208xbf16, #tpu.memory_space<vmem>>, %arg5: memref<1x208xf32, #tpu.memory_space<vmem>>, %arg6: memref<32x208xbf16, #tpu.memory_space<vmem>>) attributes {dimension_semantics = [#tpu.dimension_semantics<parallel>], iteration_bounds = array<i64: 1>, scalar_prefetch = 0 : i64, scratch_operands = 0 : i64, tpu.core_type = #tpu.core_type<tc>, window_params = [{transform_indices = @transform_0, window_bounds = array<i64: 32, 32>}, {pipeline_mode = #tpu.pipeline_mode<synchronous>, transform_indices = @transform_1, window_bounds = array<i64: 1, 32>}, {pipeline_mode = #tpu.pipeline_mode<synchronous>, transform_indices = @transform_2, window_bounds = array<i64: 1, 32>}, {pipeline_mode = #tpu.pipeline_mode<synchronous>, transform_indices = @transform_3, window_bounds = array<i64: 32, 208>}, {pipeline_mode = #tpu.pipeline_mode<synchronous>, transform_indices = @transform_4, window_bounds = array<i64: 1, 208>}, {transform_indices = @transform_5, window_bounds = array<i64: 32, 208>}]} {
    %c0 = arith.constant 0 : index
    %c0_0 = arith.constant 0 : index
    %0 = vector.load %arg1[%c0, %c0_0] : memref<32x32xf32, #tpu.memory_space<vmem>>, vector<32x32xf32>
    %cst = arith.constant dense<0.000000e+00> : vector<32xf32>
    %1 = vector.multi_reduction <add>, %0, %cst [1] : vector<32x32xf32> to vector<32xf32>
    %2 = vector.shape_cast %1 : vector<32xf32> to vector<32x1xf32>
    %cst_1 = arith.constant 3.200000e+01 : f32
    %3 = vector.broadcast %cst_1 : f32 to vector<32x1xf32>
    %4 = arith.divf %2, %3 : vector<32x1xf32>
    %5 = vector.broadcast %4 : vector<32x1xf32> to vector<32x32xf32>
    %6 = arith.subf %0, %5 : vector<32x32xf32>
    %7 = arith.mulf %6, %6 : vector<32x32xf32>
    %cst_2 = arith.constant dense<0.000000e+00> : vector<32xf32>
    %8 = vector.multi_reduction <add>, %7, %cst_2 [1] : vector<32x32xf32> to vector<32xf32>
    %9 = vector.shape_cast %8 : vector<32xf32> to vector<32x1xf32>
    %cst_3 = arith.constant 3.200000e+01 : f32
    %10 = vector.broadcast %cst_3 : f32 to vector<32x1xf32>
    %11 = arith.divf %9, %10 : vector<32x1xf32>
    %12 = vector.broadcast %4 : vector<32x1xf32> to vector<32x32xf32>
    %13 = arith.subf %0, %12 : vector<32x32xf32>
    %cst_4 = arith.constant 9.99999974E-6 : f32
    %14 = vector.broadcast %cst_4 : f32 to vector<32x1xf32>
    %15 = arith.addf %11, %14 : vector<32x1xf32>
    %16 = math.rsqrt %15 : vector<32x1xf32>
    %17 = vector.broadcast %16 : vector<32x1xf32> to vector<32x32xf32>
    %18 = arith.mulf %13, %17 : vector<32x32xf32>
    %c0_5 = arith.constant 0 : index
    %c0_6 = arith.constant 0 : index
    %19 = vector.load %arg2[%c0_5, %c0_6] : memref<1x32xf32, #tpu.memory_space<vmem>>, vector<1x32xf32>
    %20 = vector.broadcast %19 : vector<1x32xf32> to vector<32x32xf32>
    %21 = arith.mulf %18, %20 : vector<32x32xf32>
    %c0_7 = arith.constant 0 : index
    %c0_8 = arith.constant 0 : index
    %22 = vector.load %arg3[%c0_7, %c0_8] : memref<1x32xf32, #tpu.memory_space<vmem>>, vector<1x32xf32>
    %23 = vector.broadcast %22 : vector<1x32xf32> to vector<32x32xf32>
    %24 = arith.addf %21, %23 : vector<32x32xf32>
    %25 = arith.truncf %24 : vector<32x32xf32> to vector<32x32xbf16>
    %c0_9 = arith.constant 0 : index
    %c0_10 = arith.constant 0 : index
    %26 = vector.load %arg4[%c0_9, %c0_10] : memref<32x208xbf16, #tpu.memory_space<vmem>>, vector<32x208xbf16>
    %cst_11 = arith.constant dense<0.000000e+00> : vector<32x208xf32>
    %27 = tpu.matmul %25, %26, %cst_11 {dimension_numbers = #tpu.dot_dimension_numbers<[1], [0], [0], [1], [0, 0, 1, 1], [], []>} : vector<32x32xbf16>, vector<32x208xbf16>, vector<32x208xf32> -> vector<32x208xf32>
    %c0_12 = arith.constant 0 : index
    %c0_13 = arith.constant 0 : index
    %28 = vector.load %arg5[%c0_12, %c0_13] : memref<1x208xf32, #tpu.memory_space<vmem>>, vector<1x208xf32>
    %29 = vector.broadcast %28 : vector<1x208xf32> to vector<32x208xf32>
    %30 = arith.addf %27, %29 : vector<32x208xf32>
    %31 = arith.truncf %30 : vector<32x208xf32> to vector<32x208xbf16>
    %c0_14 = arith.constant 0 : index
    %c0_15 = arith.constant 0 : index
    %32 = vector.load %arg6[%c0_14, %c0_15] : memref<32x208xbf16, #tpu.memory_space<vmem>>, vector<32x208xbf16>
    tpu.vector_store %arg6[%c0_14, %c0_15], %31 {strides = array<i32>} : memref<32x208xbf16, #tpu.memory_space<vmem>>, vector<32x208xbf16>,
    return
  }
  func.func @transform_0(%arg0: i32) -> (i32, i32) {
    %c0_i32 = arith.constant 0 : i32
    %c0_i32_0 = arith.constant 0 : i32
    return %arg0, %c0_i32 : i32, i32
  }
  func.func @transform_1(%arg0: i32) -> (i32, i32) {
    %c0_i32 = arith.constant 0 : i32
    %c0_i32_0 = arith.constant 0 : i32
    %c0_i32_1 = arith.constant 0 : i32
    return %c0_i32, %c0_i32_0 : i32, i32
  }
  func.func @transform_2(%arg0: i32) -> (i32, i32) {
    %c0_i32 = arith.constant 0 : i32
    %c0_i32_0 = arith.constant 0 : i32
    %c0_i32_1 = arith.constant 0 : i32
    return %c0_i32, %c0_i32_0 : i32, i32
  }
  func.func @transform_3(%arg0: i32) -> (i32, i32) {
    %c0_i32 = arith.constant 0 : i32
    %c0_i32_0 = arith.constant 0 : i32
    %c0_i32_1 = arith.constant 0 : i32
    return %c0_i32, %c0_i32_0 : i32, i32
  }
  func.func @transform_4(%arg0: i32) -> (i32, i32) {
    %c0_i32 = arith.constant 0 : i32
    %c0_i32_0 = arith.constant 0 : i32
    %c0_i32_1 = arith.constant 0 : i32
    return %c0_i32, %c0_i32_0 : i32, i32
  }
  func.func @transform_5(%arg0: i32) -> (i32, i32) {
    %c0_i32 = arith.constant 0 : i32
    %c0_i32_0 = arith.constant 0 : i32
    return %arg0, %c0_i32 : i32, i32
  }
}

module attributes {stable_mosaic.version = 11 : i64} {
  func.func @_moe_ffn_kernel(%arg0: i32, %arg1: i32, %arg2: memref<32x32xf32, #tpu.memory_space<vmem>>, %arg3: memref<1x32xf32, #tpu.memory_space<vmem>>, %arg4: memref<1x32xf32, #tpu.memory_space<vmem>>, %arg5: memref<32x4xf32, #tpu.memory_space<vmem>>, %arg6: memref<1x32x64xbf16, #tpu.memory_space<vmem>>, %arg7: memref<1x1x64xf32, #tpu.memory_space<vmem>>, %arg8: memref<1x64x32xbf16, #tpu.memory_space<vmem>>, %arg9: memref<1x1x32xf32, #tpu.memory_space<vmem>>, %arg10: memref<32x32xf32, #tpu.memory_space<vmem>>, %arg11: memref<32x32xbf16, #tpu.memory_space<vmem>>, %arg12: memref<32x32xf32, #tpu.memory_space<vmem>>) attributes {dimension_semantics = [#tpu.dimension_semantics<parallel>, #tpu.dimension_semantics<arbitrary>], iteration_bounds = array<i64: 1, 4>, scalar_prefetch = 0 : i64, scratch_operands = 2 : i64, tpu.core_type = #tpu.core_type<tc>, window_params = [{transform_indices = @transform_0, window_bounds = array<i64: 32, 32>}, {pipeline_mode = #tpu.pipeline_mode<synchronous>, transform_indices = @transform_1, window_bounds = array<i64: 1, 32>}, {pipeline_mode = #tpu.pipeline_mode<synchronous>, transform_indices = @transform_2, window_bounds = array<i64: 1, 32>}, {transform_indices = @transform_3, window_bounds = array<i64: 32, 4>}, {transform_indices = @transform_4, window_bounds = array<i64: 1, 32, 64>}, {transform_indices = @transform_5, window_bounds = array<i64: 1, 1, 64>}, {transform_indices = @transform_6, window_bounds = array<i64: 1, 64, 32>}, {transform_indices = @transform_7, window_bounds = array<i64: 1, 1, 32>}, {transform_indices = @transform_8, window_bounds = array<i64: 32, 32>}]} {
    %c0_i32 = arith.constant 0 : i32
    %0 = arith.cmpi eq, %arg1, %c0_i32 : i32
    %1 = arith.extui %0 : i1 to i32
    %c0_i32_0 = arith.constant 0 : i32
    %2 = arith.cmpi ne, %1, %c0_i32_0 : i32
    scf.if %2 {
      %c0_28 = arith.constant 0 : index
      %c0_29 = arith.constant 0 : index
      %50 = vector.load %arg2[%c0_28, %c0_29] : memref<32x32xf32, #tpu.memory_space<vmem>>, vector<32x32xf32>
      %cst_30 = arith.constant dense<0.000000e+00> : vector<32xf32>
      %51 = vector.multi_reduction <add>, %50, %cst_30 [1] : vector<32x32xf32> to vector<32xf32>
      %52 = vector.shape_cast %51 : vector<32xf32> to vector<32x1xf32>
      %cst_31 = arith.constant 3.200000e+01 : f32
      %53 = vector.broadcast %cst_31 : f32 to vector<32x1xf32>
      %54 = arith.divf %52, %53 : vector<32x1xf32>
      %55 = vector.broadcast %54 : vector<32x1xf32> to vector<32x32xf32>
      %56 = arith.subf %50, %55 : vector<32x32xf32>
      %57 = arith.mulf %56, %56 : vector<32x32xf32>
      %cst_32 = arith.constant dense<0.000000e+00> : vector<32xf32>
      %58 = vector.multi_reduction <add>, %57, %cst_32 [1] : vector<32x32xf32> to vector<32xf32>
      %59 = vector.shape_cast %58 : vector<32xf32> to vector<32x1xf32>
      %cst_33 = arith.constant 3.200000e+01 : f32
      %60 = vector.broadcast %cst_33 : f32 to vector<32x1xf32>
      %61 = arith.divf %59, %60 : vector<32x1xf32>
      %62 = vector.broadcast %54 : vector<32x1xf32> to vector<32x32xf32>
      %63 = arith.subf %50, %62 : vector<32x32xf32>
      %cst_34 = arith.constant 9.99999974E-6 : f32
      %64 = vector.broadcast %cst_34 : f32 to vector<32x1xf32>
      %65 = arith.addf %61, %64 : vector<32x1xf32>
      %66 = math.rsqrt %65 : vector<32x1xf32>
      %67 = vector.broadcast %66 : vector<32x1xf32> to vector<32x32xf32>
      %68 = arith.mulf %63, %67 : vector<32x32xf32>
      %c0_35 = arith.constant 0 : index
      %c0_36 = arith.constant 0 : index
      %69 = vector.load %arg3[%c0_35, %c0_36] : memref<1x32xf32, #tpu.memory_space<vmem>>, vector<1x32xf32>
      %70 = vector.broadcast %69 : vector<1x32xf32> to vector<32x32xf32>
      %71 = arith.mulf %68, %70 : vector<32x32xf32>
      %c0_37 = arith.constant 0 : index
      %c0_38 = arith.constant 0 : index
      %72 = vector.load %arg4[%c0_37, %c0_38] : memref<1x32xf32, #tpu.memory_space<vmem>>, vector<1x32xf32>
      %73 = vector.broadcast %72 : vector<1x32xf32> to vector<32x32xf32>
      %74 = arith.addf %71, %73 : vector<32x32xf32>
      %75 = arith.truncf %74 : vector<32x32xf32> to vector<32x32xbf16>
      %c0_39 = arith.constant 0 : index
      %c0_40 = arith.constant 0 : index
      %76 = vector.load %arg11[%c0_39, %c0_40] : memref<32x32xbf16, #tpu.memory_space<vmem>>, vector<32x32xbf16>
      tpu.vector_store %arg11[%c0_39, %c0_40], %75 {strides = array<i32>} : memref<32x32xbf16, #tpu.memory_space<vmem>>, vector<32x32xbf16>,
      %cst_41 = arith.constant 0.000000e+00 : f32
      %77 = vector.broadcast %cst_41 : f32 to vector<32x32xf32>
      %c0_42 = arith.constant 0 : index
      %c0_43 = arith.constant 0 : index
      %78 = vector.load %arg12[%c0_42, %c0_43] : memref<32x32xf32, #tpu.memory_space<vmem>>, vector<32x32xf32>
      tpu.vector_store %arg12[%c0_42, %c0_43], %77 {strides = array<i32>} : memref<32x32xf32, #tpu.memory_space<vmem>>, vector<32x32xf32>,
    } else {
    }
    %c0 = arith.constant 0 : index
    %c0_1 = arith.constant 0 : index
    %3 = vector.load %arg5[%c0, %c0_1] : memref<32x4xf32, #tpu.memory_space<vmem>>, vector<32x4xf32>
    %4 = tpu.iota {dimensions = array<i32: 1>} : vector<32x4xi32>
    %5 = vector.broadcast %arg1 : i32 to vector<32x4xi32>
    %6 = arith.cmpi eq, %4, %5 : vector<32x4xi32>
    %cst = arith.constant 0.000000e+00 : f32
    %7 = vector.broadcast %cst : f32 to vector<32x4xf32>
    %8 = arith.select %6, %3, %7 : vector<32x4xi1>, vector<32x4xf32>
    %cst_2 = arith.constant dense<0.000000e+00> : vector<32xf32>
    %9 = vector.multi_reduction <add>, %8, %cst_2 [1] : vector<32x4xf32> to vector<32xf32>
    %10 = vector.shape_cast %9 : vector<32xf32> to vector<32x1xf32>
    %c0_3 = arith.constant 0 : index
    %c0_4 = arith.constant 0 : index
    %11 = vector.load %arg11[%c0_3, %c0_4] : memref<32x32xbf16, #tpu.memory_space<vmem>>, vector<32x32xbf16>
    %c0_5 = arith.constant 0 : index
    %c0_6 = arith.constant 0 : index
    %c0_7 = arith.constant 0 : index
    %12 = vector.load %arg6[%c0_5, %c0_6, %c0_7] : memref<1x32x64xbf16, #tpu.memory_space<vmem>>, vector<1x32x64xbf16>
    %13 = vector.shape_cast %12 : vector<1x32x64xbf16> to vector<32x64xbf16>
    %cst_8 = arith.constant dense<0.000000e+00> : vector<32x64xf32>
    %14 = tpu.matmul %11, %13, %cst_8 {dimension_numbers = #tpu.dot_dimension_numbers<[1], [0], [0], [1], [0, 0, 1, 1], [], []>} : vector<32x32xbf16>, vector<32x64xbf16>, vector<32x64xf32> -> vector<32x64xf32>
    %c0_9 = arith.constant 0 : index
    %c0_10 = arith.constant 0 : index
    %c0_11 = arith.constant 0 : index
    %15 = vector.load %arg7[%c0_9, %c0_10, %c0_11] : memref<1x1x64xf32, #tpu.memory_space<vmem>>, vector<1x1x64xf32>
    %16 = vector.shape_cast %15 : vector<1x1x64xf32> to vector<1x64xf32>
    %17 = vector.broadcast %16 : vector<1x64xf32> to vector<32x64xf32>
    %18 = arith.addf %14, %17 : vector<32x64xf32>
    %19 = arith.mulf %18, %18 : vector<32x64xf32>
    %20 = arith.mulf %18, %19 : vector<32x64xf32>
    %cst_12 = arith.constant 4.471500e-02 : f32
    %21 = vector.broadcast %cst_12 : f32 to vector<32x64xf32>
    %22 = arith.mulf %21, %20 : vector<32x64xf32>
    %23 = arith.addf %18, %22 : vector<32x64xf32>
    %cst_13 = arith.constant 0.797884583 : f32
    %24 = vector.broadcast %cst_13 : f32 to vector<32x64xf32>
    %25 = arith.mulf %24, %23 : vector<32x64xf32>
    %26 = math.tanh %25 : vector<32x64xf32>
    %cst_14 = arith.constant 1.000000e+00 : f32
    %27 = vector.broadcast %cst_14 : f32 to vector<32x64xf32>
    %28 = arith.addf %27, %26 : vector<32x64xf32>
    %cst_15 = arith.constant 5.000000e-01 : f32
    %29 = vector.broadcast %cst_15 : f32 to vector<32x64xf32>
    %30 = arith.mulf %29, %28 : vector<32x64xf32>
    %31 = arith.mulf %18, %30 : vector<32x64xf32>
    %32 = vector.broadcast %10 : vector<32x1xf32> to vector<32x64xf32>
    %33 = arith.mulf %31, %32 : vector<32x64xf32>
    %34 = arith.truncf %33 : vector<32x64xf32> to vector<32x64xbf16>
    %c0_16 = arith.constant 0 : index
    %c0_17 = arith.constant 0 : index
    %c0_18 = arith.constant 0 : index
    %35 = vector.load %arg8[%c0_16, %c0_17, %c0_18] : memref<1x64x32xbf16, #tpu.memory_space<vmem>>, vector<1x64x32xbf16>
    %36 = vector.shape_cast %35 : vector<1x64x32xbf16> to vector<64x32xbf16>
    %cst_19 = arith.constant dense<0.000000e+00> : vector<32x32xf32>
    %37 = tpu.matmul %34, %36, %cst_19 {dimension_numbers = #tpu.dot_dimension_numbers<[1], [0], [0], [1], [0, 0, 1, 1], [], []>} : vector<32x64xbf16>, vector<64x32xbf16>, vector<32x32xf32> -> vector<32x32xf32>
    %c0_20 = arith.constant 0 : index
    %c0_21 = arith.constant 0 : index
    %38 = vector.load %arg12[%c0_20, %c0_21] : memref<32x32xf32, #tpu.memory_space<vmem>>, vector<32x32xf32>
    %c0_22 = arith.constant 0 : index
    %c0_23 = arith.constant 0 : index
    %c0_24 = arith.constant 0 : index
    %39 = vector.load %arg9[%c0_22, %c0_23, %c0_24] : memref<1x1x32xf32, #tpu.memory_space<vmem>>, vector<1x1x32xf32>
    %40 = vector.shape_cast %39 : vector<1x1x32xf32> to vector<1x32xf32>
    %41 = vector.broadcast %10 : vector<32x1xf32> to vector<32x32xf32>
    %42 = vector.broadcast %40 : vector<1x32xf32> to vector<32x32xf32>
    %43 = arith.mulf %41, %42 : vector<32x32xf32>
    %44 = arith.addf %37, %43 : vector<32x32xf32>
    %45 = arith.addf %38, %44 : vector<32x32xf32>
    %c0_25 = arith.constant 0 : index
    %c0_26 = arith.constant 0 : index
    %46 = vector.load %arg12[%c0_25, %c0_26] : memref<32x32xf32, #tpu.memory_space<vmem>>, vector<32x32xf32>
    tpu.vector_store %arg12[%c0_25, %c0_26], %45 {strides = array<i32>} : memref<32x32xf32, #tpu.memory_space<vmem>>, vector<32x32xf32>,
    %c3_i32 = arith.constant 3 : i32
    %47 = arith.cmpi eq, %arg1, %c3_i32 : i32
    %48 = arith.extui %47 : i1 to i32
    %c0_i32_27 = arith.constant 0 : i32
    %49 = arith.cmpi ne, %48, %c0_i32_27 : i32
    scf.if %49 {
      %c0_28 = arith.constant 0 : index
      %c0_29 = arith.constant 0 : index
      %50 = vector.load %arg12[%c0_28, %c0_29] : memref<32x32xf32, #tpu.memory_space<vmem>>, vector<32x32xf32>
      %c0_30 = arith.constant 0 : index
      %c0_31 = arith.constant 0 : index
      %51 = vector.load %arg2[%c0_30, %c0_31] : memref<32x32xf32, #tpu.memory_space<vmem>>, vector<32x32xf32>
      %52 = arith.addf %50, %51 : vector<32x32xf32>
      %c0_32 = arith.constant 0 : index
      %c0_33 = arith.constant 0 : index
      %53 = vector.load %arg10[%c0_32, %c0_33] : memref<32x32xf32, #tpu.memory_space<vmem>>, vector<32x32xf32>
      tpu.vector_store %arg10[%c0_32, %c0_33], %52 {strides = array<i32>} : memref<32x32xf32, #tpu.memory_space<vmem>>, vector<32x32xf32>,
    } else {
    }
    return
  }
  func.func @transform_0(%arg0: i32, %arg1: i32) -> (i32, i32) {
    %c0_i32 = arith.constant 0 : i32
    %c0_i32_0 = arith.constant 0 : i32
    return %arg0, %c0_i32 : i32, i32
  }
  func.func @transform_1(%arg0: i32, %arg1: i32) -> (i32, i32) {
    %c0_i32 = arith.constant 0 : i32
    %c0_i32_0 = arith.constant 0 : i32
    %c0_i32_1 = arith.constant 0 : i32
    return %c0_i32, %c0_i32_0 : i32, i32
  }
  func.func @transform_2(%arg0: i32, %arg1: i32) -> (i32, i32) {
    %c0_i32 = arith.constant 0 : i32
    %c0_i32_0 = arith.constant 0 : i32
    %c0_i32_1 = arith.constant 0 : i32
    return %c0_i32, %c0_i32_0 : i32, i32
  }
  func.func @transform_3(%arg0: i32, %arg1: i32) -> (i32, i32) {
    %c0_i32 = arith.constant 0 : i32
    %c0_i32_0 = arith.constant 0 : i32
    return %arg0, %c0_i32 : i32, i32
  }
  func.func @transform_4(%arg0: i32, %arg1: i32) -> (i32, i32, i32) {
    %c0_i32 = arith.constant 0 : i32
    %c0_i32_0 = arith.constant 0 : i32
    %c0_i32_1 = arith.constant 0 : i32
    return %arg1, %c0_i32, %c0_i32_0 : i32, i32, i32
  }
  func.func @transform_5(%arg0: i32, %arg1: i32) -> (i32, i32, i32) {
    %c0_i32 = arith.constant 0 : i32
    %c0_i32_0 = arith.constant 0 : i32
    %c0_i32_1 = arith.constant 0 : i32
    return %arg1, %c0_i32, %c0_i32_0 : i32, i32, i32
  }
  func.func @transform_6(%arg0: i32, %arg1: i32) -> (i32, i32, i32) {
    %c0_i32 = arith.constant 0 : i32
    %c0_i32_0 = arith.constant 0 : i32
    %c0_i32_1 = arith.constant 0 : i32
    return %arg1, %c0_i32, %c0_i32_0 : i32, i32, i32
  }
  func.func @transform_7(%arg0: i32, %arg1: i32) -> (i32, i32, i32) {
    %c0_i32 = arith.constant 0 : i32
    %c0_i32_0 = arith.constant 0 : i32
    %c0_i32_1 = arith.constant 0 : i32
    return %arg1, %c0_i32, %c0_i32_0 : i32, i32, i32
  }
  func.func @transform_8(%arg0: i32, %arg1: i32) -> (i32, i32) {
    %c0_i32 = arith.constant 0 : i32
    %c0_i32_0 = arith.constant 0 : i32
    return %arg0, %c0_i32 : i32, i32
  }
}

module attributes {stable_mosaic.version = 11 : i64} {
  func.func @_moe_ffn_kernel(%arg0: i32, %arg1: i32, %arg2: memref<32x32xf32, #tpu.memory_space<vmem>>, %arg3: memref<1x32xf32, #tpu.memory_space<vmem>>, %arg4: memref<1x32xf32, #tpu.memory_space<vmem>>, %arg5: memref<32x4xf32, #tpu.memory_space<vmem>>, %arg6: memref<1x32x64xbf16, #tpu.memory_space<vmem>>, %arg7: memref<1x1x64xf32, #tpu.memory_space<vmem>>, %arg8: memref<1x64x32xbf16, #tpu.memory_space<vmem>>, %arg9: memref<1x1x32xf32, #tpu.memory_space<vmem>>, %arg10: memref<32x32xf32, #tpu.memory_space<vmem>>, %arg11: memref<32x32xbf16, #tpu.memory_space<vmem>>, %arg12: memref<32x32xf32, #tpu.memory_space<vmem>>) attributes {dimension_semantics = [#tpu.dimension_semantics<parallel>, #tpu.dimension_semantics<arbitrary>], iteration_bounds = array<i64: 1, 4>, scalar_prefetch = 0 : i64, scratch_operands = 2 : i64, tpu.core_type = #tpu.core_type<tc>, window_params = [{transform_indices = @transform_0, window_bounds = array<i64: 32, 32>}, {pipeline_mode = #tpu.pipeline_mode<synchronous>, transform_indices = @transform_1, window_bounds = array<i64: 1, 32>}, {pipeline_mode = #tpu.pipeline_mode<synchronous>, transform_indices = @transform_2, window_bounds = array<i64: 1, 32>}, {transform_indices = @transform_3, window_bounds = array<i64: 32, 4>}, {transform_indices = @transform_4, window_bounds = array<i64: 1, 32, 64>}, {transform_indices = @transform_5, window_bounds = array<i64: 1, 1, 64>}, {transform_indices = @transform_6, window_bounds = array<i64: 1, 64, 32>}, {transform_indices = @transform_7, window_bounds = array<i64: 1, 1, 32>}, {transform_indices = @transform_8, window_bounds = array<i64: 32, 32>}]} {
    %c0_i32 = arith.constant 0 : i32
    %0 = arith.cmpi eq, %arg1, %c0_i32 : i32
    %1 = arith.extui %0 : i1 to i32
    %c0_i32_0 = arith.constant 0 : i32
    %2 = arith.cmpi ne, %1, %c0_i32_0 : i32
    scf.if %2 {
      %c0_28 = arith.constant 0 : index
      %c0_29 = arith.constant 0 : index
      %50 = vector.load %arg2[%c0_28, %c0_29] : memref<32x32xf32, #tpu.memory_space<vmem>>, vector<32x32xf32>
      %cst_30 = arith.constant dense<0.000000e+00> : vector<32xf32>
      %51 = vector.multi_reduction <add>, %50, %cst_30 [1] : vector<32x32xf32> to vector<32xf32>
      %52 = vector.shape_cast %51 : vector<32xf32> to vector<32x1xf32>
      %cst_31 = arith.constant 3.200000e+01 : f32
      %53 = vector.broadcast %cst_31 : f32 to vector<32x1xf32>
      %54 = arith.divf %52, %53 : vector<32x1xf32>
      %55 = vector.broadcast %54 : vector<32x1xf32> to vector<32x32xf32>
      %56 = arith.subf %50, %55 : vector<32x32xf32>
      %57 = arith.mulf %56, %56 : vector<32x32xf32>
      %cst_32 = arith.constant dense<0.000000e+00> : vector<32xf32>
      %58 = vector.multi_reduction <add>, %57, %cst_32 [1] : vector<32x32xf32> to vector<32xf32>
      %59 = vector.shape_cast %58 : vector<32xf32> to vector<32x1xf32>
      %cst_33 = arith.constant 3.200000e+01 : f32
      %60 = vector.broadcast %cst_33 : f32 to vector<32x1xf32>
      %61 = arith.divf %59, %60 : vector<32x1xf32>
      %62 = vector.broadcast %54 : vector<32x1xf32> to vector<32x32xf32>
      %63 = arith.subf %50, %62 : vector<32x32xf32>
      %cst_34 = arith.constant 9.99999974E-6 : f32
      %64 = vector.broadcast %cst_34 : f32 to vector<32x1xf32>
      %65 = arith.addf %61, %64 : vector<32x1xf32>
      %66 = math.rsqrt %65 : vector<32x1xf32>
      %67 = vector.broadcast %66 : vector<32x1xf32> to vector<32x32xf32>
      %68 = arith.mulf %63, %67 : vector<32x32xf32>
      %c0_35 = arith.constant 0 : index
      %c0_36 = arith.constant 0 : index
      %69 = vector.load %arg3[%c0_35, %c0_36] : memref<1x32xf32, #tpu.memory_space<vmem>>, vector<1x32xf32>
      %70 = vector.broadcast %69 : vector<1x32xf32> to vector<32x32xf32>
      %71 = arith.mulf %68, %70 : vector<32x32xf32>
      %c0_37 = arith.constant 0 : index
      %c0_38 = arith.constant 0 : index
      %72 = vector.load %arg4[%c0_37, %c0_38] : memref<1x32xf32, #tpu.memory_space<vmem>>, vector<1x32xf32>
      %73 = vector.broadcast %72 : vector<1x32xf32> to vector<32x32xf32>
      %74 = arith.addf %71, %73 : vector<32x32xf32>
      %75 = arith.truncf %74 : vector<32x32xf32> to vector<32x32xbf16>
      %c0_39 = arith.constant 0 : index
      %c0_40 = arith.constant 0 : index
      %76 = vector.load %arg11[%c0_39, %c0_40] : memref<32x32xbf16, #tpu.memory_space<vmem>>, vector<32x32xbf16>
      tpu.vector_store %arg11[%c0_39, %c0_40], %75 {strides = array<i32>} : memref<32x32xbf16, #tpu.memory_space<vmem>>, vector<32x32xbf16>,
      %cst_41 = arith.constant 0.000000e+00 : f32
      %77 = vector.broadcast %cst_41 : f32 to vector<32x32xf32>
      %c0_42 = arith.constant 0 : index
      %c0_43 = arith.constant 0 : index
      %78 = vector.load %arg12[%c0_42, %c0_43] : memref<32x32xf32, #tpu.memory_space<vmem>>, vector<32x32xf32>
      tpu.vector_store %arg12[%c0_42, %c0_43], %77 {strides = array<i32>} : memref<32x32xf32, #tpu.memory_space<vmem>>, vector<32x32xf32>,
    } else {
    }
    %c0 = arith.constant 0 : index
    %c0_1 = arith.constant 0 : index
    %3 = vector.load %arg5[%c0, %c0_1] : memref<32x4xf32, #tpu.memory_space<vmem>>, vector<32x4xf32>
    %4 = tpu.iota {dimensions = array<i32: 1>} : vector<32x4xi32>
    %5 = vector.broadcast %arg1 : i32 to vector<32x4xi32>
    %6 = arith.cmpi eq, %4, %5 : vector<32x4xi32>
    %cst = arith.constant 0.000000e+00 : f32
    %7 = vector.broadcast %cst : f32 to vector<32x4xf32>
    %8 = arith.select %6, %3, %7 : vector<32x4xi1>, vector<32x4xf32>
    %cst_2 = arith.constant dense<0.000000e+00> : vector<32xf32>
    %9 = vector.multi_reduction <add>, %8, %cst_2 [1] : vector<32x4xf32> to vector<32xf32>
    %10 = vector.shape_cast %9 : vector<32xf32> to vector<32x1xf32>
    %c0_3 = arith.constant 0 : index
    %c0_4 = arith.constant 0 : index
    %11 = vector.load %arg11[%c0_3, %c0_4] : memref<32x32xbf16, #tpu.memory_space<vmem>>, vector<32x32xbf16>
    %c0_5 = arith.constant 0 : index
    %c0_6 = arith.constant 0 : index
    %c0_7 = arith.constant 0 : index
    %12 = vector.load %arg6[%c0_5, %c0_6, %c0_7] : memref<1x32x64xbf16, #tpu.memory_space<vmem>>, vector<1x32x64xbf16>
    %13 = vector.shape_cast %12 : vector<1x32x64xbf16> to vector<32x64xbf16>
    %cst_8 = arith.constant dense<0.000000e+00> : vector<32x64xf32>
    %14 = tpu.matmul %11, %13, %cst_8 {dimension_numbers = #tpu.dot_dimension_numbers<[1], [0], [0], [1], [0, 0, 1, 1], [], []>} : vector<32x32xbf16>, vector<32x64xbf16>, vector<32x64xf32> -> vector<32x64xf32>
    %c0_9 = arith.constant 0 : index
    %c0_10 = arith.constant 0 : index
    %c0_11 = arith.constant 0 : index
    %15 = vector.load %arg7[%c0_9, %c0_10, %c0_11] : memref<1x1x64xf32, #tpu.memory_space<vmem>>, vector<1x1x64xf32>
    %16 = vector.shape_cast %15 : vector<1x1x64xf32> to vector<1x64xf32>
    %17 = vector.broadcast %16 : vector<1x64xf32> to vector<32x64xf32>
    %18 = arith.addf %14, %17 : vector<32x64xf32>
    %19 = arith.mulf %18, %18 : vector<32x64xf32>
    %20 = arith.mulf %18, %19 : vector<32x64xf32>
    %cst_12 = arith.constant 4.471500e-02 : f32
    %21 = vector.broadcast %cst_12 : f32 to vector<32x64xf32>
    %22 = arith.mulf %21, %20 : vector<32x64xf32>
    %23 = arith.addf %18, %22 : vector<32x64xf32>
    %cst_13 = arith.constant 0.797884583 : f32
    %24 = vector.broadcast %cst_13 : f32 to vector<32x64xf32>
    %25 = arith.mulf %24, %23 : vector<32x64xf32>
    %26 = math.tanh %25 : vector<32x64xf32>
    %cst_14 = arith.constant 1.000000e+00 : f32
    %27 = vector.broadcast %cst_14 : f32 to vector<32x64xf32>
    %28 = arith.addf %27, %26 : vector<32x64xf32>
    %cst_15 = arith.constant 5.000000e-01 : f32
    %29 = vector.broadcast %cst_15 : f32 to vector<32x64xf32>
    %30 = arith.mulf %29, %28 : vector<32x64xf32>
    %31 = arith.mulf %18, %30 : vector<32x64xf32>
    %32 = vector.broadcast %10 : vector<32x1xf32> to vector<32x64xf32>
    %33 = arith.mulf %31, %32 : vector<32x64xf32>
    %34 = arith.truncf %33 : vector<32x64xf32> to vector<32x64xbf16>
    %c0_16 = arith.constant 0 : index
    %c0_17 = arith.constant 0 : index
    %c0_18 = arith.constant 0 : index
    %35 = vector.load %arg8[%c0_16, %c0_17, %c0_18] : memref<1x64x32xbf16, #tpu.memory_space<vmem>>, vector<1x64x32xbf16>
    %36 = vector.shape_cast %35 : vector<1x64x32xbf16> to vector<64x32xbf16>
    %cst_19 = arith.constant dense<0.000000e+00> : vector<32x32xf32>
    %37 = tpu.matmul %34, %36, %cst_19 {dimension_numbers = #tpu.dot_dimension_numbers<[1], [0], [0], [1], [0, 0, 1, 1], [], []>} : vector<32x64xbf16>, vector<64x32xbf16>, vector<32x32xf32> -> vector<32x32xf32>
    %c0_20 = arith.constant 0 : index
    %c0_21 = arith.constant 0 : index
    %38 = vector.load %arg12[%c0_20, %c0_21] : memref<32x32xf32, #tpu.memory_space<vmem>>, vector<32x32xf32>
    %c0_22 = arith.constant 0 : index
    %c0_23 = arith.constant 0 : index
    %c0_24 = arith.constant 0 : index
    %39 = vector.load %arg9[%c0_22, %c0_23, %c0_24] : memref<1x1x32xf32, #tpu.memory_space<vmem>>, vector<1x1x32xf32>
    %40 = vector.shape_cast %39 : vector<1x1x32xf32> to vector<1x32xf32>
    %41 = vector.broadcast %10 : vector<32x1xf32> to vector<32x32xf32>
    %42 = vector.broadcast %40 : vector<1x32xf32> to vector<32x32xf32>
    %43 = arith.mulf %41, %42 : vector<32x32xf32>
    %44 = arith.addf %37, %43 : vector<32x32xf32>
    %45 = arith.addf %38, %44 : vector<32x32xf32>
    %c0_25 = arith.constant 0 : index
    %c0_26 = arith.constant 0 : index
    %46 = vector.load %arg12[%c0_25, %c0_26] : memref<32x32xf32, #tpu.memory_space<vmem>>, vector<32x32xf32>
    tpu.vector_store %arg12[%c0_25, %c0_26], %45 {strides = array<i32>} : memref<32x32xf32, #tpu.memory_space<vmem>>, vector<32x32xf32>,
    %c3_i32 = arith.constant 3 : i32
    %47 = arith.cmpi eq, %arg1, %c3_i32 : i32
    %48 = arith.extui %47 : i1 to i32
    %c0_i32_27 = arith.constant 0 : i32
    %49 = arith.cmpi ne, %48, %c0_i32_27 : i32
    scf.if %49 {
      %c0_28 = arith.constant 0 : index
      %c0_29 = arith.constant 0 : index
      %50 = vector.load %arg12[%c0_28, %c0_29] : memref<32x32xf32, #tpu.memory_space<vmem>>, vector<32x32xf32>
      %c0_30 = arith.constant 0 : index
      %c0_31 = arith.constant 0 : index
      %51 = vector.load %arg2[%c0_30, %c0_31] : memref<32x32xf32, #tpu.memory_space<vmem>>, vector<32x32xf32>
      %52 = arith.addf %50, %51 : vector<32x32xf32>
      %c0_32 = arith.constant 0 : index
      %c0_33 = arith.constant 0 : index
      %53 = vector.load %arg10[%c0_32, %c0_33] : memref<32x32xf32, #tpu.memory_space<vmem>>, vector<32x32xf32>
      tpu.vector_store %arg10[%c0_32, %c0_33], %52 {strides = array<i32>} : memref<32x32xf32, #tpu.memory_space<vmem>>, vector<32x32xf32>,
    } else {
    }
    return
  }
  func.func @transform_0(%arg0: i32, %arg1: i32) -> (i32, i32) {
    %c0_i32 = arith.constant 0 : i32
    %c0_i32_0 = arith.constant 0 : i32
    return %arg0, %c0_i32 : i32, i32
  }
  func.func @transform_1(%arg0: i32, %arg1: i32) -> (i32, i32) {
    %c0_i32 = arith.constant 0 : i32
    %c0_i32_0 = arith.constant 0 : i32
    %c0_i32_1 = arith.constant 0 : i32
    return %c0_i32, %c0_i32_0 : i32, i32
  }
  func.func @transform_2(%arg0: i32, %arg1: i32) -> (i32, i32) {
    %c0_i32 = arith.constant 0 : i32
    %c0_i32_0 = arith.constant 0 : i32
    %c0_i32_1 = arith.constant 0 : i32
    return %c0_i32, %c0_i32_0 : i32, i32
  }
  func.func @transform_3(%arg0: i32, %arg1: i32) -> (i32, i32) {
    %c0_i32 = arith.constant 0 : i32
    %c0_i32_0 = arith.constant 0 : i32
    return %arg0, %c0_i32 : i32, i32
  }
  func.func @transform_4(%arg0: i32, %arg1: i32) -> (i32, i32, i32) {
    %c0_i32 = arith.constant 0 : i32
    %c0_i32_0 = arith.constant 0 : i32
    %c0_i32_1 = arith.constant 0 : i32
    return %arg1, %c0_i32, %c0_i32_0 : i32, i32, i32
  }
  func.func @transform_5(%arg0: i32, %arg1: i32) -> (i32, i32, i32) {
    %c0_i32 = arith.constant 0 : i32
    %c0_i32_0 = arith.constant 0 : i32
    %c0_i32_1 = arith.constant 0 : i32
    return %arg1, %c0_i32, %c0_i32_0 : i32, i32, i32
  }
  func.func @transform_6(%arg0: i32, %arg1: i32) -> (i32, i32, i32) {
    %c0_i32 = arith.constant 0 : i32
    %c0_i32_0 = arith.constant 0 : i32
    %c0_i32_1 = arith.constant 0 : i32
    return %arg1, %c0_i32, %c0_i32_0 : i32, i32, i32
  }
  func.func @transform_7(%arg0: i32, %arg1: i32) -> (i32, i32, i32) {
    %c0_i32 = arith.constant 0 : i32
    %c0_i32_0 = arith.constant 0 : i32
    %c0_i32_1 = arith.constant 0 : i32
    return %arg1, %c0_i32, %c0_i32_0 : i32, i32, i32
  }
  func.func @transform_8(%arg0: i32, %arg1: i32) -> (i32, i32) {
    %c0_i32 = arith.constant 0 : i32
    %c0_i32_0 = arith.constant 0 : i32
    return %arg0, %c0_i32 : i32, i32
  }
}

</mosaic_0001>

<llo_original>
// kernel: mul.6
$region0: #{mul.6}
  #allocation0 [shape = 's32[1]{0}', space=sflag, size = 0x4, scoped, tag = 'scoped memory for mul.6']
  %s0 = inlined_call_operand.vmem [shape: f32[32,2,4], index: 0, kind: input, shape index: {}]
  %s1 = inlined_call_operand.vmem [shape: f32[32,2,4], index: 1, kind: input, shape index: {}]
  %s2 = inlined_call_operand.vmem [shape: f32[32,2,4], index: 2, kind: output, shape index: {}]
  %v3 = vld [vmem:[%s0] sm:$0xf]
  %v4 = vld [vmem:[%s1] sm:$0xf]
  %5 = xla_tuple %v3, %v4
  %6 = xla_tuple %5
  %v7 = vmul.f32 %v3, %v4
  %8 = xla_tuple %v7
  %9 = vst [vmem:[%s2] sm:$0xf] %v7
  %s10 = scalar_lea.vmem %s0, 4
  %v11 = vld [vmem:[%s10] sm:$0xf]
  %s12 = scalar_lea.vmem %s1, 4
  %v13 = vld [vmem:[%s12] sm:$0xf]
  %14 = xla_tuple %v11, %v13
  %15 = xla_tuple %14
  %v16 = vmul.f32 %v11, %v13
  %17 = xla_tuple %v16
  %s18 = scalar_lea.vmem %s2, 4
  %19 = vst [vmem:[%s18] sm:$0xf] %v16

// kernel: encoder_forward.10
$region0: #{encoder_forward.10}
  #allocation0 [shape = 'u32[]', space=smem, size = 0x4, offset = 0x4, fixed_abs, tag = 'smem constant byte address 0x4 - core index']
  #allocation1 [shape = 'u32[144,128]{1,0:T(1,128)}', space=vmem, size = 0x12000, scoped, tag = 'internal scratch']
  %s0 = inlined_call_operand.vmem [shape: f32[32,32], index: 0, kind: input, shape index: {}]
  %s1 = inlined_call_operand.vmem [shape: f32[1,32], index: 1, kind: input, shape index: {}]
  %s2 = inlined_call_operand.vmem [shape: f32[1,32], index: 2, kind: input, shape index: {}]
  %s3 = inlined_call_operand.hbm [shape: bf16[32,208], index: 3, kind: input, shape index: {}]
  %s4 = inlined_call_operand.vmem [shape: f32[1,208], index: 4, kind: input, shape index: {}]
  %s5 = inlined_call_operand.vmem [shape: bf16[32,208], index: 5, kind: output, shape index: {}]
  %s6 = sld [smem:[#allocation0]]
  $region34: #{encoder_forward.10} parent=0
    _
  %s8 = ssub.s32 1, %s6
  %s9 = scalar_select 0, %s8, %s6
  $region1: #{encoder_forward.10} parent=0
    #allocation2 [shape = 'u8[16384]{0}', space=vmem, size = 0x4000, scoped, tag = 'input window, operand 3, single buffered']
    #allocation3 [shape = 's32[1]{0}', space=sflag, size = 0x4, scoped, tag = 'scoped memory for encoder_forward.10']
    %10 = vsyncpa [#allocation3], 0
    // Predicated region
    $region2: #{encoder_forward.10} parent=1 // pred_check
      _
    $region3: #{encoder_forward.10} parent=1 // pred_check_branch
      %12 = sbr.rel (0) target = $region5
    $region4: #{encoder_forward.10} parent=1 // pred_region
      _
    $region5: #{encoder_forward.10} parent=1 // pred_fallthru
      _
    // Predicated region
    $region6: #{encoder_forward.10} parent=1 // pred_check
      _
    $region7: #{encoder_forward.10} parent=1 // pred_check_branch
      %14 = sbr.rel (0) target = $region9
    $region8: #{encoder_forward.10} parent=1 // pred_region
      _
    $region9: #{encoder_forward.10} parent=1 // pred_fallthru
      _
    // Predicated region
    $region10: #{encoder_forward.10} parent=1 // pred_check
      _
    $region11: #{encoder_forward.10} parent=1 // pred_check_branch
      %16 = sbr.rel (0) target = $region13
    $region12: #{encoder_forward.10} parent=1 // pred_region
      _
    $region13: #{encoder_forward.10} parent=1 // pred_fallthru
      _
    // Predicated region
    $region14: #{encoder_forward.10} parent=1 // pred_check
      _
    $region15: #{encoder_forward.10} parent=1 // pred_check_branch
      %18 = sbr.rel (0) target = $region17
    $region16: #{encoder_forward.10} parent=1 // pred_region
      %s20 = ssub.s32 512, 512
      %21 = vsyncadd [#allocation3], %s20
      %s22 = sshll.u32 [#allocation2], 4
      %s23 = int_to_ptr.vmem [resolvable:$true] %s22
      %28 = dma.hbm_to_vmem [thread:$0]  %s3, 512, %s23, [#allocation3], 128, 128, 8
    $region17: #{encoder_forward.10} parent=1 // pred_fallthru
      _
    // Predicated region
    $region18: #{encoder_forward.10} parent=1 // pred_check
      _
    $region19: #{encoder_forward.10} parent=1 // pred_check_branch
      %30 = sbr.rel (0) target = $region21
    $region20: #{encoder_forward.10} parent=1 // pred_region
      _
    $region21: #{encoder_forward.10} parent=1 // pred_fallthru
      _
    // Predicated region
    $region22: #{encoder_forward.10} parent=1 // pred_check
      _
    $region23: #{encoder_forward.10} parent=1 // pred_check_branch
      %32 = sbr.rel (0) target = $region25
    $region24: #{encoder_forward.10} parent=1 // pred_region
      %33 = dma.done [#allocation3], 512
    $region25: #{encoder_forward.10} parent=1 // pred_fallthru
      _
    %v35 = vld [vmem:[%s0] sm:$0xff]
    %v36 = vld [vmem:[%s0 + $0x8] sm:$0xff]
    %v37 = vld [vmem:[%s0 + $0x10] sm:$0xff]
    %v38 = vld [vmem:[%s0 + $0x18] sm:$0xff]
    %vm39 = vcmask 261120
    %v40 = vsel %vm39, %v35, 0.0
    %41 = vadd.xlane.f32.xlu0 %v40
    %v42 = vpop.xlane.xlu0 %41
    %v43 = vsel %vm39, %v36, 0.0
    %44 = vadd.xlane.f32.xlu0 %v43
    %v45 = vpop.xlane.xlu0 %44
    %v46 = vsel %vm39, %v37, 0.0
    %47 = vadd.xlane.f32.xlu0 %v46
    %v48 = vpop.xlane.xlu0 %47
    %v49 = vsel %vm39, %v38, 0.0
    %50 = vadd.xlane.f32.xlu0 %v49
    %v51 = vpop.xlane.xlu0 %50
    %v52 = vrcp.pop 32.0
    %v53 = vmul.f32 %v42, %v52
    %v54 = vmul.f32 %v45, %v52
    %v55 = vmul.f32 %v48, %v52
    %v56 = vmul.f32 %v51, %v52
    %v57 = vsub.f32 %v35, %v53
    %v58 = vsub.f32 %v36, %v54
    %v59 = vsub.f32 %v37, %v55
    %v60 = vsub.f32 %v38, %v56
    %v61 = vmul.f32 %v57, %v57
    %v62 = vmul.f32 %v58, %v58
    %v63 = vmul.f32 %v59, %v59
    %v64 = vmul.f32 %v60, %v60
    %v65 = vsel %vm39, %v61, 0.0
    %66 = vadd.xlane.f32.xlu0 %v65
    %v67 = vpop.xlane.xlu0 %66
    %v68 = vsel %vm39, %v62, 0.0
    %69 = vadd.xlane.f32.xlu0 %v68
    %v70 = vpop.xlane.xlu0 %69
    %v71 = vsel %vm39, %v63, 0.0
    %72 = vadd.xlane.f32.xlu0 %v71
    %v73 = vpop.xlane.xlu0 %72
    %v74 = vsel %vm39, %v64, 0.0
    %75 = vadd.xlane.f32.xlu0 %v74
    %v76 = vpop.xlane.xlu0 %75
    %v77 = vmul.f32 %v67, %v52
    %v78 = vmul.f32 %v70, %v52
    %v79 = vmul.f32 %v73, %v52
    %v80 = vmul.f32 %v76, %v52
    %v81 = vadd.f32 %v77, 1e-05
    %v82 = vadd.f32 %v78, 1e-05
    %v83 = vadd.f32 %v79, 1e-05
    %v84 = vadd.f32 %v80, 1e-05
    %v85 = vrsqrt.pop %v81
    %v86 = vrsqrt.pop %v82
    %v87 = vrsqrt.pop %v83
    %v88 = vrsqrt.pop %v84
    %v89 = vmul.f32 %v57, %v85
    %v90 = vmul.f32 %v58, %v86
    %v91 = vmul.f32 %v59, %v87
    %v92 = vmul.f32 %v60, %v88
    %v93 = vld [vmem:[%s1] sm:$0x1]
    %v95 = vlaneseq
    %v96 = vshrl.u32 %v95, 7
    %v97 = vsub.s32 0, %v96
    %v98 = vrot.slane %v93, %v97
    %v100 = vmul.f32 %v89, %v98
    %v101 = vmul.f32 %v90, %v98
    %v102 = vmul.f32 %v91, %v98
    %v103 = vmul.f32 %v92, %v98
    %v104 = vld [vmem:[%s2] sm:$0x1]
    %v106 = vlaneseq
    %v107 = vshrl.u32 %v106, 7
    %v108 = vsub.s32 0, %v107
    %v109 = vrot.slane %v104, %v108
    %v111 = vadd.f32 %v100, %v109
    %v112 = vadd.f32 %v101, %v109
    %v113 = vadd.f32 %v102, %v109
    %v114 = vadd.f32 %v103, %v109
    %v115 = vpack.c.bf16 %v112, %v111
    %v116 = vpack.c.bf16 %v114, %v113
    %v117 = vld [vmem:[#allocation2] sm:$0xff]
    %v118 = vld [vmem:[#allocation2 + $0x8] sm:$0xff]
    %v119 = vld [vmem:[#allocation2 + $0x10] sm:$0xff]
    %v120 = vld [vmem:[#allocation2 + $0x18] sm:$0xff]
    %v121 = vld [vmem:[%s4] sm:$0x3]
    %v123 = vlaneseq
    %v124 = vshrl.u32 %v123, 7
    %v125 = vsub.s32 0, %v124
    %v126 = vrot.slane %v121, %v125
    %v127 = vlaneseq
    %v128 = vshrl.u32 %v127, 7
    %v129 = vsub.s32 1, %v128
    %v130 = vrot.slane %v121, %v129
    %v137 = vunpack.c.l.b16 %v117
    %v138 = vunpack.c.h.b16 %v117
    %v139 = vunpack.c.l.b16 %v118
    %v140 = vunpack.c.h.b16 %v118
    %v141 = vunpack.c.l.b16 %v119
    %v142 = vunpack.c.h.b16 %v119
    %v143 = vunpack.c.l.b16 %v120
    %v144 = vunpack.c.h.b16 %v120
    %v145 = vpack.c.b16 %v139, %v137
    %v146 = vpack.c.b16 %v140, %v138
    %v147 = vpack.c.b16 %v143, %v141
    %v148 = vpack.c.b16 %v144, %v142
    %v154 = vsel %vm39, %v115, 0
    %v157 = vsel %vm39, %v116, 0
    %159 = vmatprep.subr.bf16.mxu0 0
    %160 = vmatpush1.bf16.msra.mxu0 0
    %161 = vmatprep.subr.bf16.mxu0 0
    %162 = vmatpush1.bf16.msra.mxu0 0
    %163 = vmatprep.subr.bf16.mxu0 0
    %164 = vmatpush1.bf16.msra.mxu0 0
    %165 = vmatprep.subr.bf16.mxu0 0
    %166 = vmatpush1.bf16.msra.mxu0 0
    %167 = vmatprep.subr.bf16.mxu0 0
    %168 = vmatpush1.bf16.msra.mxu0 0
    %169 = vmatprep.subr.bf16.mxu0 0
    %170 = vmatpush1.bf16.msra.mxu0 0
    %171 = vmatprep.subr.bf16.mxu0 %v148
    %172 = vmatpush1.bf16.msra.mxu0 %v147
    %173 = vmatprep.subr.bf16.mxu0 %v146
    %174 = vmatpush1.bf16.msra.mxu0 %v145
    %175 = vmatprep.subr.bf16.mxu0 0
    %176 = vmatpush2.bf16.msra.mxu0 0
    %177 = vmatprep.subr.bf16.mxu0 0
    %178 = vmatpush2.bf16.msra.mxu0 0
    %179 = vmatprep.subr.bf16.mxu0 0
    %180 = vmatpush2.bf16.msra.mxu0 0
    %181 = vmatprep.subr.bf16.mxu0 0
    %182 = vmatpush2.bf16.msra.mxu0 0
    %183 = vmatprep.subr.bf16.mxu0 0
    %184 = vmatpush2.bf16.msra.mxu0 0
    %185 = vmatprep.subr.bf16.mxu0 0
    %186 = vmatpush2.bf16.msra.mxu0 0
    %187 = vmatprep.subr.bf16.mxu0 0
    %188 = vmatpush2.bf16.msra.mxu0 0
    %189 = vmatprep.subr.bf16.mxu0 0
    %190 = vmatpush2.bf16.msra.mxu0 0
    %191 = vmatprep.mubr.bf16.mxu0 0
    %192 = vmatmul.mubr.bf16.gmra.mxu0 %v154
    %v193 = vpop.f32.mrf.mxu0
    %v194 = vadd.f32 %v126, %v193
    %v195 = vpop.f32.mrf.mxu0
    %v196 = vadd.f32 %v130, %v195
    %v197 = vpop.f32.mrf.mxu0
    %v198 = vadd.f32 %v126, %v197
    %v199 = vpop.f32.mrf.mxu0
    %v200 = vadd.f32 %v130, %v199
    %201 = vmatprep.mubr.bf16.mxu0 0
    %202 = vmatmul.mubr.bf16.gmra.mxu0 %v157
    %v203 = vpop.f32.mrf.mxu0
    %v204 = vadd.f32 %v126, %v203
    %v205 = vpop.f32.mrf.mxu0
    %v206 = vadd.f32 %v130, %v205
    %v207 = vpop.f32.mrf.mxu0
    %v208 = vadd.f32 %v126, %v207
    %v209 = vpop.f32.mrf.mxu0
    %v210 = vadd.f32 %v130, %v209
    %211 = vdwg.mxu0
    %v212 = vpack.c.bf16 %v198, %v194
    %v213 = vpack.c.bf16 %v200, %v196
    %v214 = vpack.c.bf16 %v208, %v204
    %v215 = vpack.c.bf16 %v210, %v206
    %v220 = vunpack.c.l.b16 %v212
    %v221 = vunpack.c.l.b16 %v213
    %v222 = vunpack.c.h.b16 %v212
    %v223 = vunpack.c.h.b16 %v213
    %v224 = vunpack.c.l.b16 %v214
    %v225 = vunpack.c.l.b16 %v215
    %v226 = vunpack.c.h.b16 %v214
    %v227 = vunpack.c.h.b16 %v215
    %v228 = vpack.c.b16 %v221, %v220
    %v229 = vpack.c.b16 %v223, %v222
    %v230 = vpack.c.b16 %v225, %v224
    %v231 = vpack.c.b16 %v227, %v226
    %vm236 = vcmask 1043456
    %vm237 = vcmask 654340
    %vm238 = vmor %vm237, %vm236
    %239 = vst.msk [vmem:[%s5] sm:$0xff] %vm238, %v228
    %240 = vst.msk [vmem:[%s5 + $0x8] sm:$0xff] %vm238, %v229
    %241 = vst.msk [vmem:[%s5 + $0x10] sm:$0xff] %vm238, %v230
    %242 = vst.msk [vmem:[%s5 + $0x18] sm:$0xff] %vm238, %v231
    // Predicated region
    $region26: #{encoder_forward.10} parent=1 // pred_check
      _
    $region27: #{encoder_forward.10} parent=1 // pred_check_branch
      %244 = sbr.rel (0) target = $region29
    $region28: #{encoder_forward.10} parent=1 // pred_region
      _
    $region29: #{encoder_forward.10} parent=1 // pred_fallthru
      _
    // Predicated region
    $region30: #{encoder_forward.10} parent=1 // pred_check
      _
    $region31: #{encoder_forward.10} parent=1 // pred_check_branch
      %246 = sbr.rel (0) target = $region33
    $region32: #{encoder_forward.10} parent=1 // pred_region
      _
    $region33: #{encoder_forward.10} parent=1 // pred_fallthru
      _
    %247 = vsyncpa [#allocation3], 1

// kernel: encoder_forward.11
$region0: #{encoder_forward.11}
  #allocation0 [shape = 'u32[]', space=smem, size = 0x4, offset = 0x4, fixed_abs, tag = 'smem constant byte address 0x4 - core index']
  #allocation1 [shape = 'u32[144,128]{1,0:T(1,128)}', space=vmem, size = 0x12000, scoped, tag = 'internal scratch']
  %s0 = inlined_call_operand.vmem [shape: bf16[4,16,16], index: 0, kind: input, shape index: {}]
  %s1 = inlined_call_operand.vmem [shape: bf16[4,16,16], index: 1, kind: input, shape index: {}]
  %s2 = inlined_call_operand.vmem [shape: bf16[4,16,16], index: 2, kind: input, shape index: {}]
  %s3 = inlined_call_operand.vmem [shape: bf16[4,16,16], index: 3, kind: output, shape index: {}]
  %s4 = sld [smem:[#allocation0]]
  $region45: #{encoder_forward.11} parent=0
    _
  %s6 = ssub.s32 1, %s4
  %s7 = scalar_select 0, %s6, %s4
  loop: start=0, step=1, limit=6
  $region2: #{encoder_forward.11} parent=0 // loop_pre_header
    _
  $region3: #{encoder_forward.11} parent=0 // loop_header
    %s9 = sphi 0, %s13
    %p10 = scmp.ge.s32.totalorder %s9, 6
    %s19 = sphi 0, %s21
    %s22 = sphi 0, %s19
    %s23 = sphi 0, %s22
    %s39 = sphi 0, %s23
    %s45 = sphi 0, %s47
    %s48 = sphi 0, %s45
    %s49 = sphi 0, %s48
    %s65 = sphi 0, %s49
    %s71 = sphi 0, %s73
    %s74 = sphi 0, %s71
    %s75 = sphi 0, %s74
    %s91 = sphi 0, %s75
    %s97 = sphi 0, %s99
    %s100 = sphi 0, %s97
    %s101 = sphi 0, %s100
    %s117 = sphi 0, %s101
  $region4: #{encoder_forward.11} parent=0 // loop_header_branch
    %12 = sbr.rel (%p10) target = $region8
  $region5: #{encoder_forward.11} parent=0 // loop_body
    %s14 = ssub.s32 %s9, 1
    %s15 = ssub.s32 %s9, 2
    %s16 = sadd.s32 %s9, 1
    %s17 = ssub.s32 %s9, %s16
    %p18 = scmp.eq.s32.totalorder %s17, 0
    %s20 = sadd.s32 %s19, 1
    %s21 = scalar_select %p18, %s19, %s20
    %p24 = pneg %p18
    %p25 = scmp.eq.s32.totalorder %s9, 3
    %p26 = por %p24, %p25
    %p27 = scmp.ne.s32.totalorder %s19, %s22
    %p28 = scmp.eq.s32.totalorder %s9, 0
    %p29 = por %p27, %p28
    %p30 = scmp.ne.s32.totalorder %s19, %s22
    %p31 = scmp.eq.s32.totalorder %s14, 3
    %p32 = por %p30, %p31
    %p33 = scmp.ne.s32.totalorder %s22, %s23
    %p34 = scmp.eq.s32.totalorder %s14, 0
    %p35 = por %p33, %p34
    %p36 = scmp.ne.s32.totalorder %s22, %s23
    %p37 = scmp.eq.s32.totalorder %s15, 3
    %p38 = por %p36, %p37
    %p40 = scmp.ne.s32.totalorder %s23, %s39
    %p41 = scmp.eq.s32.totalorder %s15, 0
    %p42 = por %p40, %p41
    %s43 = ssub.s32 %s9, %s16
    %p44 = scmp.eq.s32.totalorder %s43, 0
    %s46 = sadd.s32 %s45, 1
    %s47 = scalar_select %p44, %s45, %s46
    %p50 = pneg %p44
    %p51 = scmp.eq.s32.totalorder %s9, 3
    %p52 = por %p50, %p51
    %p53 = scmp.ne.s32.totalorder %s45, %s48
    %p54 = scmp.eq.s32.totalorder %s9, 0
    %p55 = por %p53, %p54
    %p56 = scmp.ne.s32.totalorder %s45, %s48
    %p57 = scmp.eq.s32.totalorder %s14, 3
    %p58 = por %p56, %p57
    %p59 = scmp.ne.s32.totalorder %s48, %s49
    %p60 = scmp.eq.s32.totalorder %s14, 0
    %p61 = por %p59, %p60
    %p62 = scmp.ne.s32.totalorder %s48, %s49
    %p63 = scmp.eq.s32.totalorder %s15, 3
    %p64 = por %p62, %p63
    %p66 = scmp.ne.s32.totalorder %s49, %s65
    %p67 = scmp.eq.s32.totalorder %s15, 0
    %p68 = por %p66, %p67
    %s69 = ssub.s32 %s9, %s16
    %p70 = scmp.eq.s32.totalorder %s69, 0
    %s72 = sadd.s32 %s71, 1
    %s73 = scalar_select %p70, %s71, %s72
    %p76 = pneg %p70
    %p77 = scmp.eq.s32.totalorder %s9, 3
    %p78 = por %p76, %p77
    %p79 = scmp.ne.s32.totalorder %s71, %s74
    %p80 = scmp.eq.s32.totalorder %s9, 0
    %p81 = por %p79, %p80
    %p82 = scmp.ne.s32.totalorder %s71, %s74
    %p83 = scmp.eq.s32.totalorder %s14, 3
    %p84 = por %p82, %p83
    %p85 = scmp.ne.s32.totalorder %s74, %s75
    %p86 = scmp.eq.s32.totalorder %s14, 0
    %p87 = por %p85, %p86
    %p88 = scmp.ne.s32.totalorder %s74, %s75
    %p89 = scmp.eq.s32.totalorder %s15, 3
    %p90 = por %p88, %p89
    %p92 = scmp.ne.s32.totalorder %s75, %s91
    %p93 = scmp.eq.s32.totalorder %s15, 0
    %p94 = por %p92, %p93
    %s95 = ssub.s32 %s9, %s16
    %p96 = scmp.eq.s32.totalorder %s95, 0
    %s98 = sadd.s32 %s97, 1
    %s99 = scalar_select %p96, %s97, %s98
    %p102 = pneg %p96
    %p103 = scmp.eq.s32.totalorder %s9, 3
    %p104 = por %p102, %p103
    %p105 = scmp.ne.s32.totalorder %s97, %s100
    %p106 = scmp.eq.s32.totalorder %s9, 0
    %p107 = por %p105, %p106
    %p108 = scmp.ne.s32.totalorder %s97, %s100
    %p109 = scmp.eq.s32.totalorder %s14, 3
    %p110 = por %p108, %p109
    %p111 = scmp.ne.s32.totalorder %s100, %s101
    %p112 = scmp.eq.s32.totalorder %s14, 0
    %p113 = por %p111, %p112
    %p114 = scmp.ne.s32.totalorder %s100, %s101
    %p115 = scmp.eq.s32.totalorder %s15, 3
    %p116 = por %p114, %p115
    %p118 = scmp.ne.s32.totalorder %s101, %s117
    %p119 = scmp.eq.s32.totalorder %s15, 0
    %p120 = por %p118, %p119
    %p121 = scmp.le.s32.totalorder 1, %s9
    %p122 = scmp.lt.s32.totalorder %s9, 5
    %p123 = pnand %p121, %p122
    %p124 = pneg %p123
    // Predicated region
    $region9: #{encoder_forward.11} parent=5 // pred_check
      _
    $region10: #{encoder_forward.11} parent=5 // pred_check_branch
      %126 = sbr.rel (%p123) target = $region12
    $region11: #{encoder_forward.11} parent=5 // pred_region
      %s127 = ssub.s32 %s9, 1
    $region12: #{encoder_forward.11} parent=5 // pred_fallthru
      _
    %p128 = scmp.lt.s32.totalorder %s9, 4
    // Predicated region
    $region13: #{encoder_forward.11} parent=5 // pred_check
      %p129 = pneg %p128
    $region14: #{encoder_forward.11} parent=5 // pred_check_branch
      %131 = sbr.rel (%p129) target = $region16
    $region15: #{encoder_forward.11} parent=5 // pred_region
      // Predicated region
      $region17: #{encoder_forward.11} parent=15 // pred_check
        %p132 = pneg %p29
      $region18: #{encoder_forward.11} parent=15 // pred_check_branch
        %134 = sbr.rel (%p132) target = $region20
      $region19: #{encoder_forward.11} parent=15 // pred_region
        %p135 = scmp.lt.s32.totalorder %s9, 3
        %s136 = scalar_select %p135, %s9, 3
        %s137 = smul.addr %s136, 2
        %s138 = smul.addr %s137, 4
        %s139 = scalar_lea.vmem %s0, %s138
      $region20: #{encoder_forward.11} parent=15 // pred_fallthru
        _
      // Predicated region
      $region21: #{encoder_forward.11} parent=15 // pred_check
        %p140 = pneg %p55
      $region22: #{encoder_forward.11} parent=15 // pred_check_branch
        %142 = sbr.rel (%p140) target = $region24
      $region23: #{encoder_forward.11} parent=15 // pred_region
        %p143 = scmp.lt.s32.totalorder %s9, 3
        %s144 = scalar_select %p143, %s9, 3
        %s145 = smul.addr %s144, 2
        %s146 = smul.addr %s145, 4
        %s147 = scalar_lea.vmem %s1, %s146
      $region24: #{encoder_forward.11} parent=15 // pred_fallthru
        _
      // Predicated region
      $region25: #{encoder_forward.11} parent=15 // pred_check
        %p148 = pneg %p81
      $region26: #{encoder_forward.11} parent=15 // pred_check_branch
        %150 = sbr.rel (%p148) target = $region28
      $region27: #{encoder_forward.11} parent=15 // pred_region
        %p151 = scmp.lt.s32.totalorder %s9, 3
        %s152 = scalar_select %p151, %s9, 3
        %s153 = smul.addr %s152, 2
        %s154 = smul.addr %s153, 4
        %s155 = scalar_lea.vmem %s2, %s154
      $region28: #{encoder_forward.11} parent=15 // pred_fallthru
        _
    $region16: #{encoder_forward.11} parent=5 // pred_fallthru
      _
    %p156 = scmp.le.s32.totalorder 1, %s9
    %p157 = scmp.lt.s32.totalorder %s9, 5
    %p158 = pnand %p156, %p157
    %p159 = pneg %p158
    // Predicated region
    $region29: #{encoder_forward.11} parent=5 // pred_check
      _
    $region30: #{encoder_forward.11} parent=5 // pred_check_branch
      %161 = sbr.rel (%p158) target = $region32
    $region31: #{encoder_forward.11} parent=5 // pred_region
      %s162 = ssub.s32 %s9, 1
      %p163 = scmp.lt.s32.totalorder %s14, 3
      %s164 = scalar_select %p163, %s14, 3
      %s165 = smul.addr %s164, 2
      %s166 = smul.addr %s165, 4
      %s167 = scalar_lea.vmem %s0, %s166
      %p168 = pneg %p35
      %p169 = pneg %p32
      %p170 = scmp.lt.s32.totalorder %s14, 3
      %s171 = scalar_select %p170, %s14, 3
      %s172 = smul.addr %s171, 2
      %s173 = smul.addr %s172, 4
      %s174 = scalar_lea.vmem %s1, %s173
      %p175 = pneg %p61
      %p176 = pneg %p58
      %p177 = scmp.lt.s32.totalorder %s14, 3
      %s178 = scalar_select %p177, %s14, 3
      %s179 = smul.addr %s178, 2
      %s180 = smul.addr %s179, 4
      %s181 = scalar_lea.vmem %s2, %s180
      %p182 = pneg %p87
      %p183 = pneg %p84
      %p184 = pneg %p113
      %p185 = pneg %p110
      %p186 = scmp.lt.s32.totalorder %s14, 3
      %s187 = scalar_select %p186, %s14, 3
      %s188 = smul.addr %s187, 2
      %s189 = smul.addr %s188, 4
      %s190 = scalar_lea.vmem %s3, %s189
      %p191 = scmp.lt.s32.totalorder %s14, 3
      %s192 = scalar_select %p191, %s14, 3
      %s193 = smul.addr %s192, 2
      %s194 = smul.addr %s193, 4
      %s195 = scalar_lea.vmem %s0, %s194
      %p196 = scmp.lt.s32.totalorder %s14, 3
      %s197 = scalar_select %p196, %s14, 3
      %s198 = smul.addr %s197, 2
      %s199 = smul.addr %s198, 4
      %s200 = scalar_lea.vmem %s1, %s199
      %p201 = scmp.lt.s32.totalorder %s14, 3
      %s202 = scalar_select %p201, %s14, 3
      %s203 = smul.addr %s202, 2
      %s204 = smul.addr %s203, 4
      %s205 = scalar_lea.vmem %s2, %s204
      %p206 = scmp.lt.s32.totalorder %s14, 3
      %s207 = scalar_select %p206, %s14, 3
      %s208 = smul.addr %s207, 2
      %s209 = smul.addr %s208, 4
      %s210 = scalar_lea.vmem %s3, %s209
      %v212 = vld [vmem:[%s195] sm:$0xf]
      %v213 = vld [vmem:[%s195 + $0x4] sm:$0xf]
      %v214 = vld [vmem:[%s200] sm:$0xf]
      %v215 = vld [vmem:[%s200 + $0x4] sm:$0xf]
      %v216 = vld [vmem:[%s205] sm:$0xf]
      %v217 = vld [vmem:[%s205 + $0x4] sm:$0xf]
      %v220 = vunpack.c.l.b16 %v212
      %v221 = vunpack.c.l.b16 %v213
      %v222 = vpack.c.b16 %v221, %v220
      %v225 = vunpack.c.l.b16 %v214
      %v226 = vunpack.c.l.b16 %v215
      %v227 = vpack.c.b16 %v226, %v225
      %vm228 = vcmask 130048
      %v230 = vsel %vm228, %v222, 0
      %v233 = vsel %vm228, %v227, 0
      %235 = vmatprep.subr.bf16.mxu0 0
      %236 = vmatpush1.bf16.xpose.msra.mxu0 0
      %237 = vmatprep.subr.bf16.mxu0 0
      %238 = vmatpush1.bf16.xpose.msra.mxu0 0
      %239 = vmatprep.subr.bf16.mxu0 0
      %240 = vmatpush1.bf16.xpose.msra.mxu0 0
      %241 = vmatprep.subr.bf16.mxu0 0
      %242 = vmatpush1.bf16.xpose.msra.mxu0 0
      %243 = vmatprep.subr.bf16.mxu0 0
      %244 = vmatpush1.bf16.xpose.msra.mxu0 0
      %245 = vmatprep.subr.bf16.mxu0 0
      %246 = vmatpush1.bf16.xpose.msra.mxu0 0
      %247 = vmatprep.subr.bf16.mxu0 0
      %248 = vmatpush1.bf16.xpose.msra.mxu0 0
      %249 = vmatprep.subr.bf16.mxu0 0
      %250 = vmatpush1.bf16.xpose.msra.mxu0 %v233
      %251 = vmatprep.subr.bf16.mxu0 0
      %252 = vmatpush2.bf16.xpose.msra.mxu0 0
      %253 = vmatprep.subr.bf16.mxu0 0
      %254 = vmatpush2.bf16.xpose.msra.mxu0 0
      %255 = vmatprep.subr.bf16.mxu0 0
      %256 = vmatpush2.bf16.xpose.msra.mxu0 0
      %257 = vmatprep.subr.bf16.mxu0 0
      %258 = vmatpush2.bf16.xpose.msra.mxu0 0
      %259 = vmatprep.subr.bf16.mxu0 0
      %260 = vmatpush2.bf16.xpose.msra.mxu0 0
      %261 = vmatprep.subr.bf16.mxu0 0
      %262 = vmatpush2.bf16.xpose.msra.mxu0 0
      %263 = vmatprep.subr.bf16.mxu0 0
      %264 = vmatpush2.bf16.xpose.msra.mxu0 0
      %265 = vmatprep.subr.bf16.mxu0 0
      %266 = vmatpush2.bf16.xpose.msra.mxu0 0
      %267 = vmatprep.mubr.bf16.mxu0 0
      %268 = vmatmul.mubr.bf16.gmra.mxu0 %v230
      %v269 = vpop.f32.mrf.mxu0
      %v270 = vadd.f32 0.0, %v269
      %v271 = vpop.f32.mrf.mxu0
      %v272 = vpop.f32.mrf.mxu0
      %v273 = vadd.f32 0.0, %v272
      %v274 = vpop.f32.mrf.mxu0
      %275 = vdwg.mxu0
      %v276 = vmul.f32 %v270, 0.25
      %v277 = vmul.f32 %v273, 0.25
      %v278 = vsel %vm228, %v276, -inf
      %279 = vmax.xlane.f32.xlu0 %v278
      %v280 = vpop.xlane.xlu0 %279
      %v281 = vsel %vm228, %v277, -inf
      %282 = vmax.xlane.f32.xlu0 %v281
      %v283 = vpop.xlane.xlu0 %282
      %v284 = vsub.f32 %v276, %v280
      %v285 = vsub.f32 %v277, %v283
      %v286 = vmul.f32 %v284, 1.442695
      %v287 = vpow.pop %v286
      %v288 = vmul.f32 %v285, 1.442695
      %v289 = vpow.pop %v288
      %v290 = vsel %vm228, %v287, 0.0
      %291 = vadd.xlane.f32.xlu0 %v290
      %v292 = vpop.xlane.xlu0 %291
      %v293 = vsel %vm228, %v289, 0.0
      %294 = vadd.xlane.f32.xlu0 %v293
      %v295 = vpop.xlane.xlu0 %294
      %v296 = vrcp.pop %v292
      %v297 = vrcp.pop %v295
      %v298 = vmul.f32 %v287, %v296
      %v299 = vmul.f32 %v289, %v297
      %v300 = vpack.c.bf16 %v299, %v298
      %v303 = vunpack.c.l.b16 %v216
      %v304 = vunpack.c.l.b16 %v217
      %v305 = vpack.c.b16 %v304, %v303
      %v308 = vsel %vm228, %v300, 0
      %310 = vmatprep.subr.bf16.mxu0 0
      %311 = vmatpush1.bf16.msra.mxu0 0
      %312 = vmatprep.subr.bf16.mxu0 0
      %313 = vmatpush1.bf16.msra.mxu0 0
      %314 = vmatprep.subr.bf16.mxu0 0
      %315 = vmatpush1.bf16.msra.mxu0 0
      %316 = vmatprep.subr.bf16.mxu0 0
      %317 = vmatpush1.bf16.msra.mxu0 0
      %318 = vmatprep.subr.bf16.mxu0 0
      %319 = vmatpush1.bf16.msra.mxu0 0
      %320 = vmatprep.subr.bf16.mxu0 0
      %321 = vmatpush1.bf16.msra.mxu0 0
      %322 = vmatprep.subr.bf16.mxu0 0
      %323 = vmatpush1.bf16.msra.mxu0 0
      %324 = vmatprep.subr.bf16.mxu0 0
      %325 = vmatpush1.bf16.msra.mxu0 %v305
      %326 = vmatprep.subr.bf16.mxu0 0
      %327 = vmatpush2.bf16.msra.mxu0 0
      %328 = vmatprep.subr.bf16.mxu0 0
      %329 = vmatpush2.bf16.msra.mxu0 0
      %330 = vmatprep.subr.bf16.mxu0 0
      %331 = vmatpush2.bf16.msra.mxu0 0
      %332 = vmatprep.subr.bf16.mxu0 0
      %333 = vmatpush2.bf16.msra.mxu0 0
      %334 = vmatprep.subr.bf16.mxu0 0
      %335 = vmatpush2.bf16.msra.mxu0 0
      %336 = vmatprep.subr.bf16.mxu0 0
      %337 = vmatpush2.bf16.msra.mxu0 0
      %338 = vmatprep.subr.bf16.mxu0 0
      %339 = vmatpush2.bf16.msra.mxu0 0
      %340 = vmatprep.subr.bf16.mxu0 0
      %341 = vmatpush2.bf16.msra.mxu0 0
      %342 = vmatprep.mubr.bf16.mxu0 0
      %343 = vmatmul.mubr.bf16.gmra.mxu0 %v308
      %v344 = vpop.f32.mrf.mxu0
      %v345 = vadd.f32 0.0, %v344
      %v346 = vpop.f32.mrf.mxu0
      %v347 = vpop.f32.mrf.mxu0
      %v348 = vadd.f32 0.0, %v347
      %v349 = vpop.f32.mrf.mxu0
      %350 = vdwg.mxu0
      %v351 = vpack.c.bf16 %v348, %v345
      %v353 = vunpack.c.l.b16 %v351
      %v354 = vunpack.c.h.b16 %v351
      %v355 = vpack.c.b16 %v353, %v353
      %v356 = vpack.c.b16 %v354, %v354
      %vm359 = vcmask 125952
      %360 = vst.msk [vmem:[%s210] sm:$0xf] %vm359, %v355
      %361 = vst.msk [vmem:[%s210 + $0x4] sm:$0xf] %vm359, %v356
      %p362 = scmp.lt.s32.totalorder %s14, 3
      %s363 = scalar_select %p362, %s14, 3
      %s364 = smul.addr %s363, 2
      %s365 = smul.addr %s364, 4
      %s366 = scalar_lea.vmem %s3, %s365
      // Predicated region
      $region33: #{encoder_forward.11} parent=31 // pred_check
        %p367 = pneg %p110
      $region34: #{encoder_forward.11} parent=31 // pred_check_branch
        %369 = sbr.rel (%p367) target = $region36
      $region35: #{encoder_forward.11} parent=31 // pred_region
        _
      $region36: #{encoder_forward.11} parent=31 // pred_fallthru
        _
    $region32: #{encoder_forward.11} parent=5 // pred_fallthru
      _
    %p370 = scmp.le.s32.totalorder 2, %s9
    // Predicated region
    $region37: #{encoder_forward.11} parent=5 // pred_check
      %p371 = pneg %p370
    $region38: #{encoder_forward.11} parent=5 // pred_check_branch
      %373 = sbr.rel (%p371) target = $region40
    $region39: #{encoder_forward.11} parent=5 // pred_region
      %s374 = ssub.s32 %s9, 2
      // Predicated region
      $region41: #{encoder_forward.11} parent=39 // pred_check
        %p375 = pneg %p116
      $region42: #{encoder_forward.11} parent=39 // pred_check_branch
        %377 = sbr.rel (%p375) target = $region44
      $region43: #{encoder_forward.11} parent=39 // pred_region
        %p378 = scmp.lt.s32.totalorder %s15, 3
        %s379 = scalar_select %p378, %s15, 3
        %s380 = smul.addr %s379, 2
        %s381 = smul.addr %s380, 4
        %s382 = scalar_lea.vmem %s3, %s381
      $region44: #{encoder_forward.11} parent=39 // pred_fallthru
        _
    $region40: #{encoder_forward.11} parent=5 // pred_fallthru
      _
  $region6: #{encoder_forward.11} parent=0 // loop_footer
    %s13 = sadd.s32 1, %s9
  $region7: #{encoder_forward.11} parent=0 // loop_footer_branch
    %8 = sbr.rel target = $region3
  $region8: #{encoder_forward.11} parent=0 // loop_exit
    _

// kernel: encoder_forward.13
$region0: #{encoder_forward.13}
  #allocation0 [shape = 'u32[]', space=smem, size = 0x4, offset = 0x4, fixed_abs, tag = 'smem constant byte address 0x4 - core index']
  #allocation1 [shape = 'u32[144,128]{1,0:T(1,128)}', space=vmem, size = 0x12000, scoped, tag = 'internal scratch']
  %s0 = inlined_call_operand.vmem [shape: f32[32,32], index: 0, kind: input, shape index: {}]
  %s1 = inlined_call_operand.vmem [shape: f32[1,32], index: 1, kind: input, shape index: {}]
  %s2 = inlined_call_operand.vmem [shape: f32[1,32], index: 2, kind: input, shape index: {}]
  %s3 = inlined_call_operand.vmem [shape: bf16[32,4], index: 3, kind: input, shape index: {}]
  %s4 = inlined_call_operand.vmem [shape: f32[1,4], index: 4, kind: input, shape index: {}]
  %s5 = inlined_call_operand.vmem [shape: f32[32,4], index: 5, kind: output, shape index: {}]
  %s6 = sld [smem:[#allocation0]]
  $region30: #{encoder_forward.13} parent=0
    _
  %s8 = ssub.s32 1, %s6
  %s9 = scalar_select 0, %s8, %s6
  // Predicated region
  $region2: #{encoder_forward.13} parent=0 // pred_check
    _
  $region3: #{encoder_forward.13} parent=0 // pred_check_branch
    %11 = sbr.rel (0) target = $region5
  $region4: #{encoder_forward.13} parent=0 // pred_region
    _
  $region5: #{encoder_forward.13} parent=0 // pred_fallthru
    _
  // Predicated region
  $region6: #{encoder_forward.13} parent=0 // pred_check
    _
  $region7: #{encoder_forward.13} parent=0 // pred_check_branch
    %13 = sbr.rel (0) target = $region9
  $region8: #{encoder_forward.13} parent=0 // pred_region
    _
  $region9: #{encoder_forward.13} parent=0 // pred_fallthru
    _
  // Predicated region
  $region10: #{encoder_forward.13} parent=0 // pred_check
    _
  $region11: #{encoder_forward.13} parent=0 // pred_check_branch
    %15 = sbr.rel (0) target = $region13
  $region12: #{encoder_forward.13} parent=0 // pred_region
    _
  $region13: #{encoder_forward.13} parent=0 // pred_fallthru
    _
  // Predicated region
  $region14: #{encoder_forward.13} parent=0 // pred_check
    _
  $region15: #{encoder_forward.13} parent=0 // pred_check_branch
    %17 = sbr.rel (0) target = $region17
  $region16: #{encoder_forward.13} parent=0 // pred_region
    _
  $region17: #{encoder_forward.13} parent=0 // pred_fallthru
    _
  // Predicated region
  $region18: #{encoder_forward.13} parent=0 // pred_check
    _
  $region19: #{encoder_forward.13} parent=0 // pred_check_branch
    %19 = sbr.rel (0) target = $region21
  $region20: #{encoder_forward.13} parent=0 // pred_region
    _
  $region21: #{encoder_forward.13} parent=0 // pred_fallthru
    _
  %v21 = vld [vmem:[%s0] sm:$0xff]
  %v22 = vld [vmem:[%s0 + $0x8] sm:$0xff]
  %v23 = vld [vmem:[%s0 + $0x10] sm:$0xff]
  %v24 = vld [vmem:[%s0 + $0x18] sm:$0xff]
  %vm25 = vcmask 261120
  %v26 = vsel %vm25, %v21, 0.0
  %27 = vadd.xlane.f32.xlu0 %v26
  %v28 = vpop.xlane.xlu0 %27
  %v29 = vsel %vm25, %v22, 0.0
  %30 = vadd.xlane.f32.xlu0 %v29
  %v31 = vpop.xlane.xlu0 %30
  %v32 = vsel %vm25, %v23, 0.0
  %33 = vadd.xlane.f32.xlu0 %v32
  %v34 = vpop.xlane.xlu0 %33
  %v35 = vsel %vm25, %v24, 0.0
  %36 = vadd.xlane.f32.xlu0 %v35
  %v37 = vpop.xlane.xlu0 %36
  %v38 = vrcp.pop 32.0
  %v39 = vmul.f32 %v28, %v38
  %v40 = vmul.f32 %v31, %v38
  %v41 = vmul.f32 %v34, %v38
  %v42 = vmul.f32 %v37, %v38
  %v43 = vsub.f32 %v21, %v39
  %v44 = vsub.f32 %v22, %v40
  %v45 = vsub.f32 %v23, %v41
  %v46 = vsub.f32 %v24, %v42
  %v47 = vmul.f32 %v43, %v43
  %v48 = vmul.f32 %v44, %v44
  %v49 = vmul.f32 %v45, %v45
  %v50 = vmul.f32 %v46, %v46
  %v51 = vsel %vm25, %v47, 0.0
  %52 = vadd.xlane.f32.xlu0 %v51
  %v53 = vpop.xlane.xlu0 %52
  %v54 = vsel %vm25, %v48, 0.0
  %55 = vadd.xlane.f32.xlu0 %v54
  %v56 = vpop.xlane.xlu0 %55
  %v57 = vsel %vm25, %v49, 0.0
  %58 = vadd.xlane.f32.xlu0 %v57
  %v59 = vpop.xlane.xlu0 %58
  %v60 = vsel %vm25, %v50, 0.0
  %61 = vadd.xlane.f32.xlu0 %v60
  %v62 = vpop.xlane.xlu0 %61
  %v63 = vmul.f32 %v53, %v38
  %v64 = vmul.f32 %v56, %v38
  %v65 = vmul.f32 %v59, %v38
  %v66 = vmul.f32 %v62, %v38
  %v67 = vadd.f32 %v63, 1e-05
  %v68 = vadd.f32 %v64, 1e-05
  %v69 = vadd.f32 %v65, 1e-05
  %v70 = vadd.f32 %v66, 1e-05
  %v71 = vrsqrt.pop %v67
  %v72 = vrsqrt.pop %v68
  %v73 = vrsqrt.pop %v69
  %v74 = vrsqrt.pop %v70
  %v75 = vmul.f32 %v43, %v71
  %v76 = vmul.f32 %v44, %v72
  %v77 = vmul.f32 %v45, %v73
  %v78 = vmul.f32 %v46, %v74
  %v79 = vld [vmem:[%s1] sm:$0x1]
  %v81 = vlaneseq
  %v82 = vshrl.u32 %v81, 7
  %v83 = vsub.s32 0, %v82
  %v84 = vrot.slane %v79, %v83
  %v86 = vmul.f32 %v75, %v84
  %v87 = vmul.f32 %v76, %v84
  %v88 = vmul.f32 %v77, %v84
  %v89 = vmul.f32 %v78, %v84
  %v90 = vld [vmem:[%s2] sm:$0x1]
  %v92 = vlaneseq
  %v93 = vshrl.u32 %v92, 7
  %v94 = vsub.s32 0, %v93
  %v95 = vrot.slane %v90, %v94
  %v97 = vadd.f32 %v86, %v95
  %v98 = vadd.f32 %v87, %v95
  %v99 = vadd.f32 %v88, %v95
  %v100 = vadd.f32 %v89, %v95
  %v101 = vpack.c.bf16 %v98, %v97
  %v102 = vpack.c.bf16 %v100, %v99
  %v103 = vld [vmem:[%s3] sm:$0xf]
  %v104 = vld [vmem:[%s3 + $0x4] sm:$0xf]
  %v105 = vld [vmem:[%s3 + $0x8] sm:$0xf]
  %v106 = vld [vmem:[%s3 + $0xc] sm:$0xf]
  %v107 = vld [vmem:[%s4] sm:$0x1]
  %v109 = vlaneseq
  %v110 = vshrl.u32 %v109, 7
  %v111 = vsub.s32 0, %v110
  %v112 = vrot.slane %v107, %v111
  %v118 = vunpack.c.l.b16 %v103
  %v119 = vunpack.c.l.b16 %v104
  %v120 = vunpack.c.l.b16 %v105
  %v121 = vunpack.c.l.b16 %v106
  %v122 = vpack.c.b16 %v119, %v118
  %v123 = vpack.c.b16 %v121, %v120
  %v127 = vsel %vm25, %v101, 0
  %v130 = vsel %vm25, %v102, 0
  %132 = vmatprep.subr.bf16.mxu0 0
  %133 = vmatpush1.bf16.msra.mxu0 0
  %134 = vmatprep.subr.bf16.mxu0 0
  %135 = vmatpush1.bf16.msra.mxu0 0
  %136 = vmatprep.subr.bf16.mxu0 0
  %137 = vmatpush1.bf16.msra.mxu0 0
  %138 = vmatprep.subr.bf16.mxu0 0
  %139 = vmatpush1.bf16.msra.mxu0 0
  %140 = vmatprep.subr.bf16.mxu0 0
  %141 = vmatpush1.bf16.msra.mxu0 0
  %142 = vmatprep.subr.bf16.mxu0 0
  %143 = vmatpush1.bf16.msra.mxu0 0
  %144 = vmatprep.subr.bf16.mxu0 0
  %145 = vmatpush1.bf16.msra.mxu0 %v123
  %146 = vmatprep.subr.bf16.mxu0 0
  %147 = vmatpush1.bf16.msra.mxu0 %v122
  %148 = vmatprep.subr.bf16.mxu0 0
  %149 = vmatpush2.bf16.msra.mxu0 0
  %150 = vmatprep.subr.bf16.mxu0 0
  %151 = vmatpush2.bf16.msra.mxu0 0
  %152 = vmatprep.subr.bf16.mxu0 0
  %153 = vmatpush2.bf16.msra.mxu0 0
  %154 = vmatprep.subr.bf16.mxu0 0
  %155 = vmatpush2.bf16.msra.mxu0 0
  %156 = vmatprep.subr.bf16.mxu0 0
  %157 = vmatpush2.bf16.msra.mxu0 0
  %158 = vmatprep.subr.bf16.mxu0 0
  %159 = vmatpush2.bf16.msra.mxu0 0
  %160 = vmatprep.subr.bf16.mxu0 0
  %161 = vmatpush2.bf16.msra.mxu0 0
  %162 = vmatprep.subr.bf16.mxu0 0
  %163 = vmatpush2.bf16.msra.mxu0 0
  %164 = vmatprep.mubr.bf16.mxu0 0
  %165 = vmatmul.mubr.bf16.gmra.mxu0 %v127
  %v166 = vpop.f32.mrf.mxu0
  %v167 = vadd.f32 %v112, %v166
  %v168 = vpop.f32.mrf.mxu0
  %v169 = vpop.f32.mrf.mxu0
  %v170 = vadd.f32 %v112, %v169
  %v171 = vpop.f32.mrf.mxu0
  %172 = vmatprep.mubr.bf16.mxu0 0
  %173 = vmatmul.mubr.bf16.gmra.mxu0 %v130
  %v174 = vpop.f32.mrf.mxu0
  %v175 = vadd.f32 %v112, %v174
  %v176 = vpop.f32.mrf.mxu0
  %v177 = vpop.f32.mrf.mxu0
  %v178 = vadd.f32 %v112, %v177
  %v179 = vpop.f32.mrf.mxu0
  %180 = vdwg.mxu0
  %vm181 = vcmask 31744
  %182 = vst.msk [vmem:[%s5] sm:$0xff] %vm181, %v167
  %183 = vst.msk [vmem:[%s5 + $0x8] sm:$0xff] %vm181, %v170
  %184 = vst.msk [vmem:[%s5 + $0x10] sm:$0xff] %vm181, %v175
  %185 = vst.msk [vmem:[%s5 + $0x18] sm:$0xff] %vm181, %v178
  // Predicated region
  $region22: #{encoder_forward.13} parent=0 // pred_check
    _
  $region23: #{encoder_forward.13} parent=0 // pred_check_branch
    %187 = sbr.rel (0) target = $region25
  $region24: #{encoder_forward.13} parent=0 // pred_region
    _
  $region25: #{encoder_forward.13} parent=0 // pred_fallthru
    _
  // Predicated region
  $region26: #{encoder_forward.13} parent=0 // pred_check
    _
  $region27: #{encoder_forward.13} parent=0 // pred_check_branch
    %189 = sbr.rel (0) target = $region29
  $region28: #{encoder_forward.13} parent=0 // pred_region
    _
  $region29: #{encoder_forward.13} parent=0 // pred_fallthru
    _

// kernel: encoder_forward.12
$region0: #{encoder_forward.12}
  #allocation0 [shape = 'u32[]', space=smem, size = 0x4, offset = 0x4, fixed_abs, tag = 'smem constant byte address 0x4 - core index']
  #allocation1 [shape = 'u32[144,128]{1,0:T(1,128)}', space=vmem, size = 0x12000, scoped, tag = 'internal scratch']
  %s0 = inlined_call_operand.vmem [shape: bf16[32,128], index: 0, kind: input, shape index: {}]
  %s1 = inlined_call_operand.vmem [shape: bf16[128,32], index: 1, kind: input, shape index: {}]
  %s2 = inlined_call_operand.vmem [shape: bf16[32,8], index: 2, kind: input, shape index: {}]
  %s3 = inlined_call_operand.vmem [shape: bf16[8,32], index: 3, kind: input, shape index: {}]
  %s4 = inlined_call_operand.vmem [shape: f32[32,32], index: 4, kind: input, shape index: {}]
  %s5 = inlined_call_operand.vmem [shape: f32[32,32], index: 5, kind: output, shape index: {}]
  %s6 = sld [smem:[#allocation0]]
  $region30: #{encoder_forward.12} parent=0
    _
  %s8 = ssub.s32 1, %s6
  %s9 = scalar_select 0, %s8, %s6
  // Predicated region
  $region2: #{encoder_forward.12} parent=0 // pred_check
    _
  $region3: #{encoder_forward.12} parent=0 // pred_check_branch
    %11 = sbr.rel (0) target = $region5
  $region4: #{encoder_forward.12} parent=0 // pred_region
    _
  $region5: #{encoder_forward.12} parent=0 // pred_fallthru
    _
  // Predicated region
  $region6: #{encoder_forward.12} parent=0 // pred_check
    _
  $region7: #{encoder_forward.12} parent=0 // pred_check_branch
    %13 = sbr.rel (0) target = $region9
  $region8: #{encoder_forward.12} parent=0 // pred_region
    _
  $region9: #{encoder_forward.12} parent=0 // pred_fallthru
    _
  // Predicated region
  $region10: #{encoder_forward.12} parent=0 // pred_check
    _
  $region11: #{encoder_forward.12} parent=0 // pred_check_branch
    %15 = sbr.rel (0) target = $region13
  $region12: #{encoder_forward.12} parent=0 // pred_region
    _
  $region13: #{encoder_forward.12} parent=0 // pred_fallthru
    _
  // Predicated region
  $region14: #{encoder_forward.12} parent=0 // pred_check
    _
  $region15: #{encoder_forward.12} parent=0 // pred_check_branch
    %17 = sbr.rel (0) target = $region17
  $region16: #{encoder_forward.12} parent=0 // pred_region
    _
  $region17: #{encoder_forward.12} parent=0 // pred_fallthru
    _
  // Predicated region
  $region18: #{encoder_forward.12} parent=0 // pred_check
    _
  $region19: #{encoder_forward.12} parent=0 // pred_check_branch
    %19 = sbr.rel (0) target = $region21
  $region20: #{encoder_forward.12} parent=0 // pred_region
    _
  $region21: #{encoder_forward.12} parent=0 // pred_fallthru
    _
  %v21 = vld [vmem:[%s0] sm:$0xf]
  %v22 = vld [vmem:[%s0 + $0x4] sm:$0xf]
  %v23 = vld [vmem:[%s0 + $0x8] sm:$0xf]
  %v24 = vld [vmem:[%s0 + $0xc] sm:$0xf]
  %v25 = vld [vmem:[%s1] sm:$0xf]
  %v26 = vld [vmem:[%s1 + $0x4] sm:$0xf]
  %v27 = vld [vmem:[%s1 + $0x8] sm:$0xf]
  %v28 = vld [vmem:[%s1 + $0xc] sm:$0xf]
  %v29 = vld [vmem:[%s1 + $0x10] sm:$0xf]
  %v30 = vld [vmem:[%s1 + $0x14] sm:$0xf]
  %v31 = vld [vmem:[%s1 + $0x18] sm:$0xf]
  %v32 = vld [vmem:[%s1 + $0x1c] sm:$0xf]
  %v33 = vld [vmem:[%s1 + $0x20] sm:$0xf]
  %v34 = vld [vmem:[%s1 + $0x24] sm:$0xf]
  %v35 = vld [vmem:[%s1 + $0x28] sm:$0xf]
  %v36 = vld [vmem:[%s1 + $0x2c] sm:$0xf]
  %v37 = vld [vmem:[%s1 + $0x30] sm:$0xf]
  %v38 = vld [vmem:[%s1 + $0x34] sm:$0xf]
  %v39 = vld [vmem:[%s1 + $0x38] sm:$0xf]
  %v40 = vld [vmem:[%s1 + $0x3c] sm:$0xf]
  %v41 = vld [vmem:[%s2] sm:$0xf]
  %v42 = vld [vmem:[%s2 + $0x4] sm:$0xf]
  %v43 = vld [vmem:[%s2 + $0x8] sm:$0xf]
  %v44 = vld [vmem:[%s2 + $0xc] sm:$0xf]
  %v45 = vld [vmem:[%s3] sm:$0xf]
  %v50 = vunpack.c.l.b16 %v41
  %v51 = vunpack.c.l.b16 %v42
  %v52 = vunpack.c.l.b16 %v43
  %v53 = vunpack.c.l.b16 %v44
  %v54 = vpack.c.b16 %v51, %v50
  %v55 = vpack.c.b16 %v53, %v52
  %vm56 = vcmask 64512
  %v58 = vsel %vm56, %v54, 0
  %v61 = vsel %vm56, %v55, 0
  %vm63 = vcmask 1043456
  %v65 = vsel %vm63, %v45, 0
  %67 = vmatprep.subr.bf16.mxu0 0
  %68 = vmatpush1.bf16.msra.mxu0 0
  %69 = vmatprep.subr.bf16.mxu0 0
  %70 = vmatpush1.bf16.msra.mxu0 0
  %71 = vmatprep.subr.bf16.mxu0 0
  %72 = vmatpush1.bf16.msra.mxu0 0
  %73 = vmatprep.subr.bf16.mxu0 0
  %74 = vmatpush1.bf16.msra.mxu0 0
  %75 = vmatprep.subr.bf16.mxu0 0
  %76 = vmatpush1.bf16.msra.mxu0 0
  %77 = vmatprep.subr.bf16.mxu0 0
  %78 = vmatpush1.bf16.msra.mxu0 0
  %79 = vmatprep.subr.bf16.mxu0 0
  %80 = vmatpush1.bf16.msra.mxu0 0
  %81 = vmatprep.subr.bf16.mxu0 0
  %82 = vmatpush1.bf16.msra.mxu0 %v65
  %83 = vmatprep.subr.bf16.mxu0 0
  %84 = vmatpush2.bf16.msra.mxu0 0
  %85 = vmatprep.subr.bf16.mxu0 0
  %86 = vmatpush2.bf16.msra.mxu0 0
  %87 = vmatprep.subr.bf16.mxu0 0
  %88 = vmatpush2.bf16.msra.mxu0 0
  %89 = vmatprep.subr.bf16.mxu0 0
  %90 = vmatpush2.bf16.msra.mxu0 0
  %91 = vmatprep.subr.bf16.mxu0 0
  %92 = vmatpush2.bf16.msra.mxu0 0
  %93 = vmatprep.subr.bf16.mxu0 0
  %94 = vmatpush2.bf16.msra.mxu0 0
  %95 = vmatprep.subr.bf16.mxu0 0
  %96 = vmatpush2.bf16.msra.mxu0 0
  %97 = vmatprep.subr.bf16.mxu0 0
  %98 = vmatpush2.bf16.msra.mxu0 0
  %99 = vmatprep.mubr.bf16.mxu0 0
  %100 = vmatmul.mubr.bf16.gmra.mxu0 %v58
  %v101 = vpop.f32.mrf.mxu0
  %v102 = vadd.f32 0.0, %v101
  %v103 = vpop.f32.mrf.mxu0
  %v104 = vpop.f32.mrf.mxu0
  %v105 = vadd.f32 0.0, %v104
  %v106 = vpop.f32.mrf.mxu0
  %107 = vmatprep.mubr.bf16.mxu0 0
  %108 = vmatmul.mubr.bf16.gmra.mxu0 %v61
  %v109 = vpop.f32.mrf.mxu0
  %v110 = vadd.f32 0.0, %v109
  %v111 = vpop.f32.mrf.mxu0
  %v112 = vpop.f32.mrf.mxu0
  %v113 = vadd.f32 0.0, %v112
  %v114 = vpop.f32.mrf.mxu0
  %115 = vdwg.mxu0
  %v120 = vunpack.c.l.b16 %v21
  %v121 = vunpack.c.l.b16 %v22
  %v122 = vunpack.c.l.b16 %v23
  %v123 = vunpack.c.l.b16 %v24
  %v124 = vpack.c.b16 %v121, %v120
  %v125 = vpack.c.b16 %v123, %v122
  %v144 = vunpack.c.l.b16 %v25
  %v145 = vunpack.c.l.b16 %v26
  %v146 = vunpack.c.l.b16 %v27
  %v147 = vunpack.c.l.b16 %v28
  %v148 = vunpack.c.l.b16 %v29
  %v149 = vunpack.c.l.b16 %v30
  %v150 = vunpack.c.l.b16 %v31
  %v151 = vunpack.c.l.b16 %v32
  %v152 = vunpack.c.l.b16 %v33
  %v153 = vunpack.c.l.b16 %v34
  %v154 = vunpack.c.l.b16 %v35
  %v155 = vunpack.c.l.b16 %v36
  %v156 = vunpack.c.l.b16 %v37
  %v157 = vunpack.c.l.b16 %v38
  %v158 = vunpack.c.l.b16 %v39
  %v159 = vunpack.c.l.b16 %v40
  %v160 = vpack.c.b16 %v145, %v144
  %v161 = vpack.c.b16 %v147, %v146
  %v162 = vpack.c.b16 %v149, %v148
  %v163 = vpack.c.b16 %v151, %v150
  %v164 = vpack.c.b16 %v153, %v152
  %v165 = vpack.c.b16 %v155, %v154
  %v166 = vpack.c.b16 %v157, %v156
  %v167 = vpack.c.b16 %v159, %v158
  %176 = vmatprep.subr.bf16.mxu0 0
  %177 = vmatpush1.bf16.msra.mxu0 %v167
  %178 = vmatprep.subr.bf16.mxu0 0
  %179 = vmatpush1.bf16.msra.mxu0 %v166
  %180 = vmatprep.subr.bf16.mxu0 0
  %181 = vmatpush1.bf16.msra.mxu0 %v165
  %182 = vmatprep.subr.bf16.mxu0 0
  %183 = vmatpush1.bf16.msra.mxu0 %v164
  %184 = vmatprep.subr.bf16.mxu0 0
  %185 = vmatpush1.bf16.msra.mxu0 %v163
  %186 = vmatprep.subr.bf16.mxu0 0
  %187 = vmatpush1.bf16.msra.mxu0 %v162
  %188 = vmatprep.subr.bf16.mxu0 0
  %189 = vmatpush1.bf16.msra.mxu0 %v161
  %190 = vmatprep.subr.bf16.mxu0 0
  %191 = vmatpush1.bf16.msra.mxu0 %v160
  %192 = vmatprep.subr.bf16.mxu0 0
  %193 = vmatpush2.bf16.msra.mxu0 0
  %194 = vmatprep.subr.bf16.mxu0 0
  %195 = vmatpush2.bf16.msra.mxu0 0
  %196 = vmatprep.subr.bf16.mxu0 0
  %197 = vmatpush2.bf16.msra.mxu0 0
  %198 = vmatprep.subr.bf16.mxu0 0
  %199 = vmatpush2.bf16.msra.mxu0 0
  %200 = vmatprep.subr.bf16.mxu0 0
  %201 = vmatpush2.bf16.msra.mxu0 0
  %202 = vmatprep.subr.bf16.mxu0 0
  %203 = vmatpush2.bf16.msra.mxu0 0
  %204 = vmatprep.subr.bf16.mxu0 0
  %205 = vmatpush2.bf16.msra.mxu0 0
  %206 = vmatprep.subr.bf16.mxu0 0
  %207 = vmatpush2.bf16.msra.mxu0 0
  %208 = vmatprep.mubr.bf16.mxu0 0
  %209 = vmatmul.mubr.bf16.gmra.mxu0 %v124
  %v210 = vpop.f32.mrf.mxu0
  %v211 = vadd.f32 %v102, %v210
  %v212 = vpop.f32.mrf.mxu0
  %v213 = vpop.f32.mrf.mxu0
  %v214 = vadd.f32 %v105, %v213
  %v215 = vpop.f32.mrf.mxu0
  %216 = vmatprep.mubr.bf16.mxu0 0
  %217 = vmatmul.mubr.bf16.gmra.mxu0 %v125
  %v218 = vpop.f32.mrf.mxu0
  %v219 = vadd.f32 %v110, %v218
  %v220 = vpop.f32.mrf.mxu0
  %v221 = vpop.f32.mrf.mxu0
  %v222 = vadd.f32 %v113, %v221
  %v223 = vpop.f32.mrf.mxu0
  %224 = vdwg.mxu0
  %v225 = vld [vmem:[%s4] sm:$0xff]
  %v226 = vld [vmem:[%s4 + $0x8] sm:$0xff]
  %v227 = vld [vmem:[%s4 + $0x10] sm:$0xff]
  %v228 = vld [vmem:[%s4 + $0x18] sm:$0xff]
  %v229 = vadd.f32 %v211, %v225
  %v230 = vadd.f32 %v214, %v226
  %v231 = vadd.f32 %v219, %v227
  %v232 = vadd.f32 %v222, %v228
  %vm233 = vcmask 261120
  %234 = vst.msk [vmem:[%s5] sm:$0xff] %vm233, %v229
  %235 = vst.msk [vmem:[%s5 + $0x8] sm:$0xff] %vm233, %v230
  %236 = vst.msk [vmem:[%s5 + $0x10] sm:$0xff] %vm233, %v231
  %237 = vst.msk [vmem:[%s5 + $0x18] sm:$0xff] %vm233, %v232
  // Predicated region
  $region22: #{encoder_forward.12} parent=0 // pred_check
    _
  $region23: #{encoder_forward.12} parent=0 // pred_check_branch
    %239 = sbr.rel (0) target = $region25
  $region24: #{encoder_forward.12} parent=0 // pred_region
    _
  $region25: #{encoder_forward.12} parent=0 // pred_fallthru
    _
  // Predicated region
  $region26: #{encoder_forward.12} parent=0 // pred_check
    _
  $region27: #{encoder_forward.12} parent=0 // pred_check_branch
    %241 = sbr.rel (0) target = $region29
  $region28: #{encoder_forward.12} parent=0 // pred_region
    _
  $region29: #{encoder_forward.12} parent=0 // pred_fallthru
    _

// kernel: encoder_forward.15
$region0: #{encoder_forward.15}
  #allocation0 [shape = 'u32[]', space=smem, size = 0x4, offset = 0x4, fixed_abs, tag = 'smem constant byte address 0x4 - core index']
  #allocation1 [shape = 'u32[144,128]{1,0:T(1,128)}', space=vmem, size = 0x12000, scoped, tag = 'internal scratch']
  %s0 = inlined_call_operand.vmem [shape: f32[32,32], index: 0, kind: input, shape index: {}]
  %s1 = inlined_call_operand.vmem [shape: f32[1,32], index: 1, kind: input, shape index: {}]
  %s2 = inlined_call_operand.vmem [shape: f32[1,32], index: 2, kind: input, shape index: {}]
  %s3 = inlined_call_operand.vmem [shape: bf16[32,208], index: 3, kind: input, shape index: {}]
  %s4 = inlined_call_operand.vmem [shape: f32[1,208], index: 4, kind: input, shape index: {}]
  %s5 = inlined_call_operand.vmem [shape: bf16[32,208], index: 5, kind: output, shape index: {}]
  %s6 = sld [smem:[#allocation0]]
  $region30: #{encoder_forward.15} parent=0
    _
  %s8 = ssub.s32 1, %s6
  %s9 = scalar_select 0, %s8, %s6
  // Predicated region
  $region2: #{encoder_forward.15} parent=0 // pred_check
    _
  $region3: #{encoder_forward.15} parent=0 // pred_check_branch
    %11 = sbr.rel (0) target = $region5
  $region4: #{encoder_forward.15} parent=0 // pred_region
    _
  $region5: #{encoder_forward.15} parent=0 // pred_fallthru
    _
  // Predicated region
  $region6: #{encoder_forward.15} parent=0 // pred_check
    _
  $region7: #{encoder_forward.15} parent=0 // pred_check_branch
    %13 = sbr.rel (0) target = $region9
  $region8: #{encoder_forward.15} parent=0 // pred_region
    _
  $region9: #{encoder_forward.15} parent=0 // pred_fallthru
    _
  // Predicated region
  $region10: #{encoder_forward.15} parent=0 // pred_check
    _
  $region11: #{encoder_forward.15} parent=0 // pred_check_branch
    %15 = sbr.rel (0) target = $region13
  $region12: #{encoder_forward.15} parent=0 // pred_region
    _
  $region13: #{encoder_forward.15} parent=0 // pred_fallthru
    _
  // Predicated region
  $region14: #{encoder_forward.15} parent=0 // pred_check
    _
  $region15: #{encoder_forward.15} parent=0 // pred_check_branch
    %17 = sbr.rel (0) target = $region17
  $region16: #{encoder_forward.15} parent=0 // pred_region
    _
  $region17: #{encoder_forward.15} parent=0 // pred_fallthru
    _
  // Predicated region
  $region18: #{encoder_forward.15} parent=0 // pred_check
    _
  $region19: #{encoder_forward.15} parent=0 // pred_check_branch
    %19 = sbr.rel (0) target = $region21
  $region20: #{encoder_forward.15} parent=0 // pred_region
    _
  $region21: #{encoder_forward.15} parent=0 // pred_fallthru
    _
  %v21 = vld [vmem:[%s0] sm:$0xff]
  %v22 = vld [vmem:[%s0 + $0x8] sm:$0xff]
  %v23 = vld [vmem:[%s0 + $0x10] sm:$0xff]
  %v24 = vld [vmem:[%s0 + $0x18] sm:$0xff]
  %vm25 = vcmask 261120
  %v26 = vsel %vm25, %v21, 0.0
  %27 = vadd.xlane.f32.xlu0 %v26
  %v28 = vpop.xlane.xlu0 %27
  %v29 = vsel %vm25, %v22, 0.0
  %30 = vadd.xlane.f32.xlu0 %v29
  %v31 = vpop.xlane.xlu0 %30
  %v32 = vsel %vm25, %v23, 0.0
  %33 = vadd.xlane.f32.xlu0 %v32
  %v34 = vpop.xlane.xlu0 %33
  %v35 = vsel %vm25, %v24, 0.0
  %36 = vadd.xlane.f32.xlu0 %v35
  %v37 = vpop.xlane.xlu0 %36
  %v38 = vrcp.pop 32.0
  %v39 = vmul.f32 %v28, %v38
  %v40 = vmul.f32 %v31, %v38
  %v41 = vmul.f32 %v34, %v38
  %v42 = vmul.f32 %v37, %v38
  %v43 = vsub.f32 %v21, %v39
  %v44 = vsub.f32 %v22, %v40
  %v45 = vsub.f32 %v23, %v41
  %v46 = vsub.f32 %v24, %v42
  %v47 = vmul.f32 %v43, %v43
  %v48 = vmul.f32 %v44, %v44
  %v49 = vmul.f32 %v45, %v45
  %v50 = vmul.f32 %v46, %v46
  %v51 = vsel %vm25, %v47, 0.0
  %52 = vadd.xlane.f32.xlu0 %v51
  %v53 = vpop.xlane.xlu0 %52
  %v54 = vsel %vm25, %v48, 0.0
  %55 = vadd.xlane.f32.xlu0 %v54
  %v56 = vpop.xlane.xlu0 %55
  %v57 = vsel %vm25, %v49, 0.0
  %58 = vadd.xlane.f32.xlu0 %v57
  %v59 = vpop.xlane.xlu0 %58
  %v60 = vsel %vm25, %v50, 0.0
  %61 = vadd.xlane.f32.xlu0 %v60
  %v62 = vpop.xlane.xlu0 %61
  %v63 = vmul.f32 %v53, %v38
  %v64 = vmul.f32 %v56, %v38
  %v65 = vmul.f32 %v59, %v38
  %v66 = vmul.f32 %v62, %v38
  %v67 = vadd.f32 %v63, 1e-05
  %v68 = vadd.f32 %v64, 1e-05
  %v69 = vadd.f32 %v65, 1e-05
  %v70 = vadd.f32 %v66, 1e-05
  %v71 = vrsqrt.pop %v67
  %v72 = vrsqrt.pop %v68
  %v73 = vrsqrt.pop %v69
  %v74 = vrsqrt.pop %v70
  %v75 = vmul.f32 %v43, %v71
  %v76 = vmul.f32 %v44, %v72
  %v77 = vmul.f32 %v45, %v73
  %v78 = vmul.f32 %v46, %v74
  %v79 = vld [vmem:[%s1] sm:$0x1]
  %v81 = vlaneseq
  %v82 = vshrl.u32 %v81, 7
  %v83 = vsub.s32 0, %v82
  %v84 = vrot.slane %v79, %v83
  %v86 = vmul.f32 %v75, %v84
  %v87 = vmul.f32 %v76, %v84
  %v88 = vmul.f32 %v77, %v84
  %v89 = vmul.f32 %v78, %v84
  %v90 = vld [vmem:[%s2] sm:$0x1]
  %v92 = vlaneseq
  %v93 = vshrl.u32 %v92, 7
  %v94 = vsub.s32 0, %v93
  %v95 = vrot.slane %v90, %v94
  %v97 = vadd.f32 %v86, %v95
  %v98 = vadd.f32 %v87, %v95
  %v99 = vadd.f32 %v88, %v95
  %v100 = vadd.f32 %v89, %v95
  %v101 = vpack.c.bf16 %v98, %v97
  %v102 = vpack.c.bf16 %v100, %v99
  %v103 = vld [vmem:[%s3] sm:$0xff]
  %v104 = vld [vmem:[%s3 + $0x8] sm:$0xff]
  %v105 = vld [vmem:[%s3 + $0x10] sm:$0xff]
  %v106 = vld [vmem:[%s3 + $0x18] sm:$0xff]
  %v107 = vld [vmem:[%s4] sm:$0x3]
  %v109 = vlaneseq
  %v110 = vshrl.u32 %v109, 7
  %v111 = vsub.s32 0, %v110
  %v112 = vrot.slane %v107, %v111
  %v113 = vlaneseq
  %v114 = vshrl.u32 %v113, 7
  %v115 = vsub.s32 1, %v114
  %v116 = vrot.slane %v107, %v115
  %v123 = vunpack.c.l.b16 %v103
  %v124 = vunpack.c.h.b16 %v103
  %v125 = vunpack.c.l.b16 %v104
  %v126 = vunpack.c.h.b16 %v104
  %v127 = vunpack.c.l.b16 %v105
  %v128 = vunpack.c.h.b16 %v105
  %v129 = vunpack.c.l.b16 %v106
  %v130 = vunpack.c.h.b16 %v106
  %v131 = vpack.c.b16 %v125, %v123
  %v132 = vpack.c.b16 %v126, %v124
  %v133 = vpack.c.b16 %v129, %v127
  %v134 = vpack.c.b16 %v130, %v128
  %v140 = vsel %vm25, %v101, 0
  %v143 = vsel %vm25, %v102, 0
  %145 = vmatprep.subr.bf16.mxu0 0
  %146 = vmatpush1.bf16.msra.mxu0 0
  %147 = vmatprep.subr.bf16.mxu0 0
  %148 = vmatpush1.bf16.msra.mxu0 0
  %149 = vmatprep.subr.bf16.mxu0 0
  %150 = vmatpush1.bf16.msra.mxu0 0
  %151 = vmatprep.subr.bf16.mxu0 0
  %152 = vmatpush1.bf16.msra.mxu0 0
  %153 = vmatprep.subr.bf16.mxu0 0
  %154 = vmatpush1.bf16.msra.mxu0 0
  %155 = vmatprep.subr.bf16.mxu0 0
  %156 = vmatpush1.bf16.msra.mxu0 0
  %157 = vmatprep.subr.bf16.mxu0 %v134
  %158 = vmatpush1.bf16.msra.mxu0 %v133
  %159 = vmatprep.subr.bf16.mxu0 %v132
  %160 = vmatpush1.bf16.msra.mxu0 %v131
  %161 = vmatprep.subr.bf16.mxu0 0
  %162 = vmatpush2.bf16.msra.mxu0 0
  %163 = vmatprep.subr.bf16.mxu0 0
  %164 = vmatpush2.bf16.msra.mxu0 0
  %165 = vmatprep.subr.bf16.mxu0 0
  %166 = vmatpush2.bf16.msra.mxu0 0
  %167 = vmatprep.subr.bf16.mxu0 0
  %168 = vmatpush2.bf16.msra.mxu0 0
  %169 = vmatprep.subr.bf16.mxu0 0
  %170 = vmatpush2.bf16.msra.mxu0 0
  %171 = vmatprep.subr.bf16.mxu0 0
  %172 = vmatpush2.bf16.msra.mxu0 0
  %173 = vmatprep.subr.bf16.mxu0 0
  %174 = vmatpush2.bf16.msra.mxu0 0
  %175 = vmatprep.subr.bf16.mxu0 0
  %176 = vmatpush2.bf16.msra.mxu0 0
  %177 = vmatprep.mubr.bf16.mxu0 0
  %178 = vmatmul.mubr.bf16.gmra.mxu0 %v140
  %v179 = vpop.f32.mrf.mxu0
  %v180 = vadd.f32 %v112, %v179
  %v181 = vpop.f32.mrf.mxu0
  %v182 = vadd.f32 %v116, %v181
  %v183 = vpop.f32.mrf.mxu0
  %v184 = vadd.f32 %v112, %v183
  %v185 = vpop.f32.mrf.mxu0
  %v186 = vadd.f32 %v116, %v185
  %187 = vmatprep.mubr.bf16.mxu0 0
  %188 = vmatmul.mubr.bf16.gmra.mxu0 %v143
  %v189 = vpop.f32.mrf.mxu0
  %v190 = vadd.f32 %v112, %v189
  %v191 = vpop.f32.mrf.mxu0
  %v192 = vadd.f32 %v116, %v191
  %v193 = vpop.f32.mrf.mxu0
  %v194 = vadd.f32 %v112, %v193
  %v195 = vpop.f32.mrf.mxu0
  %v196 = vadd.f32 %v116, %v195
  %197 = vdwg.mxu0
  %v198 = vpack.c.bf16 %v184, %v180
  %v199 = vpack.c.bf16 %v186, %v182
  %v200 = vpack.c.bf16 %v194, %v190
  %v201 = vpack.c.bf16 %v196, %v192
  %v206 = vunpack.c.l.b16 %v198
  %v207 = vunpack.c.l.b16 %v199
  %v208 = vunpack.c.h.b16 %v198
  %v209 = vunpack.c.h.b16 %v199
  %v210 = vunpack.c.l.b16 %v200
  %v211 = vunpack.c.l.b16 %v201
  %v212 = vunpack.c.h.b16 %v200
  %v213 = vunpack.c.h.b16 %v201
  %v214 = vpack.c.b16 %v207, %v206
  %v215 = vpack.c.b16 %v209, %v208
  %v216 = vpack.c.b16 %v211, %v210
  %v217 = vpack.c.b16 %v213, %v212
  %vm222 = vcmask 1043456
  %vm223 = vcmask 654340
  %vm224 = vmor %vm223, %vm222
  %225 = vst.msk [vmem:[%s5] sm:$0xff] %vm224, %v214
  %226 = vst.msk [vmem:[%s5 + $0x8] sm:$0xff] %vm224, %v215
  %227 = vst.msk [vmem:[%s5 + $0x10] sm:$0xff] %vm224, %v216
  %228 = vst.msk [vmem:[%s5 + $0x18] sm:$0xff] %vm224, %v217
  // Predicated region
  $region22: #{encoder_forward.15} parent=0 // pred_check
    _
  $region23: #{encoder_forward.15} parent=0 // pred_check_branch
    %230 = sbr.rel (0) target = $region25
  $region24: #{encoder_forward.15} parent=0 // pred_region
    _
  $region25: #{encoder_forward.15} parent=0 // pred_fallthru
    _
  // Predicated region
  $region26: #{encoder_forward.15} parent=0 // pred_check
    _
  $region27: #{encoder_forward.15} parent=0 // pred_check_branch
    %232 = sbr.rel (0) target = $region29
  $region28: #{encoder_forward.15} parent=0 // pred_region
    _
  $region29: #{encoder_forward.15} parent=0 // pred_fallthru
    _

// kernel: encoder_forward.14
$region0: #{encoder_forward.14}
  #allocation0 [shape = 'u32[]', space=smem, size = 0x4, offset = 0x4, fixed_abs, tag = 'smem constant byte address 0x4 - core index']
  #allocation1 [shape = 'u32[144,128]{1,0:T(1,128)}', space=vmem, size = 0x12000, scoped, tag = 'internal scratch']
  #allocation2 [shape = 'bf16[32,32]{1,0:T(8,128)(2,1)}', space=vmem, size = 0x2000, scoped, tag = 'scratch operand']
  #allocation3 [shape = 'f32[32,32]{1,0:T(8,128)}', space=vmem, size = 0x4000, scoped, tag = 'scratch operand']
  %s0 = inlined_call_operand.vmem [shape: f32[32,32], index: 0, kind: input, shape index: {}]
  %s1 = inlined_call_operand.vmem [shape: f32[1,32], index: 1, kind: input, shape index: {}]
  %s2 = inlined_call_operand.vmem [shape: f32[1,32], index: 2, kind: input, shape index: {}]
  %s3 = inlined_call_operand.vmem [shape: f32[32,4], index: 3, kind: input, shape index: {}]
  %s4 = inlined_call_operand.vmem [shape: bf16[4,32,64], index: 4, kind: input, shape index: {}]
  %s5 = inlined_call_operand.vmem [shape: f32[4,1,64], index: 5, kind: input, shape index: {}]
  %s6 = inlined_call_operand.vmem [shape: bf16[4,64,32], index: 6, kind: input, shape index: {}]
  %s7 = inlined_call_operand.vmem [shape: f32[4,1,32], index: 7, kind: input, shape index: {}]
  %s8 = inlined_call_operand.vmem [shape: f32[32,32], index: 8, kind: output, shape index: {}]
  %s9 = sld [smem:[#allocation0]]
  $region73: #{encoder_forward.14} parent=0
    _
  %s11 = ssub.s32 1, %s9
  %s12 = scalar_select 0, %s11, %s9
  loop: start=0, step=1, limit=6
  $region2: #{encoder_forward.14} parent=0 // loop_pre_header
    _
  $region3: #{encoder_forward.14} parent=0 // loop_header
    %s14 = sphi 0, %s18
    %p15 = scmp.ge.s32.totalorder %s14, 6
    %s21 = sphi 0, %s33
    %s22 = sphi 0, %s29
    %s23 = sphi 0, %s21
    %s24 = sphi 0, %s22
    %s25 = sphi 0, %s23
    %s26 = sphi 0, %s24
    %s36 = sphi 0, %s38
    %s39 = sphi 0, %s36
    %s40 = sphi 0, %s39
    %s56 = sphi 0, %s40
    %s60 = sphi 0, %s60
    %s62 = sphi 0, %s60
    %s63 = sphi 0, %s62
    %s77 = sphi 0, %s63
    %s81 = sphi 0, %s81
    %s83 = sphi 0, %s81
    %s84 = sphi 0, %s83
    %s98 = sphi 0, %s84
    %s104 = sphi 0, %s106
    %s107 = sphi 0, %s104
    %s108 = sphi 0, %s107
    %s124 = sphi 0, %s108
    %s130 = sphi 0, %s132
    %s133 = sphi 0, %s130
    %s134 = sphi 0, %s133
    %s150 = sphi 0, %s134
    %s156 = sphi 0, %s158
    %s159 = sphi 0, %s156
    %s160 = sphi 0, %s159
    %s176 = sphi 0, %s160
    %s182 = sphi 0, %s184
    %s185 = sphi 0, %s182
    %s186 = sphi 0, %s185
    %s202 = sphi 0, %s186
    %s208 = sphi 0, %s210
    %s211 = sphi 0, %s208
    %s212 = sphi 0, %s211
    %s228 = sphi 0, %s212
    %s234 = sphi 0, %s236
    %s237 = sphi 0, %s234
    %s238 = sphi 0, %s237
    %s254 = sphi 0, %s238
  $region4: #{encoder_forward.14} parent=0 // loop_header_branch
    %17 = sbr.rel (%p15) target = $region8
  $region5: #{encoder_forward.14} parent=0 // loop_body
    %s19 = ssub.s32 %s14, 1
    %s20 = ssub.s32 %s14, 2
    %s27 = sadd.s32 1, %s22
    %p28 = scmp.ge.s32.totalorder %s27, 4
    %s29 = scalar_select %p28, 0, %s27
    %s30 = sadd.s32 1, %s21
    %s31 = scalar_select %p28, %s30, %s21
    %p32 = scmp.ge.s32.totalorder %s31, 1
    %s33 = scalar_select %p32, 0, %s31
    %s34 = ssub.s32 %s21, %s33
    %p35 = scmp.eq.s32.totalorder %s34, 0
    %s37 = sadd.s32 %s36, 1
    %s38 = scalar_select %p35, %s36, %s37
    %p41 = pneg %p35
    %p42 = scmp.eq.s32.totalorder %s14, 3
    %p43 = por %p41, %p42
    %p44 = scmp.ne.s32.totalorder %s36, %s39
    %p45 = scmp.eq.s32.totalorder %s14, 0
    %p46 = por %p44, %p45
    %p47 = scmp.ne.s32.totalorder %s36, %s39
    %p48 = scmp.eq.s32.totalorder %s19, 3
    %p49 = por %p47, %p48
    %p50 = scmp.ne.s32.totalorder %s39, %s40
    %p51 = scmp.eq.s32.totalorder %s19, 0
    %p52 = por %p50, %p51
    %p53 = scmp.ne.s32.totalorder %s39, %s40
    %p54 = scmp.eq.s32.totalorder %s20, 3
    %p55 = por %p53, %p54
    %p57 = scmp.ne.s32.totalorder %s40, %s56
    %p58 = scmp.eq.s32.totalorder %s20, 0
    %p59 = por %p57, %p58
    %s61 = sadd.s32 %s60, 1
    %p64 = scmp.eq.s32.totalorder %s14, 3
    %p65 = scmp.ne.s32.totalorder %s60, %s62
    %p66 = scmp.eq.s32.totalorder %s14, 0
    %p67 = por %p65, %p66
    %p68 = scmp.ne.s32.totalorder %s60, %s62
    %p69 = scmp.eq.s32.totalorder %s19, 3
    %p70 = por %p68, %p69
    %p71 = scmp.ne.s32.totalorder %s62, %s63
    %p72 = scmp.eq.s32.totalorder %s19, 0
    %p73 = por %p71, %p72
    %p74 = scmp.ne.s32.totalorder %s62, %s63
    %p75 = scmp.eq.s32.totalorder %s20, 3
    %p76 = por %p74, %p75
    %p78 = scmp.ne.s32.totalorder %s63, %s77
    %p79 = scmp.eq.s32.totalorder %s20, 0
    %p80 = por %p78, %p79
    %s82 = sadd.s32 %s81, 1
    %p85 = scmp.eq.s32.totalorder %s14, 3
    %p86 = scmp.ne.s32.totalorder %s81, %s83
    %p87 = scmp.eq.s32.totalorder %s14, 0
    %p88 = por %p86, %p87
    %p89 = scmp.ne.s32.totalorder %s81, %s83
    %p90 = scmp.eq.s32.totalorder %s19, 3
    %p91 = por %p89, %p90
    %p92 = scmp.ne.s32.totalorder %s83, %s84
    %p93 = scmp.eq.s32.totalorder %s19, 0
    %p94 = por %p92, %p93
    %p95 = scmp.ne.s32.totalorder %s83, %s84
    %p96 = scmp.eq.s32.totalorder %s20, 3
    %p97 = por %p95, %p96
    %p99 = scmp.ne.s32.totalorder %s84, %s98
    %p100 = scmp.eq.s32.totalorder %s20, 0
    %p101 = por %p99, %p100
    %s102 = ssub.s32 %s21, %s33
    %p103 = scmp.eq.s32.totalorder %s102, 0
    %s105 = sadd.s32 %s104, 1
    %s106 = scalar_select %p103, %s104, %s105
    %p109 = pneg %p103
    %p110 = scmp.eq.s32.totalorder %s14, 3
    %p111 = por %p109, %p110
    %p112 = scmp.ne.s32.totalorder %s104, %s107
    %p113 = scmp.eq.s32.totalorder %s14, 0
    %p114 = por %p112, %p113
    %p115 = scmp.ne.s32.totalorder %s104, %s107
    %p116 = scmp.eq.s32.totalorder %s19, 3
    %p117 = por %p115, %p116
    %p118 = scmp.ne.s32.totalorder %s107, %s108
    %p119 = scmp.eq.s32.totalorder %s19, 0
    %p120 = por %p118, %p119
    %p121 = scmp.ne.s32.totalorder %s107, %s108
    %p122 = scmp.eq.s32.totalorder %s20, 3
    %p123 = por %p121, %p122
    %p125 = scmp.ne.s32.totalorder %s108, %s124
    %p126 = scmp.eq.s32.totalorder %s20, 0
    %p127 = por %p125, %p126
    %s128 = ssub.s32 %s22, %s29
    %p129 = scmp.eq.s32.totalorder %s128, 0
    %s131 = sadd.s32 %s130, 1
    %s132 = scalar_select %p129, %s130, %s131
    %p135 = pneg %p129
    %p136 = scmp.eq.s32.totalorder %s14, 3
    %p137 = por %p135, %p136
    %p138 = scmp.ne.s32.totalorder %s130, %s133
    %p139 = scmp.eq.s32.totalorder %s14, 0
    %p140 = por %p138, %p139
    %p141 = scmp.ne.s32.totalorder %s130, %s133
    %p142 = scmp.eq.s32.totalorder %s19, 3
    %p143 = por %p141, %p142
    %p144 = scmp.ne.s32.totalorder %s133, %s134
    %p145 = scmp.eq.s32.totalorder %s19, 0
    %p146 = por %p144, %p145
    %p147 = scmp.ne.s32.totalorder %s133, %s134
    %p148 = scmp.eq.s32.totalorder %s20, 3
    %p149 = por %p147, %p148
    %p151 = scmp.ne.s32.totalorder %s134, %s150
    %p152 = scmp.eq.s32.totalorder %s20, 0
    %p153 = por %p151, %p152
    %s154 = ssub.s32 %s22, %s29
    %p155 = scmp.eq.s32.totalorder %s154, 0
    %s157 = sadd.s32 %s156, 1
    %s158 = scalar_select %p155, %s156, %s157
    %p161 = pneg %p155
    %p162 = scmp.eq.s32.totalorder %s14, 3
    %p163 = por %p161, %p162
    %p164 = scmp.ne.s32.totalorder %s156, %s159
    %p165 = scmp.eq.s32.totalorder %s14, 0
    %p166 = por %p164, %p165
    %p167 = scmp.ne.s32.totalorder %s156, %s159
    %p168 = scmp.eq.s32.totalorder %s19, 3
    %p169 = por %p167, %p168
    %p170 = scmp.ne.s32.totalorder %s159, %s160
    %p171 = scmp.eq.s32.totalorder %s19, 0
    %p172 = por %p170, %p171
    %p173 = scmp.ne.s32.totalorder %s159, %s160
    %p174 = scmp.eq.s32.totalorder %s20, 3
    %p175 = por %p173, %p174
    %p177 = scmp.ne.s32.totalorder %s160, %s176
    %p178 = scmp.eq.s32.totalorder %s20, 0
    %p179 = por %p177, %p178
    %s180 = ssub.s32 %s22, %s29
    %p181 = scmp.eq.s32.totalorder %s180, 0
    %s183 = sadd.s32 %s182, 1
    %s184 = scalar_select %p181, %s182, %s183
    %p187 = pneg %p181
    %p188 = scmp.eq.s32.totalorder %s14, 3
    %p189 = por %p187, %p188
    %p190 = scmp.ne.s32.totalorder %s182, %s185
    %p191 = scmp.eq.s32.totalorder %s14, 0
    %p192 = por %p190, %p191
    %p193 = scmp.ne.s32.totalorder %s182, %s185
    %p194 = scmp.eq.s32.totalorder %s19, 3
    %p195 = por %p193, %p194
    %p196 = scmp.ne.s32.totalorder %s185, %s186
    %p197 = scmp.eq.s32.totalorder %s19, 0
    %p198 = por %p196, %p197
    %p199 = scmp.ne.s32.totalorder %s185, %s186
    %p200 = scmp.eq.s32.totalorder %s20, 3
    %p201 = por %p199, %p200
    %p203 = scmp.ne.s32.totalorder %s186, %s202
    %p204 = scmp.eq.s32.totalorder %s20, 0
    %p205 = por %p203, %p204
    %s206 = ssub.s32 %s22, %s29
    %p207 = scmp.eq.s32.totalorder %s206, 0
    %s209 = sadd.s32 %s208, 1
    %s210 = scalar_select %p207, %s208, %s209
    %p213 = pneg %p207
    %p214 = scmp.eq.s32.totalorder %s14, 3
    %p215 = por %p213, %p214
    %p216 = scmp.ne.s32.totalorder %s208, %s211
    %p217 = scmp.eq.s32.totalorder %s14, 0
    %p218 = por %p216, %p217
    %p219 = scmp.ne.s32.totalorder %s208, %s211
    %p220 = scmp.eq.s32.totalorder %s19, 3
    %p221 = por %p219, %p220
    %p222 = scmp.ne.s32.totalorder %s211, %s212
    %p223 = scmp.eq.s32.totalorder %s19, 0
    %p224 = por %p222, %p223
    %p225 = scmp.ne.s32.totalorder %s211, %s212
    %p226 = scmp.eq.s32.totalorder %s20, 3
    %p227 = por %p225, %p226
    %p229 = scmp.ne.s32.totalorder %s212, %s228
    %p230 = scmp.eq.s32.totalorder %s20, 0
    %p231 = por %p229, %p230
    %s232 = ssub.s32 %s21, %s33
    %p233 = scmp.eq.s32.totalorder %s232, 0
    %s235 = sadd.s32 %s234, 1
    %s236 = scalar_select %p233, %s234, %s235
    %p239 = pneg %p233
    %p240 = scmp.eq.s32.totalorder %s14, 3
    %p241 = por %p239, %p240
    %p242 = scmp.ne.s32.totalorder %s234, %s237
    %p243 = scmp.eq.s32.totalorder %s14, 0
    %p244 = por %p242, %p243
    %p245 = scmp.ne.s32.totalorder %s234, %s237
    %p246 = scmp.eq.s32.totalorder %s19, 3
    %p247 = por %p245, %p246
    %p248 = scmp.ne.s32.totalorder %s237, %s238
    %p249 = scmp.eq.s32.totalorder %s19, 0
    %p250 = por %p248, %p249
    %p251 = scmp.ne.s32.totalorder %s237, %s238
    %p252 = scmp.eq.s32.totalorder %s20, 3
    %p253 = por %p251, %p252
    %p255 = scmp.ne.s32.totalorder %s238, %s254
    %p256 = scmp.eq.s32.totalorder %s20, 0
    %p257 = por %p255, %p256
    %p258 = scmp.le.s32.totalorder 1, %s14
    %p259 = scmp.lt.s32.totalorder %s14, 5
    %p260 = pnand %p258, %p259
    %p261 = pneg %p260
    // Predicated region
    $region9: #{encoder_forward.14} parent=5 // pred_check
      _
    $region10: #{encoder_forward.14} parent=5 // pred_check_branch
      %263 = sbr.rel (%p260) target = $region12
    $region11: #{encoder_forward.14} parent=5 // pred_region
      %s264 = ssub.s32 %s14, 1
      // Predicated region
      $region13: #{encoder_forward.14} parent=11 // pred_check
        %p265 = pneg %p52
      $region14: #{encoder_forward.14} parent=11 // pred_check_branch
        %267 = sbr.rel (%p265) target = $region16
      $region15: #{encoder_forward.14} parent=11 // pred_region
        %s268 = smul.u32 4, %s23
        %p269 = scmp.lt.s32.totalorder %s268, 3
        %s270 = scalar_select %p269, %s268, 3
        %s271 = smul.addr %s270, 8
        %s272 = scalar_lea.vmem %s0, %s271
        %s273 = smul.u32 4, %s23
      $region16: #{encoder_forward.14} parent=11 // pred_fallthru
        _
      // Predicated region
      $region17: #{encoder_forward.14} parent=11 // pred_check
        %p274 = pneg %p73
      $region18: #{encoder_forward.14} parent=11 // pred_check_branch
        %276 = sbr.rel (%p274) target = $region20
      $region19: #{encoder_forward.14} parent=11 // pred_region
        _
      $region20: #{encoder_forward.14} parent=11 // pred_fallthru
        _
      // Predicated region
      $region21: #{encoder_forward.14} parent=11 // pred_check
        %p277 = pneg %p94
      $region22: #{encoder_forward.14} parent=11 // pred_check_branch
        %279 = sbr.rel (%p277) target = $region24
      $region23: #{encoder_forward.14} parent=11 // pred_region
        _
      $region24: #{encoder_forward.14} parent=11 // pred_fallthru
        _
      // Predicated region
      $region25: #{encoder_forward.14} parent=11 // pred_check
        %p280 = pneg %p120
      $region26: #{encoder_forward.14} parent=11 // pred_check_branch
        %282 = sbr.rel (%p280) target = $region28
      $region27: #{encoder_forward.14} parent=11 // pred_region
        %s283 = smul.u32 4, %s23
        %p284 = scmp.lt.s32.totalorder %s283, 3
        %s285 = scalar_select %p284, %s283, 3
        %s286 = smul.addr %s285, 8
        %s287 = scalar_lea.vmem %s3, %s286
        %s288 = smul.u32 4, %s23
      $region28: #{encoder_forward.14} parent=11 // pred_fallthru
        _
    $region12: #{encoder_forward.14} parent=5 // pred_fallthru
      _
    %p289 = scmp.lt.s32.totalorder %s14, 4
    // Predicated region
    $region29: #{encoder_forward.14} parent=5 // pred_check
      %p290 = pneg %p289
    $region30: #{encoder_forward.14} parent=5 // pred_check_branch
      %292 = sbr.rel (%p290) target = $region32
    $region31: #{encoder_forward.14} parent=5 // pred_region
      // Predicated region
      $region33: #{encoder_forward.14} parent=31 // pred_check
        %p293 = pneg %p140
      $region34: #{encoder_forward.14} parent=31 // pred_check_branch
        %295 = sbr.rel (%p293) target = $region36
      $region35: #{encoder_forward.14} parent=31 // pred_region
        %p296 = scmp.lt.s32.totalorder %s22, 3
        %s297 = scalar_select %p296, %s22, 3
        %s298 = smul.addr %s297, 4
        %s299 = smul.addr %s298, 4
        %s300 = scalar_lea.vmem %s4, %s299
      $region36: #{encoder_forward.14} parent=31 // pred_fallthru
        _
      // Predicated region
      $region37: #{encoder_forward.14} parent=31 // pred_check
        %p301 = pneg %p166
      $region38: #{encoder_forward.14} parent=31 // pred_check_branch
        %303 = sbr.rel (%p301) target = $region40
      $region39: #{encoder_forward.14} parent=31 // pred_region
        %p304 = scmp.lt.s32.totalorder %s22, 3
        %s305 = scalar_select %p304, %s22, 3
        %s306 = scalar_lea.vmem %s5, %s305
      $region40: #{encoder_forward.14} parent=31 // pred_fallthru
        _
      // Predicated region
      $region41: #{encoder_forward.14} parent=31 // pred_check
        %p307 = pneg %p192
      $region42: #{encoder_forward.14} parent=31 // pred_check_branch
        %309 = sbr.rel (%p307) target = $region44
      $region43: #{encoder_forward.14} parent=31 // pred_region
        %p310 = scmp.lt.s32.totalorder %s22, 3
        %s311 = scalar_select %p310, %s22, 3
        %s312 = smul.addr %s311, 8
        %s313 = smul.addr %s312, 4
        %s314 = scalar_lea.vmem %s6, %s313
      $region44: #{encoder_forward.14} parent=31 // pred_fallthru
        _
      // Predicated region
      $region45: #{encoder_forward.14} parent=31 // pred_check
        %p315 = pneg %p218
      $region46: #{encoder_forward.14} parent=31 // pred_check_branch
        %317 = sbr.rel (%p315) target = $region48
      $region47: #{encoder_forward.14} parent=31 // pred_region
        %p318 = scmp.lt.s32.totalorder %s22, 3
        %s319 = scalar_select %p318, %s22, 3
        %s320 = scalar_lea.vmem %s7, %s319
      $region48: #{encoder_forward.14} parent=31 // pred_fallthru
        _
    $region32: #{encoder_forward.14} parent=5 // pred_fallthru
      _
    %p321 = scmp.le.s32.totalorder 1, %s14
    %p322 = scmp.lt.s32.totalorder %s14, 5
    %p323 = pnand %p321, %p322
    %p324 = pneg %p323
    // Predicated region
    $region49: #{encoder_forward.14} parent=5 // pred_check
      _
    $region50: #{encoder_forward.14} parent=5 // pred_check_branch
      %326 = sbr.rel (%p323) target = $region52
    $region51: #{encoder_forward.14} parent=5 // pred_region
      %s327 = ssub.s32 %s14, 1
      %s328 = smul.u32 4, %s23
      %p329 = scmp.lt.s32.totalorder %s328, 3
      %s330 = scalar_select %p329, %s328, 3
      %s331 = smul.addr %s330, 8
      %s332 = scalar_lea.vmem %s0, %s331
      %p333 = pneg %p52
      %p334 = pneg %p49
      %p335 = pneg %p73
      %p336 = pneg %p70
      %p337 = pneg %p94
      %p338 = pneg %p91
      %s339 = smul.u32 4, %s23
      %p340 = scmp.lt.s32.totalorder %s339, 3
      %s341 = scalar_select %p340, %s339, 3
      %s342 = smul.addr %s341, 8
      %s343 = scalar_lea.vmem %s3, %s342
      %p344 = pneg %p120
      %p345 = pneg %p117
      %p346 = scmp.lt.s32.totalorder %s24, 3
      %s347 = scalar_select %p346, %s24, 3
      %s348 = smul.addr %s347, 4
      %s349 = smul.addr %s348, 4
      %s350 = scalar_lea.vmem %s4, %s349
      %p351 = pneg %p146
      %p352 = pneg %p143
      %p353 = scmp.lt.s32.totalorder %s24, 3
      %s354 = scalar_select %p353, %s24, 3
      %s355 = scalar_lea.vmem %s5, %s354
      %p356 = pneg %p172
      %p357 = pneg %p169
      %p358 = scmp.lt.s32.totalorder %s24, 3
      %s359 = scalar_select %p358, %s24, 3
      %s360 = smul.addr %s359, 8
      %s361 = smul.addr %s360, 4
      %s362 = scalar_lea.vmem %s6, %s361
      %p363 = pneg %p198
      %p364 = pneg %p195
      %p365 = scmp.lt.s32.totalorder %s24, 3
      %s366 = scalar_select %p365, %s24, 3
      %s367 = scalar_lea.vmem %s7, %s366
      %p368 = pneg %p224
      %p369 = pneg %p221
      %p370 = pneg %p250
      %p371 = pneg %p247
      %s372 = smul.u32 4, %s23
      %p373 = scmp.lt.s32.totalorder %s372, 3
      %s374 = scalar_select %p373, %s372, 3
      %s375 = smul.addr %s374, 8
      %s376 = scalar_lea.vmem %s8, %s375
      %s377 = smul.u32 4, %s23
      %p378 = scmp.lt.s32.totalorder %s377, 3
      %s379 = scalar_select %p378, %s377, 3
      %s380 = smul.addr %s379, 8
      %s381 = scalar_lea.vmem %s0, %s380
      %s382 = smul.u32 4, %s23
      %s383 = smul.u32 4, %s23
      %p384 = scmp.lt.s32.totalorder %s383, 3
      %s385 = scalar_select %p384, %s383, 3
      %s386 = smul.addr %s385, 8
      %s387 = scalar_lea.vmem %s3, %s386
      %s388 = smul.u32 4, %s23
      %p389 = scmp.lt.s32.totalorder %s24, 3
      %s390 = scalar_select %p389, %s24, 3
      %s391 = smul.addr %s390, 4
      %s392 = smul.addr %s391, 4
      %s393 = scalar_lea.vmem %s4, %s392
      %p394 = scmp.lt.s32.totalorder %s24, 3
      %s395 = scalar_select %p394, %s24, 3
      %s396 = scalar_lea.vmem %s5, %s395
      %p397 = scmp.lt.s32.totalorder %s24, 3
      %s398 = scalar_select %p397, %s24, 3
      %s399 = smul.addr %s398, 8
      %s400 = smul.addr %s399, 4
      %s401 = scalar_lea.vmem %s6, %s400
      %p402 = scmp.lt.s32.totalorder %s24, 3
      %s403 = scalar_select %p402, %s24, 3
      %s404 = scalar_lea.vmem %s7, %s403
      %s405 = smul.u32 4, %s23
      %p406 = scmp.lt.s32.totalorder %s405, 3
      %s407 = scalar_select %p406, %s405, 3
      %s408 = smul.addr %s407, 8
      %s409 = scalar_lea.vmem %s8, %s408
      %s410 = smul.u32 4, %s23
      %p412 = scmp.eq.s32.totalorder %s24, 0
      // Predicated region
      $region53: #{encoder_forward.14} parent=51 // pred_check
        %p413 = pneg %p412
      $region54: #{encoder_forward.14} parent=51 // pred_check_branch
        %415 = sbr.rel (%p413) target = $region56
      $region55: #{encoder_forward.14} parent=51 // pred_region
        %v416 = vld [vmem:[%s381] sm:$0xff]
        %v417 = vld [vmem:[%s381 + $0x8] sm:$0xff]
        %v418 = vld [vmem:[%s381 + $0x10] sm:$0xff]
        %v419 = vld [vmem:[%s381 + $0x18] sm:$0xff]
        %vm420 = vcmask 261120
        %v421 = vsel %vm420, %v416, 0.0
        %422 = vadd.xlane.f32.xlu0 %v421
        %v423 = vpop.xlane.xlu0 %422
        %v424 = vsel %vm420, %v417, 0.0
        %425 = vadd.xlane.f32.xlu0 %v424
        %v426 = vpop.xlane.xlu0 %425
        %v427 = vsel %vm420, %v418, 0.0
        %428 = vadd.xlane.f32.xlu0 %v427
        %v429 = vpop.xlane.xlu0 %428
        %v430 = vsel %vm420, %v419, 0.0
        %431 = vadd.xlane.f32.xlu0 %v430
        %v432 = vpop.xlane.xlu0 %431
        %v433 = vrcp.pop 32.0
        %v434 = vmul.f32 %v423, %v433
        %v435 = vmul.f32 %v426, %v433
        %v436 = vmul.f32 %v429, %v433
        %v437 = vmul.f32 %v432, %v433
        %v438 = vsub.f32 %v416, %v434
        %v439 = vsub.f32 %v417, %v435
        %v440 = vsub.f32 %v418, %v436
        %v441 = vsub.f32 %v419, %v437
        %v442 = vmul.f32 %v438, %v438
        %v443 = vmul.f32 %v439, %v439
        %v444 = vmul.f32 %v440, %v440
        %v445 = vmul.f32 %v441, %v441
        %v446 = vsel %vm420, %v442, 0.0
        %447 = vadd.xlane.f32.xlu0 %v446
        %v448 = vpop.xlane.xlu0 %447
        %v449 = vsel %vm420, %v443, 0.0
        %450 = vadd.xlane.f32.xlu0 %v449
        %v451 = vpop.xlane.xlu0 %450
        %v452 = vsel %vm420, %v444, 0.0
        %453 = vadd.xlane.f32.xlu0 %v452
        %v454 = vpop.xlane.xlu0 %453
        %v455 = vsel %vm420, %v445, 0.0
        %456 = vadd.xlane.f32.xlu0 %v455
        %v457 = vpop.xlane.xlu0 %456
        %v458 = vmul.f32 %v448, %v433
        %v459 = vmul.f32 %v451, %v433
        %v460 = vmul.f32 %v454, %v433
        %v461 = vmul.f32 %v457, %v433
        %v462 = vadd.f32 %v458, 1e-05
        %v463 = vadd.f32 %v459, 1e-05
        %v464 = vadd.f32 %v460, 1e-05
        %v465 = vadd.f32 %v461, 1e-05
        %v466 = vrsqrt.pop %v462
        %v467 = vrsqrt.pop %v463
        %v468 = vrsqrt.pop %v464
        %v469 = vrsqrt.pop %v465
        %v470 = vmul.f32 %v438, %v466
        %v471 = vmul.f32 %v439, %v467
        %v472 = vmul.f32 %v440, %v468
        %v473 = vmul.f32 %v441, %v469
        %v474 = vld [vmem:[%s1] sm:$0x1]
        %v476 = vlaneseq
        %v477 = vshrl.u32 %v476, 7
        %v478 = vsub.s32 0, %v477
        %v479 = vrot.slane %v474, %v478
        %v481 = vmul.f32 %v470, %v479
        %v482 = vmul.f32 %v471, %v479
        %v483 = vmul.f32 %v472, %v479
        %v484 = vmul.f32 %v473, %v479
        %v485 = vld [vmem:[%s2] sm:$0x1]
        %v487 = vlaneseq
        %v488 = vshrl.u32 %v487, 7
        %v489 = vsub.s32 0, %v488
        %v490 = vrot.slane %v485, %v489
        %v492 = vadd.f32 %v481, %v490
        %v493 = vadd.f32 %v482, %v490
        %v494 = vadd.f32 %v483, %v490
        %v495 = vadd.f32 %v484, %v490
        %v496 = vpack.c.bf16 %v493, %v492
        %v497 = vpack.c.bf16 %v495, %v494
        %v500 = vunpack.c.l.b16 %v496
        %v501 = vunpack.c.h.b16 %v496
        %v502 = vunpack.c.l.b16 %v497
        %v503 = vunpack.c.h.b16 %v497
        %v504 = vpack.c.b16 %v500, %v500
        %v505 = vpack.c.b16 %v501, %v501
        %v506 = vpack.c.b16 %v502, %v502
        %v507 = vpack.c.b16 %v503, %v503
        %vm512 = vcmask 257024
        %513 = vst.msk [vmem:[#allocation2] sm:$0xf] %vm512, %v504
        %514 = vst.msk [vmem:[#allocation2 + $0x4] sm:$0xf] %vm512, %v505
        %515 = vst.msk [vmem:[#allocation2 + $0x8] sm:$0xf] %vm512, %v506
        %516 = vst.msk [vmem:[#allocation2 + $0xc] sm:$0xf] %vm512, %v507
        %517 = vst.msk [vmem:[#allocation3] sm:$0xff] %vm420, 0.0
        %518 = vst.msk [vmem:[#allocation3 + $0x8] sm:$0xff] %vm420, 0.0
        %519 = vst.msk [vmem:[#allocation3 + $0x10] sm:$0xff] %vm420, 0.0
        %520 = vst.msk [vmem:[#allocation3 + $0x18] sm:$0xff] %vm420, 0.0
      $region56: #{encoder_forward.14} parent=51 // pred_fallthru
        _
      %v521 = vld [vmem:[%s387] sm:$0xff]
      %v522 = vld [vmem:[%s387 + $0x8] sm:$0xff]
      %v523 = vld [vmem:[%s387 + $0x10] sm:$0xff]
      %v524 = vld [vmem:[%s387 + $0x18] sm:$0xff]
      %v525 = vlaneseq
      %v526 = vand.u32 %v525, 127
      %v527 = vstv %s24
      %vm528 = vcmp.eq.s32.totalorder %v526, %v527
      %v529 = vsel %vm528, %v521, 0.0
      %v530 = vsel %vm528, %v522, 0.0
      %v531 = vsel %vm528, %v523, 0.0
      %v532 = vsel %vm528, %v524, 0.0
      %vm533 = vcmask 31744
      %v534 = vsel %vm533, %v529, 0.0
      %535 = vadd.xlane.f32.xlu0 %v534
      %v536 = vpop.xlane.xlu0 %535
      %v537 = vsel %vm533, %v530, 0.0
      %538 = vadd.xlane.f32.xlu0 %v537
      %v539 = vpop.xlane.xlu0 %538
      %v540 = vsel %vm533, %v531, 0.0
      %541 = vadd.xlane.f32.xlu0 %v540
      %v542 = vpop.xlane.xlu0 %541
      %v543 = vsel %vm533, %v532, 0.0
      %544 = vadd.xlane.f32.xlu0 %v543
      %v545 = vpop.xlane.xlu0 %544
      %v546 = vld [vmem:[#allocation2] sm:$0xf]
      %v547 = vld [vmem:[#allocation2 + $0x4] sm:$0xf]
      %v548 = vld [vmem:[#allocation2 + $0x8] sm:$0xf]
      %v549 = vld [vmem:[#allocation2 + $0xc] sm:$0xf]
      %v550 = vld [vmem:[%s393] sm:$0xf]
      %v551 = vld [vmem:[%s393 + $0x4] sm:$0xf]
      %v552 = vld [vmem:[%s393 + $0x8] sm:$0xf]
      %v553 = vld [vmem:[%s393 + $0xc] sm:$0xf]
      %v554 = vld [vmem:[%s396] sm:$0x1]
      %v556 = vlaneseq
      %v557 = vshrl.u32 %v556, 7
      %v558 = vsub.s32 0, %v557
      %v559 = vrot.slane %v554, %v558
      %v565 = vunpack.c.l.b16 %v546
      %v566 = vunpack.c.l.b16 %v547
      %v567 = vunpack.c.l.b16 %v548
      %v568 = vunpack.c.l.b16 %v549
      %v569 = vpack.c.b16 %v566, %v565
      %v570 = vpack.c.b16 %v568, %v567
      %v575 = vunpack.c.l.b16 %v550
      %v576 = vunpack.c.l.b16 %v551
      %v577 = vunpack.c.l.b16 %v552
      %v578 = vunpack.c.l.b16 %v553
      %v579 = vpack.c.b16 %v576, %v575
      %v580 = vpack.c.b16 %v578, %v577
      %vm583 = vcmask 261120
      %v585 = vsel %vm583, %v569, 0
      %v588 = vsel %vm583, %v570, 0
      %590 = vmatprep.subr.bf16.mxu0 0
      %591 = vmatpush1.bf16.msra.mxu0 0
      %592 = vmatprep.subr.bf16.mxu0 0
      %593 = vmatpush1.bf16.msra.mxu0 0
      %594 = vmatprep.subr.bf16.mxu0 0
      %595 = vmatpush1.bf16.msra.mxu0 0
      %596 = vmatprep.subr.bf16.mxu0 0
      %597 = vmatpush1.bf16.msra.mxu0 0
      %598 = vmatprep.subr.bf16.mxu0 0
      %599 = vmatpush1.bf16.msra.mxu0 0
      %600 = vmatprep.subr.bf16.mxu0 0
      %601 = vmatpush1.bf16.msra.mxu0 0
      %602 = vmatprep.subr.bf16.mxu0 0
      %603 = vmatpush1.bf16.msra.mxu0 %v580
      %604 = vmatprep.subr.bf16.mxu0 0
      %605 = vmatpush1.bf16.msra.mxu0 %v579
      %606 = vmatprep.subr.bf16.mxu0 0
      %607 = vmatpush2.bf16.msra.mxu0 0
      %608 = vmatprep.subr.bf16.mxu0 0
      %609 = vmatpush2.bf16.msra.mxu0 0
      %610 = vmatprep.subr.bf16.mxu0 0
      %611 = vmatpush2.bf16.msra.mxu0 0
      %612 = vmatprep.subr.bf16.mxu0 0
      %613 = vmatpush2.bf16.msra.mxu0 0
      %614 = vmatprep.subr.bf16.mxu0 0
      %615 = vmatpush2.bf16.msra.mxu0 0
      %616 = vmatprep.subr.bf16.mxu0 0
      %617 = vmatpush2.bf16.msra.mxu0 0
      %618 = vmatprep.subr.bf16.mxu0 0
      %619 = vmatpush2.bf16.msra.mxu0 0
      %620 = vmatprep.subr.bf16.mxu0 0
      %621 = vmatpush2.bf16.msra.mxu0 0
      %622 = vmatprep.mubr.bf16.mxu0 0
      %623 = vmatmul.mubr.bf16.gmra.mxu0 %v585
      %v624 = vpop.f32.mrf.mxu0
      %v625 = vadd.f32 %v559, %v624
      %v626 = vpop.f32.mrf.mxu0
      %v627 = vpop.f32.mrf.mxu0
      %v628 = vadd.f32 %v559, %v627
      %v629 = vpop.f32.mrf.mxu0
      %630 = vmatprep.mubr.bf16.mxu0 0
      %631 = vmatmul.mubr.bf16.gmra.mxu0 %v588
      %v632 = vpop.f32.mrf.mxu0
      %v633 = vadd.f32 %v559, %v632
      %v634 = vpop.f32.mrf.mxu0
      %v635 = vpop.f32.mrf.mxu0
      %v636 = vadd.f32 %v559, %v635
      %v637 = vpop.f32.mrf.mxu0
      %638 = vdwg.mxu0
      %v639 = vmul.f32 %v625, %v625
      %v640 = vmul.f32 %v628, %v628
      %v641 = vmul.f32 %v633, %v633
      %v642 = vmul.f32 %v636, %v636
      %v643 = vmul.f32 %v625, %v639
      %v644 = vmul.f32 %v628, %v640
      %v645 = vmul.f32 %v633, %v641
      %v646 = vmul.f32 %v636, %v642
      %v647 = vmul.f32 %v643, 0.044715
      %v648 = vmul.f32 %v644, 0.044715
      %v649 = vmul.f32 %v645, 0.044715
      %v650 = vmul.f32 %v646, 0.044715
      %v651 = vadd.f32 %v625, %v647
      %v652 = vadd.f32 %v628, %v648
      %v653 = vadd.f32 %v633, %v649
      %v654 = vadd.f32 %v636, %v650
      %v655 = vmul.f32 %v651, 0.7978846
      %v656 = vmul.f32 %v652, 0.7978846
      %v657 = vmul.f32 %v653, 0.7978846
      %v658 = vmul.f32 %v654, 0.7978846
      %v659 = vtanh.pop %v655
      %v660 = vtanh.pop %v656
      %v661 = vtanh.pop %v657
      %v662 = vtanh.pop %v658
      %v663 = vadd.f32 %v659, 1.0
      %v664 = vadd.f32 %v660, 1.0
      %v665 = vadd.f32 %v661, 1.0
      %v666 = vadd.f32 %v662, 1.0
      %v667 = vmul.f32 %v663, 0.5
      %v668 = vmul.f32 %v664, 0.5
      %v669 = vmul.f32 %v665, 0.5
      %v670 = vmul.f32 %v666, 0.5
      %v671 = vmul.f32 %v625, %v667
      %v672 = vmul.f32 %v628, %v668
      %v673 = vmul.f32 %v633, %v669
      %v674 = vmul.f32 %v636, %v670
      %v675 = vmul.f32 %v671, %v536
      %v676 = vmul.f32 %v672, %v539
      %v677 = vmul.f32 %v673, %v542
      %v678 = vmul.f32 %v674, %v545
      %v679 = vpack.c.bf16 %v676, %v675
      %v680 = vpack.c.bf16 %v678, %v677
      %v681 = vld [vmem:[%s401] sm:$0xf]
      %v682 = vld [vmem:[%s401 + $0x4] sm:$0xf]
      %v683 = vld [vmem:[%s401 + $0x8] sm:$0xf]
      %v684 = vld [vmem:[%s401 + $0xc] sm:$0xf]
      %v685 = vld [vmem:[%s401 + $0x10] sm:$0xf]
      %v686 = vld [vmem:[%s401 + $0x14] sm:$0xf]
      %v687 = vld [vmem:[%s401 + $0x18] sm:$0xf]
      %v688 = vld [vmem:[%s401 + $0x1c] sm:$0xf]
      %v689 = vld [vmem:[#allocation3] sm:$0xff]
      %v690 = vld [vmem:[#allocation3 + $0x8] sm:$0xff]
      %v691 = vld [vmem:[#allocation3 + $0x10] sm:$0xff]
      %v692 = vld [vmem:[#allocation3 + $0x18] sm:$0xff]
      %v693 = vld [vmem:[%s404] sm:$0x1]
      %v695 = vlaneseq
      %v696 = vshrl.u32 %v695, 7
      %v697 = vsub.s32 0, %v696
      %v698 = vrot.slane %v693, %v697
      %v700 = vmul.f32 %v536, %v698
      %v701 = vmul.f32 %v539, %v698
      %v702 = vmul.f32 %v542, %v698
      %v703 = vmul.f32 %v545, %v698
      %v712 = vunpack.c.l.b16 %v681
      %v713 = vunpack.c.l.b16 %v682
      %v714 = vunpack.c.l.b16 %v683
      %v715 = vunpack.c.l.b16 %v684
      %v716 = vunpack.c.l.b16 %v685
      %v717 = vunpack.c.l.b16 %v686
      %v718 = vunpack.c.l.b16 %v687
      %v719 = vunpack.c.l.b16 %v688
      %v720 = vpack.c.b16 %v713, %v712
      %v721 = vpack.c.b16 %v715, %v714
      %v722 = vpack.c.b16 %v717, %v716
      %v723 = vpack.c.b16 %v719, %v718
      %vm728 = vcmask 523264
      %v730 = vsel %vm728, %v679, 0
      %v733 = vsel %vm728, %v680, 0
      %735 = vmatprep.subr.bf16.mxu0 0
      %736 = vmatpush1.bf16.msra.mxu0 0
      %737 = vmatprep.subr.bf16.mxu0 0
      %738 = vmatpush1.bf16.msra.mxu0 0
      %739 = vmatprep.subr.bf16.mxu0 0
      %740 = vmatpush1.bf16.msra.mxu0 0
      %741 = vmatprep.subr.bf16.mxu0 0
      %742 = vmatpush1.bf16.msra.mxu0 0
      %743 = vmatprep.subr.bf16.mxu0 0
      %744 = vmatpush1.bf16.msra.mxu0 %v723
      %745 = vmatprep.subr.bf16.mxu0 0
      %746 = vmatpush1.bf16.msra.mxu0 %v722
      %747 = vmatprep.subr.bf16.mxu0 0
      %748 = vmatpush1.bf16.msra.mxu0 %v721
      %749 = vmatprep.subr.bf16.mxu0 0
      %750 = vmatpush1.bf16.msra.mxu0 %v720
      %751 = vmatprep.subr.bf16.mxu0 0
      %752 = vmatpush2.bf16.msra.mxu0 0
      %753 = vmatprep.subr.bf16.mxu0 0
      %754 = vmatpush2.bf16.msra.mxu0 0
      %755 = vmatprep.subr.bf16.mxu0 0
      %756 = vmatpush2.bf16.msra.mxu0 0
      %757 = vmatprep.subr.bf16.mxu0 0
      %758 = vmatpush2.bf16.msra.mxu0 0
      %759 = vmatprep.subr.bf16.mxu0 0
      %760 = vmatpush2.bf16.msra.mxu0 0
      %761 = vmatprep.subr.bf16.mxu0 0
      %762 = vmatpush2.bf16.msra.mxu0 0
      %763 = vmatprep.subr.bf16.mxu0 0
      %764 = vmatpush2.bf16.msra.mxu0 0
      %765 = vmatprep.subr.bf16.mxu0 0
      %766 = vmatpush2.bf16.msra.mxu0 0
      %767 = vmatprep.mubr.bf16.mxu0 0
      %768 = vmatmul.mubr.bf16.gmra.mxu0 %v730
      %v769 = vpop.f32.mrf.mxu0
      %v770 = vadd.f32 %v700, %v769
      %v771 = vpop.f32.mrf.mxu0
      %v772 = vpop.f32.mrf.mxu0
      %v773 = vadd.f32 %v701, %v772
      %v774 = vpop.f32.mrf.mxu0
      %775 = vmatprep.mubr.bf16.mxu0 0
      %776 = vmatmul.mubr.bf16.gmra.mxu0 %v733
      %v777 = vpop.f32.mrf.mxu0
      %v778 = vadd.f32 %v702, %v777
      %v779 = vpop.f32.mrf.mxu0
      %v780 = vpop.f32.mrf.mxu0
      %v781 = vadd.f32 %v703, %v780
      %v782 = vpop.f32.mrf.mxu0
      %783 = vdwg.mxu0
      %v784 = vadd.f32 %v689, %v770
      %v785 = vadd.f32 %v690, %v773
      %v786 = vadd.f32 %v691, %v778
      %v787 = vadd.f32 %v692, %v781
      %788 = vst.msk [vmem:[#allocation3] sm:$0xff] %vm583, %v784
      %789 = vst.msk [vmem:[#allocation3 + $0x8] sm:$0xff] %vm583, %v785
      %790 = vst.msk [vmem:[#allocation3 + $0x10] sm:$0xff] %vm583, %v786
      %791 = vst.msk [vmem:[#allocation3 + $0x18] sm:$0xff] %vm583, %v787
      %p792 = scmp.eq.s32.totalorder %s24, 3
      // Predicated region
      $region57: #{encoder_forward.14} parent=51 // pred_check
        %p793 = pneg %p792
      $region58: #{encoder_forward.14} parent=51 // pred_check_branch
        %795 = sbr.rel (%p793) target = $region60
      $region59: #{encoder_forward.14} parent=51 // pred_region
        %v796 = vld [vmem:[#allocation3] sm:$0xff]
        %v797 = vld [vmem:[#allocation3 + $0x8] sm:$0xff]
        %v798 = vld [vmem:[#allocation3 + $0x10] sm:$0xff]
        %v799 = vld [vmem:[#allocation3 + $0x18] sm:$0xff]
        %v800 = vld [vmem:[%s381] sm:$0xff]
        %v801 = vld [vmem:[%s381 + $0x8] sm:$0xff]
        %v802 = vld [vmem:[%s381 + $0x10] sm:$0xff]
        %v803 = vld [vmem:[%s381 + $0x18] sm:$0xff]
        %v804 = vadd.f32 %v796, %v800
        %v805 = vadd.f32 %v797, %v801
        %v806 = vadd.f32 %v798, %v802
        %v807 = vadd.f32 %v799, %v803
        %808 = vst.msk [vmem:[%s409] sm:$0xff] %vm583, %v804
        %809 = vst.msk [vmem:[%s409 + $0x8] sm:$0xff] %vm583, %v805
        %810 = vst.msk [vmem:[%s409 + $0x10] sm:$0xff] %vm583, %v806
        %811 = vst.msk [vmem:[%s409 + $0x18] sm:$0xff] %vm583, %v807
      $region60: #{encoder_forward.14} parent=51 // pred_fallthru
        _
      %s812 = smul.u32 4, %s23
      %p813 = scmp.lt.s32.totalorder %s812, 3
      %s814 = scalar_select %p813, %s812, 3
      %s815 = smul.addr %s814, 8
      %s816 = scalar_lea.vmem %s8, %s815
      // Predicated region
      $region61: #{encoder_forward.14} parent=51 // pred_check
        %p817 = pneg %p247
      $region62: #{encoder_forward.14} parent=51 // pred_check_branch
        %819 = sbr.rel (%p817) target = $region64
      $region63: #{encoder_forward.14} parent=51 // pred_region
        %s820 = smul.u32 4, %s23
      $region64: #{encoder_forward.14} parent=51 // pred_fallthru
        _
      // Predicated region
      $region65: #{encoder_forward.14} parent=51 // pred_check
        %p821 = pneg %p247
      $region66: #{encoder_forward.14} parent=51 // pred_check_branch
        %823 = sbr.rel (%p821) target = $region68
      $region67: #{encoder_forward.14} parent=51 // pred_region
        %s824 = smul.u32 4, %s23
        %p825 = scmp.lt.s32.totalorder %s824, 3
        %s826 = scalar_select %p825, %s824, 3
        %s827 = smul.addr %s826, 8
        %s828 = scalar_lea.vmem %s8, %s827
      $region68: #{encoder_forward.14} parent=51 // pred_fallthru
        _
    $region52: #{encoder_forward.14} parent=5 // pred_fallthru
      _
    %p829 = scmp.le.s32.totalorder 2, %s14
    // Predicated region
    $region69: #{encoder_forward.14} parent=5 // pred_check
      %p830 = pneg %p829
    $region70: #{encoder_forward.14} parent=5 // pred_check_branch
      %832 = sbr.rel (%p830) target = $region72
    $region71: #{encoder_forward.14} parent=5 // pred_region
      %s833 = ssub.s32 %s14, 2
    $region72: #{encoder_forward.14} parent=5 // pred_fallthru
      _
  $region6: #{encoder_forward.14} parent=0 // loop_footer
    %s18 = sadd.s32 1, %s14
  $region7: #{encoder_forward.14} parent=0 // loop_footer_branch
    %13 = sbr.rel target = $region3
  $region8: #{encoder_forward.14} parent=0 // loop_exit
    _

// kernel: encoder_forward.19
$region0: #{encoder_forward.19}
  #allocation0 [shape = 'u32[]', space=smem, size = 0x4, offset = 0x4, fixed_abs, tag = 'smem constant byte address 0x4 - core index']
  #allocation1 [shape = 'u32[144,128]{1,0:T(1,128)}', space=vmem, size = 0x12000, scoped, tag = 'internal scratch']
  #allocation2 [shape = 'bf16[32,32]{1,0:T(8,128)(2,1)}', space=vmem, size = 0x2000, scoped, tag = 'scratch operand']
  #allocation3 [shape = 'f32[32,32]{1,0:T(8,128)}', space=vmem, size = 0x4000, scoped, tag = 'scratch operand']
  %s0 = inlined_call_operand.vmem [shape: f32[32,32], index: 0, kind: input, shape index: {}]
  %s1 = inlined_call_operand.vmem [shape: f32[1,32], index: 1, kind: input, shape index: {}]
  %s2 = inlined_call_operand.vmem [shape: f32[1,32], index: 2, kind: input, shape index: {}]
  %s3 = inlined_call_operand.vmem [shape: f32[32,4], index: 3, kind: input, shape index: {}]
  %s4 = inlined_call_operand.vmem [shape: bf16[4,32,64], index: 4, kind: input, shape index: {}]
  %s5 = inlined_call_operand.vmem [shape: f32[4,1,64], index: 5, kind: input, shape index: {}]
  %s6 = inlined_call_operand.vmem [shape: bf16[4,64,32], index: 6, kind: input, shape index: {}]
  %s7 = inlined_call_operand.vmem [shape: f32[4,1,32], index: 7, kind: input, shape index: {}]
  %s8 = inlined_call_operand.hbm [shape: f32[32,32], index: 8, kind: output, shape index: {}]
  %s9 = sld [smem:[#allocation0]]
  $region73: #{encoder_forward.19} parent=0
    _
  %s11 = ssub.s32 1, %s9
  %s12 = scalar_select 0, %s11, %s9
  $region1: #{encoder_forward.19} parent=0
    #allocation4 [shape = 'u8[16384]{0}', space=vmem, size = 0x4000, scoped, tag = 'output window, operand 0, single buffered']
    #allocation5 [shape = 's32[2]{0}', space=sflag, size = 0x8, scoped, tag = 'scoped memory for encoder_forward.19']
    %13 = vsyncpa [#allocation5], 0
    loop: start=0, step=1, limit=6
    $region2: #{encoder_forward.19} parent=1 // loop_pre_header
      _
    $region3: #{encoder_forward.19} parent=1 // loop_header
      %s15 = sphi 0, %s19
      %p16 = scmp.ge.s32.totalorder %s15, 6
      %s22 = sphi 0, %s34
      %s23 = sphi 0, %s30
      %s24 = sphi 0, %s22
      %s25 = sphi 0, %s23
      %s26 = sphi 0, %s24
      %s27 = sphi 0, %s25
      %s37 = sphi 0, %s39
      %s40 = sphi 0, %s37
      %s41 = sphi 0, %s40
      %s57 = sphi 0, %s41
      %s61 = sphi 0, %s61
      %s63 = sphi 0, %s61
      %s64 = sphi 0, %s63
      %s78 = sphi 0, %s64
      %s82 = sphi 0, %s82
      %s84 = sphi 0, %s82
      %s85 = sphi 0, %s84
      %s99 = sphi 0, %s85
      %s105 = sphi 0, %s107
      %s108 = sphi 0, %s105
      %s109 = sphi 0, %s108
      %s125 = sphi 0, %s109
      %s131 = sphi 0, %s133
      %s134 = sphi 0, %s131
      %s135 = sphi 0, %s134
      %s151 = sphi 0, %s135
      %s157 = sphi 0, %s159
      %s160 = sphi 0, %s157
      %s161 = sphi 0, %s160
      %s177 = sphi 0, %s161
      %s183 = sphi 0, %s185
      %s186 = sphi 0, %s183
      %s187 = sphi 0, %s186
      %s203 = sphi 0, %s187
      %s209 = sphi 0, %s211
      %s212 = sphi 0, %s209
      %s213 = sphi 0, %s212
      %s229 = sphi 0, %s213
      %s235 = sphi 0, %s237
      %s238 = sphi 0, %s235
      %s239 = sphi 0, %s238
      %s255 = sphi 0, %s239
    $region4: #{encoder_forward.19} parent=1 // loop_header_branch
      %18 = sbr.rel (%p16) target = $region8
    $region5: #{encoder_forward.19} parent=1 // loop_body
      %s20 = ssub.s32 %s15, 1
      %s21 = ssub.s32 %s15, 2
      %s28 = sadd.s32 1, %s23
      %p29 = scmp.ge.s32.totalorder %s28, 4
      %s30 = scalar_select %p29, 0, %s28
      %s31 = sadd.s32 1, %s22
      %s32 = scalar_select %p29, %s31, %s22
      %p33 = scmp.ge.s32.totalorder %s32, 1
      %s34 = scalar_select %p33, 0, %s32
      %s35 = ssub.s32 %s22, %s34
      %p36 = scmp.eq.s32.totalorder %s35, 0
      %s38 = sadd.s32 %s37, 1
      %s39 = scalar_select %p36, %s37, %s38
      %p42 = pneg %p36
      %p43 = scmp.eq.s32.totalorder %s15, 3
      %p44 = por %p42, %p43
      %p45 = scmp.ne.s32.totalorder %s37, %s40
      %p46 = scmp.eq.s32.totalorder %s15, 0
      %p47 = por %p45, %p46
      %p48 = scmp.ne.s32.totalorder %s37, %s40
      %p49 = scmp.eq.s32.totalorder %s20, 3
      %p50 = por %p48, %p49
      %p51 = scmp.ne.s32.totalorder %s40, %s41
      %p52 = scmp.eq.s32.totalorder %s20, 0
      %p53 = por %p51, %p52
      %p54 = scmp.ne.s32.totalorder %s40, %s41
      %p55 = scmp.eq.s32.totalorder %s21, 3
      %p56 = por %p54, %p55
      %p58 = scmp.ne.s32.totalorder %s41, %s57
      %p59 = scmp.eq.s32.totalorder %s21, 0
      %p60 = por %p58, %p59
      %s62 = sadd.s32 %s61, 1
      %p65 = scmp.eq.s32.totalorder %s15, 3
      %p66 = scmp.ne.s32.totalorder %s61, %s63
      %p67 = scmp.eq.s32.totalorder %s15, 0
      %p68 = por %p66, %p67
      %p69 = scmp.ne.s32.totalorder %s61, %s63
      %p70 = scmp.eq.s32.totalorder %s20, 3
      %p71 = por %p69, %p70
      %p72 = scmp.ne.s32.totalorder %s63, %s64
      %p73 = scmp.eq.s32.totalorder %s20, 0
      %p74 = por %p72, %p73
      %p75 = scmp.ne.s32.totalorder %s63, %s64
      %p76 = scmp.eq.s32.totalorder %s21, 3
      %p77 = por %p75, %p76
      %p79 = scmp.ne.s32.totalorder %s64, %s78
      %p80 = scmp.eq.s32.totalorder %s21, 0
      %p81 = por %p79, %p80
      %s83 = sadd.s32 %s82, 1
      %p86 = scmp.eq.s32.totalorder %s15, 3
      %p87 = scmp.ne.s32.totalorder %s82, %s84
      %p88 = scmp.eq.s32.totalorder %s15, 0
      %p89 = por %p87, %p88
      %p90 = scmp.ne.s32.totalorder %s82, %s84
      %p91 = scmp.eq.s32.totalorder %s20, 3
      %p92 = por %p90, %p91
      %p93 = scmp.ne.s32.totalorder %s84, %s85
      %p94 = scmp.eq.s32.totalorder %s20, 0
      %p95 = por %p93, %p94
      %p96 = scmp.ne.s32.totalorder %s84, %s85
      %p97 = scmp.eq.s32.totalorder %s21, 3
      %p98 = por %p96, %p97
      %p100 = scmp.ne.s32.totalorder %s85, %s99
      %p101 = scmp.eq.s32.totalorder %s21, 0
      %p102 = por %p100, %p101
      %s103 = ssub.s32 %s22, %s34
      %p104 = scmp.eq.s32.totalorder %s103, 0
      %s106 = sadd.s32 %s105, 1
      %s107 = scalar_select %p104, %s105, %s106
      %p110 = pneg %p104
      %p111 = scmp.eq.s32.totalorder %s15, 3
      %p112 = por %p110, %p111
      %p113 = scmp.ne.s32.totalorder %s105, %s108
      %p114 = scmp.eq.s32.totalorder %s15, 0
      %p115 = por %p113, %p114
      %p116 = scmp.ne.s32.totalorder %s105, %s108
      %p117 = scmp.eq.s32.totalorder %s20, 3
      %p118 = por %p116, %p117
      %p119 = scmp.ne.s32.totalorder %s108, %s109
      %p120 = scmp.eq.s32.totalorder %s20, 0
      %p121 = por %p119, %p120
      %p122 = scmp.ne.s32.totalorder %s108, %s109
      %p123 = scmp.eq.s32.totalorder %s21, 3
      %p124 = por %p122, %p123
      %p126 = scmp.ne.s32.totalorder %s109, %s125
      %p127 = scmp.eq.s32.totalorder %s21, 0
      %p128 = por %p126, %p127
      %s129 = ssub.s32 %s23, %s30
      %p130 = scmp.eq.s32.totalorder %s129, 0
      %s132 = sadd.s32 %s131, 1
      %s133 = scalar_select %p130, %s131, %s132
      %p136 = pneg %p130
      %p137 = scmp.eq.s32.totalorder %s15, 3
      %p138 = por %p136, %p137
      %p139 = scmp.ne.s32.totalorder %s131, %s134
      %p140 = scmp.eq.s32.totalorder %s15, 0
      %p141 = por %p139, %p140
      %p142 = scmp.ne.s32.totalorder %s131, %s134
      %p143 = scmp.eq.s32.totalorder %s20, 3
      %p144 = por %p142, %p143
      %p145 = scmp.ne.s32.totalorder %s134, %s135
      %p146 = scmp.eq.s32.totalorder %s20, 0
      %p147 = por %p145, %p146
      %p148 = scmp.ne.s32.totalorder %s134, %s135
      %p149 = scmp.eq.s32.totalorder %s21, 3
      %p150 = por %p148, %p149
      %p152 = scmp.ne.s32.totalorder %s135, %s151
      %p153 = scmp.eq.s32.totalorder %s21, 0
      %p154 = por %p152, %p153
      %s155 = ssub.s32 %s23, %s30
      %p156 = scmp.eq.s32.totalorder %s155, 0
      %s158 = sadd.s32 %s157, 1
      %s159 = scalar_select %p156, %s157, %s158
      %p162 = pneg %p156
      %p163 = scmp.eq.s32.totalorder %s15, 3
      %p164 = por %p162, %p163
      %p165 = scmp.ne.s32.totalorder %s157, %s160
      %p166 = scmp.eq.s32.totalorder %s15, 0
      %p167 = por %p165, %p166
      %p168 = scmp.ne.s32.totalorder %s157, %s160
      %p169 = scmp.eq.s32.totalorder %s20, 3
      %p170 = por %p168, %p169
      %p171 = scmp.ne.s32.totalorder %s160, %s161
      %p172 = scmp.eq.s32.totalorder %s20, 0
      %p173 = por %p171, %p172
      %p174 = scmp.ne.s32.totalorder %s160, %s161
      %p175 = scmp.eq.s32.totalorder %s21, 3
      %p176 = por %p174, %p175
      %p178 = scmp.ne.s32.totalorder %s161, %s177
      %p179 = scmp.eq.s32.totalorder %s21, 0
      %p180 = por %p178, %p179
      %s181 = ssub.s32 %s23, %s30
      %p182 = scmp.eq.s32.totalorder %s181, 0
      %s184 = sadd.s32 %s183, 1
      %s185 = scalar_select %p182, %s183, %s184
      %p188 = pneg %p182
      %p189 = scmp.eq.s32.totalorder %s15, 3
      %p190 = por %p188, %p189
      %p191 = scmp.ne.s32.totalorder %s183, %s186
      %p192 = scmp.eq.s32.totalorder %s15, 0
      %p193 = por %p191, %p192
      %p194 = scmp.ne.s32.totalorder %s183, %s186
      %p195 = scmp.eq.s32.totalorder %s20, 3
      %p196 = por %p194, %p195
      %p197 = scmp.ne.s32.totalorder %s186, %s187
      %p198 = scmp.eq.s32.totalorder %s20, 0
      %p199 = por %p197, %p198
      %p200 = scmp.ne.s32.totalorder %s186, %s187
      %p201 = scmp.eq.s32.totalorder %s21, 3
      %p202 = por %p200, %p201
      %p204 = scmp.ne.s32.totalorder %s187, %s203
      %p205 = scmp.eq.s32.totalorder %s21, 0
      %p206 = por %p204, %p205
      %s207 = ssub.s32 %s23, %s30
      %p208 = scmp.eq.s32.totalorder %s207, 0
      %s210 = sadd.s32 %s209, 1
      %s211 = scalar_select %p208, %s209, %s210
      %p214 = pneg %p208
      %p215 = scmp.eq.s32.totalorder %s15, 3
      %p216 = por %p214, %p215
      %p217 = scmp.ne.s32.totalorder %s209, %s212
      %p218 = scmp.eq.s32.totalorder %s15, 0
      %p219 = por %p217, %p218
      %p220 = scmp.ne.s32.totalorder %s209, %s212
      %p221 = scmp.eq.s32.totalorder %s20, 3
      %p222 = por %p220, %p221
      %p223 = scmp.ne.s32.totalorder %s212, %s213
      %p224 = scmp.eq.s32.totalorder %s20, 0
      %p225 = por %p223, %p224
      %p226 = scmp.ne.s32.totalorder %s212, %s213
      %p227 = scmp.eq.s32.totalorder %s21, 3
      %p228 = por %p226, %p227
      %p230 = scmp.ne.s32.totalorder %s213, %s229
      %p231 = scmp.eq.s32.totalorder %s21, 0
      %p232 = por %p230, %p231
      %s233 = ssub.s32 %s22, %s34
      %p234 = scmp.eq.s32.totalorder %s233, 0
      %s236 = sadd.s32 %s235, 1
      %s237 = scalar_select %p234, %s235, %s236
      %p240 = pneg %p234
      %p241 = scmp.eq.s32.totalorder %s15, 3
      %p242 = por %p240, %p241
      %p243 = scmp.ne.s32.totalorder %s235, %s238
      %p244 = scmp.eq.s32.totalorder %s15, 0
      %p245 = por %p243, %p244
      %p246 = scmp.ne.s32.totalorder %s235, %s238
      %p247 = scmp.eq.s32.totalorder %s20, 3
      %p248 = por %p246, %p247
      %p249 = scmp.ne.s32.totalorder %s238, %s239
      %p250 = scmp.eq.s32.totalorder %s20, 0
      %p251 = por %p249, %p250
      %p252 = scmp.ne.s32.totalorder %s238, %s239
      %p253 = scmp.eq.s32.totalorder %s21, 3
      %p254 = por %p252, %p253
      %p256 = scmp.ne.s32.totalorder %s239, %s255
      %p257 = scmp.eq.s32.totalorder %s21, 0
      %p258 = por %p256, %p257
      %p259 = scmp.le.s32.totalorder 1, %s15
      %p260 = scmp.lt.s32.totalorder %s15, 5
      %p261 = pnand %p259, %p260
      %p262 = pneg %p261
      // Predicated region
      $region9: #{encoder_forward.19} parent=5 // pred_check
        _
      $region10: #{encoder_forward.19} parent=5 // pred_check_branch
        %264 = sbr.rel (%p261) target = $region12
      $region11: #{encoder_forward.19} parent=5 // pred_region
        %s265 = ssub.s32 %s15, 1
        // Predicated region
        $region13: #{encoder_forward.19} parent=11 // pred_check
          %p266 = pneg %p53
        $region14: #{encoder_forward.19} parent=11 // pred_check_branch
          %268 = sbr.rel (%p266) target = $region16
        $region15: #{encoder_forward.19} parent=11 // pred_region
          %s269 = smul.u32 4, %s24
          %p270 = scmp.lt.s32.totalorder %s269, 3
          %s271 = scalar_select %p270, %s269, 3
          %s272 = smul.addr %s271, 8
          %s273 = scalar_lea.vmem %s0, %s272
          %s274 = smul.u32 4, %s24
        $region16: #{encoder_forward.19} parent=11 // pred_fallthru
          _
        // Predicated region
        $region17: #{encoder_forward.19} parent=11 // pred_check
          %p275 = pneg %p74
        $region18: #{encoder_forward.19} parent=11 // pred_check_branch
          %277 = sbr.rel (%p275) target = $region20
        $region19: #{encoder_forward.19} parent=11 // pred_region
          _
        $region20: #{encoder_forward.19} parent=11 // pred_fallthru
          _
        // Predicated region
        $region21: #{encoder_forward.19} parent=11 // pred_check
          %p278 = pneg %p95
        $region22: #{encoder_forward.19} parent=11 // pred_check_branch
          %280 = sbr.rel (%p278) target = $region24
        $region23: #{encoder_forward.19} parent=11 // pred_region
          _
        $region24: #{encoder_forward.19} parent=11 // pred_fallthru
          _
        // Predicated region
        $region25: #{encoder_forward.19} parent=11 // pred_check
          %p281 = pneg %p121
        $region26: #{encoder_forward.19} parent=11 // pred_check_branch
          %283 = sbr.rel (%p281) target = $region28
        $region27: #{encoder_forward.19} parent=11 // pred_region
          %s284 = smul.u32 4, %s24
          %p285 = scmp.lt.s32.totalorder %s284, 3
          %s286 = scalar_select %p285, %s284, 3
          %s287 = smul.addr %s286, 8
          %s288 = scalar_lea.vmem %s3, %s287
          %s289 = smul.u32 4, %s24
        $region28: #{encoder_forward.19} parent=11 // pred_fallthru
          _
      $region12: #{encoder_forward.19} parent=5 // pred_fallthru
        _
      %p290 = scmp.lt.s32.totalorder %s15, 4
      // Predicated region
      $region29: #{encoder_forward.19} parent=5 // pred_check
        %p291 = pneg %p290
      $region30: #{encoder_forward.19} parent=5 // pred_check_branch
        %293 = sbr.rel (%p291) target = $region32
      $region31: #{encoder_forward.19} parent=5 // pred_region
        // Predicated region
        $region33: #{encoder_forward.19} parent=31 // pred_check
          %p294 = pneg %p141
        $region34: #{encoder_forward.19} parent=31 // pred_check_branch
          %296 = sbr.rel (%p294) target = $region36
        $region35: #{encoder_forward.19} parent=31 // pred_region
          %p297 = scmp.lt.s32.totalorder %s23, 3
          %s298 = scalar_select %p297, %s23, 3
          %s299 = smul.addr %s298, 4
          %s300 = smul.addr %s299, 4
          %s301 = scalar_lea.vmem %s4, %s300
        $region36: #{encoder_forward.19} parent=31 // pred_fallthru
          _
        // Predicated region
        $region37: #{encoder_forward.19} parent=31 // pred_check
          %p302 = pneg %p167
        $region38: #{encoder_forward.19} parent=31 // pred_check_branch
          %304 = sbr.rel (%p302) target = $region40
        $region39: #{encoder_forward.19} parent=31 // pred_region
          %p305 = scmp.lt.s32.totalorder %s23, 3
          %s306 = scalar_select %p305, %s23, 3
          %s307 = scalar_lea.vmem %s5, %s306
        $region40: #{encoder_forward.19} parent=31 // pred_fallthru
          _
        // Predicated region
        $region41: #{encoder_forward.19} parent=31 // pred_check
          %p308 = pneg %p193
        $region42: #{encoder_forward.19} parent=31 // pred_check_branch
          %310 = sbr.rel (%p308) target = $region44
        $region43: #{encoder_forward.19} parent=31 // pred_region
          %p311 = scmp.lt.s32.totalorder %s23, 3
          %s312 = scalar_select %p311, %s23, 3
          %s313 = smul.addr %s312, 8
          %s314 = smul.addr %s313, 4
          %s315 = scalar_lea.vmem %s6, %s314
        $region44: #{encoder_forward.19} parent=31 // pred_fallthru
          _
        // Predicated region
        $region45: #{encoder_forward.19} parent=31 // pred_check
          %p316 = pneg %p219
        $region46: #{encoder_forward.19} parent=31 // pred_check_branch
          %318 = sbr.rel (%p316) target = $region48
        $region47: #{encoder_forward.19} parent=31 // pred_region
          %p319 = scmp.lt.s32.totalorder %s23, 3
          %s320 = scalar_select %p319, %s23, 3
          %s321 = scalar_lea.vmem %s7, %s320
        $region48: #{encoder_forward.19} parent=31 // pred_fallthru
          _
      $region32: #{encoder_forward.19} parent=5 // pred_fallthru
        _
      %p322 = scmp.le.s32.totalorder 1, %s15
      %p323 = scmp.lt.s32.totalorder %s15, 5
      %p324 = pnand %p322, %p323
      %p325 = pneg %p324
      // Predicated region
      $region49: #{encoder_forward.19} parent=5 // pred_check
        _
      $region50: #{encoder_forward.19} parent=5 // pred_check_branch
        %327 = sbr.rel (%p324) target = $region52
      $region51: #{encoder_forward.19} parent=5 // pred_region
        %s328 = ssub.s32 %s15, 1
        %s329 = smul.u32 4, %s24
        %p330 = scmp.lt.s32.totalorder %s329, 3
        %s331 = scalar_select %p330, %s329, 3
        %s332 = smul.addr %s331, 8
        %s333 = scalar_lea.vmem %s0, %s332
        %p334 = pneg %p53
        %p335 = pneg %p50
        %p336 = pneg %p74
        %p337 = pneg %p71
        %p338 = pneg %p95
        %p339 = pneg %p92
        %s340 = smul.u32 4, %s24
        %p341 = scmp.lt.s32.totalorder %s340, 3
        %s342 = scalar_select %p341, %s340, 3
        %s343 = smul.addr %s342, 8
        %s344 = scalar_lea.vmem %s3, %s343
        %p345 = pneg %p121
        %p346 = pneg %p118
        %p347 = scmp.lt.s32.totalorder %s25, 3
        %s348 = scalar_select %p347, %s25, 3
        %s349 = smul.addr %s348, 4
        %s350 = smul.addr %s349, 4
        %s351 = scalar_lea.vmem %s4, %s350
        %p352 = pneg %p147
        %p353 = pneg %p144
        %p354 = scmp.lt.s32.totalorder %s25, 3
        %s355 = scalar_select %p354, %s25, 3
        %s356 = scalar_lea.vmem %s5, %s355
        %p357 = pneg %p173
        %p358 = pneg %p170
        %p359 = scmp.lt.s32.totalorder %s25, 3
        %s360 = scalar_select %p359, %s25, 3
        %s361 = smul.addr %s360, 8
        %s362 = smul.addr %s361, 4
        %s363 = scalar_lea.vmem %s6, %s362
        %p364 = pneg %p199
        %p365 = pneg %p196
        %p366 = scmp.lt.s32.totalorder %s25, 3
        %s367 = scalar_select %p366, %s25, 3
        %s368 = scalar_lea.vmem %s7, %s367
        %p369 = pneg %p225
        %p370 = pneg %p222
        %p371 = pneg %p251
        %p372 = pneg %p248
        %s373 = smul.u32 4, %s24
        %p374 = scmp.lt.s32.totalorder %s373, 3
        %s375 = scalar_select %p374, %s373, 3
        %s376 = smul.addr %s375, 8
        %s377 = scalar_lea.vmem %s0, %s376
        %s378 = smul.u32 4, %s24
        %s379 = smul.u32 4, %s24
        %p380 = scmp.lt.s32.totalorder %s379, 3
        %s381 = scalar_select %p380, %s379, 3
        %s382 = smul.addr %s381, 8
        %s383 = scalar_lea.vmem %s3, %s382
        %s384 = smul.u32 4, %s24
        %p385 = scmp.lt.s32.totalorder %s25, 3
        %s386 = scalar_select %p385, %s25, 3
        %s387 = smul.addr %s386, 4
        %s388 = smul.addr %s387, 4
        %s389 = scalar_lea.vmem %s4, %s388
        %p390 = scmp.lt.s32.totalorder %s25, 3
        %s391 = scalar_select %p390, %s25, 3
        %s392 = scalar_lea.vmem %s5, %s391
        %p393 = scmp.lt.s32.totalorder %s25, 3
        %s394 = scalar_select %p393, %s25, 3
        %s395 = smul.addr %s394, 8
        %s396 = smul.addr %s395, 4
        %s397 = scalar_lea.vmem %s6, %s396
        %p398 = scmp.lt.s32.totalorder %s25, 3
        %s399 = scalar_select %p398, %s25, 3
        %s400 = scalar_lea.vmem %s7, %s399
        %s401 = smul.u32 4, %s24
        %p403 = scmp.eq.s32.totalorder %s25, 0
        // Predicated region
        $region53: #{encoder_forward.19} parent=51 // pred_check
          %p404 = pneg %p403
        $region54: #{encoder_forward.19} parent=51 // pred_check_branch
          %406 = sbr.rel (%p404) target = $region56
        $region55: #{encoder_forward.19} parent=51 // pred_region
          %v407 = vld [vmem:[%s377] sm:$0xff]
          %v408 = vld [vmem:[%s377 + $0x8] sm:$0xff]
          %v409 = vld [vmem:[%s377 + $0x10] sm:$0xff]
          %v410 = vld [vmem:[%s377 + $0x18] sm:$0xff]
          %vm411 = vcmask 261120
          %v412 = vsel %vm411, %v407, 0.0
          %413 = vadd.xlane.f32.xlu0 %v412
          %v414 = vpop.xlane.xlu0 %413
          %v415 = vsel %vm411, %v408, 0.0
          %416 = vadd.xlane.f32.xlu0 %v415
          %v417 = vpop.xlane.xlu0 %416
          %v418 = vsel %vm411, %v409, 0.0
          %419 = vadd.xlane.f32.xlu0 %v418
          %v420 = vpop.xlane.xlu0 %419
          %v421 = vsel %vm411, %v410, 0.0
          %422 = vadd.xlane.f32.xlu0 %v421
          %v423 = vpop.xlane.xlu0 %422
          %v424 = vrcp.pop 32.0
          %v425 = vmul.f32 %v414, %v424
          %v426 = vmul.f32 %v417, %v424
          %v427 = vmul.f32 %v420, %v424
          %v428 = vmul.f32 %v423, %v424
          %v429 = vsub.f32 %v407, %v425
          %v430 = vsub.f32 %v408, %v426
          %v431 = vsub.f32 %v409, %v427
          %v432 = vsub.f32 %v410, %v428
          %v433 = vmul.f32 %v429, %v429
          %v434 = vmul.f32 %v430, %v430
          %v435 = vmul.f32 %v431, %v431
          %v436 = vmul.f32 %v432, %v432
          %v437 = vsel %vm411, %v433, 0.0
          %438 = vadd.xlane.f32.xlu0 %v437
          %v439 = vpop.xlane.xlu0 %438
          %v440 = vsel %vm411, %v434, 0.0
          %441 = vadd.xlane.f32.xlu0 %v440
          %v442 = vpop.xlane.xlu0 %441
          %v443 = vsel %vm411, %v435, 0.0
          %444 = vadd.xlane.f32.xlu0 %v443
          %v445 = vpop.xlane.xlu0 %444
          %v446 = vsel %vm411, %v436, 0.0
          %447 = vadd.xlane.f32.xlu0 %v446
          %v448 = vpop.xlane.xlu0 %447
          %v449 = vmul.f32 %v439, %v424
          %v450 = vmul.f32 %v442, %v424
          %v451 = vmul.f32 %v445, %v424
          %v452 = vmul.f32 %v448, %v424
          %v453 = vadd.f32 %v449, 1e-05
          %v454 = vadd.f32 %v450, 1e-05
          %v455 = vadd.f32 %v451, 1e-05
          %v456 = vadd.f32 %v452, 1e-05
          %v457 = vrsqrt.pop %v453
          %v458 = vrsqrt.pop %v454
          %v459 = vrsqrt.pop %v455
          %v460 = vrsqrt.pop %v456
          %v461 = vmul.f32 %v429, %v457
          %v462 = vmul.f32 %v430, %v458
          %v463 = vmul.f32 %v431, %v459
          %v464 = vmul.f32 %v432, %v460
          %v465 = vld [vmem:[%s1] sm:$0x1]
          %v467 = vlaneseq
          %v468 = vshrl.u32 %v467, 7
          %v469 = vsub.s32 0, %v468
          %v470 = vrot.slane %v465, %v469
          %v472 = vmul.f32 %v461, %v470
          %v473 = vmul.f32 %v462, %v470
          %v474 = vmul.f32 %v463, %v470
          %v475 = vmul.f32 %v464, %v470
          %v476 = vld [vmem:[%s2] sm:$0x1]
          %v478 = vlaneseq
          %v479 = vshrl.u32 %v478, 7
          %v480 = vsub.s32 0, %v479
          %v481 = vrot.slane %v476, %v480
          %v483 = vadd.f32 %v472, %v481
          %v484 = vadd.f32 %v473, %v481
          %v485 = vadd.f32 %v474, %v481
          %v486 = vadd.f32 %v475, %v481
          %v487 = vpack.c.bf16 %v484, %v483
          %v488 = vpack.c.bf16 %v486, %v485
          %v491 = vunpack.c.l.b16 %v487
          %v492 = vunpack.c.h.b16 %v487
          %v493 = vunpack.c.l.b16 %v488
          %v494 = vunpack.c.h.b16 %v488
          %v495 = vpack.c.b16 %v491, %v491
          %v496 = vpack.c.b16 %v492, %v492
          %v497 = vpack.c.b16 %v493, %v493
          %v498 = vpack.c.b16 %v494, %v494
          %vm503 = vcmask 257024
          %504 = vst.msk [vmem:[#allocation2] sm:$0xf] %vm503, %v495
          %505 = vst.msk [vmem:[#allocation2 + $0x4] sm:$0xf] %vm503, %v496
          %506 = vst.msk [vmem:[#allocation2 + $0x8] sm:$0xf] %vm503, %v497
          %507 = vst.msk [vmem:[#allocation2 + $0xc] sm:$0xf] %vm503, %v498
          %508 = vst.msk [vmem:[#allocation3] sm:$0xff] %vm411, 0.0
          %509 = vst.msk [vmem:[#allocation3 + $0x8] sm:$0xff] %vm411, 0.0
          %510 = vst.msk [vmem:[#allocation3 + $0x10] sm:$0xff] %vm411, 0.0
          %511 = vst.msk [vmem:[#allocation3 + $0x18] sm:$0xff] %vm411, 0.0
        $region56: #{encoder_forward.19} parent=51 // pred_fallthru
          _
        %v512 = vld [vmem:[%s383] sm:$0xff]
        %v513 = vld [vmem:[%s383 + $0x8] sm:$0xff]
        %v514 = vld [vmem:[%s383 + $0x10] sm:$0xff]
        %v515 = vld [vmem:[%s383 + $0x18] sm:$0xff]
        %v516 = vlaneseq
        %v517 = vand.u32 %v516, 127
        %v518 = vstv %s25
        %vm519 = vcmp.eq.s32.totalorder %v517, %v518
        %v520 = vsel %vm519, %v512, 0.0
        %v521 = vsel %vm519, %v513, 0.0
        %v522 = vsel %vm519, %v514, 0.0
        %v523 = vsel %vm519, %v515, 0.0
        %vm524 = vcmask 31744
        %v525 = vsel %vm524, %v520, 0.0
        %526 = vadd.xlane.f32.xlu0 %v525
        %v527 = vpop.xlane.xlu0 %526
        %v528 = vsel %vm524, %v521, 0.0
        %529 = vadd.xlane.f32.xlu0 %v528
        %v530 = vpop.xlane.xlu0 %529
        %v531 = vsel %vm524, %v522, 0.0
        %532 = vadd.xlane.f32.xlu0 %v531
        %v533 = vpop.xlane.xlu0 %532
        %v534 = vsel %vm524, %v523, 0.0
        %535 = vadd.xlane.f32.xlu0 %v534
        %v536 = vpop.xlane.xlu0 %535
        %v537 = vld [vmem:[#allocation2] sm:$0xf]
        %v538 = vld [vmem:[#allocation2 + $0x4] sm:$0xf]
        %v539 = vld [vmem:[#allocation2 + $0x8] sm:$0xf]
        %v540 = vld [vmem:[#allocation2 + $0xc] sm:$0xf]
        %v541 = vld [vmem:[%s389] sm:$0xf]
        %v542 = vld [vmem:[%s389 + $0x4] sm:$0xf]
        %v543 = vld [vmem:[%s389 + $0x8] sm:$0xf]
        %v544 = vld [vmem:[%s389 + $0xc] sm:$0xf]
        %v545 = vld [vmem:[%s392] sm:$0x1]
        %v547 = vlaneseq
        %v548 = vshrl.u32 %v547, 7
        %v549 = vsub.s32 0, %v548
        %v550 = vrot.slane %v545, %v549
        %v556 = vunpack.c.l.b16 %v537
        %v557 = vunpack.c.l.b16 %v538
        %v558 = vunpack.c.l.b16 %v539
        %v559 = vunpack.c.l.b16 %v540
        %v560 = vpack.c.b16 %v557, %v556
        %v561 = vpack.c.b16 %v559, %v558
        %v566 = vunpack.c.l.b16 %v541
        %v567 = vunpack.c.l.b16 %v542
        %v568 = vunpack.c.l.b16 %v543
        %v569 = vunpack.c.l.b16 %v544
        %v570 = vpack.c.b16 %v567, %v566
        %v571 = vpack.c.b16 %v569, %v568
        %vm574 = vcmask 261120
        %v576 = vsel %vm574, %v560, 0
        %v579 = vsel %vm574, %v561, 0
        %581 = vmatprep.subr.bf16.mxu0 0
        %582 = vmatpush1.bf16.msra.mxu0 0
        %583 = vmatprep.subr.bf16.mxu0 0
        %584 = vmatpush1.bf16.msra.mxu0 0
        %585 = vmatprep.subr.bf16.mxu0 0
        %586 = vmatpush1.bf16.msra.mxu0 0
        %587 = vmatprep.subr.bf16.mxu0 0
        %588 = vmatpush1.bf16.msra.mxu0 0
        %589 = vmatprep.subr.bf16.mxu0 0
        %590 = vmatpush1.bf16.msra.mxu0 0
        %591 = vmatprep.subr.bf16.mxu0 0
        %592 = vmatpush1.bf16.msra.mxu0 0
        %593 = vmatprep.subr.bf16.mxu0 0
        %594 = vmatpush1.bf16.msra.mxu0 %v571
        %595 = vmatprep.subr.bf16.mxu0 0
        %596 = vmatpush1.bf16.msra.mxu0 %v570
        %597 = vmatprep.subr.bf16.mxu0 0
        %598 = vmatpush2.bf16.msra.mxu0 0
        %599 = vmatprep.subr.bf16.mxu0 0
        %600 = vmatpush2.bf16.msra.mxu0 0
        %601 = vmatprep.subr.bf16.mxu0 0
        %602 = vmatpush2.bf16.msra.mxu0 0
        %603 = vmatprep.subr.bf16.mxu0 0
        %604 = vmatpush2.bf16.msra.mxu0 0
        %605 = vmatprep.subr.bf16.mxu0 0
        %606 = vmatpush2.bf16.msra.mxu0 0
        %607 = vmatprep.subr.bf16.mxu0 0
        %608 = vmatpush2.bf16.msra.mxu0 0
        %609 = vmatprep.subr.bf16.mxu0 0
        %610 = vmatpush2.bf16.msra.mxu0 0
        %611 = vmatprep.subr.bf16.mxu0 0
        %612 = vmatpush2.bf16.msra.mxu0 0
        %613 = vmatprep.mubr.bf16.mxu0 0
        %614 = vmatmul.mubr.bf16.gmra.mxu0 %v576
        %v615 = vpop.f32.mrf.mxu0
        %v616 = vadd.f32 %v550, %v615
        %v617 = vpop.f32.mrf.mxu0
        %v618 = vpop.f32.mrf.mxu0
        %v619 = vadd.f32 %v550, %v618
        %v620 = vpop.f32.mrf.mxu0
        %621 = vmatprep.mubr.bf16.mxu0 0
        %622 = vmatmul.mubr.bf16.gmra.mxu0 %v579
        %v623 = vpop.f32.mrf.mxu0
        %v624 = vadd.f32 %v550, %v623
        %v625 = vpop.f32.mrf.mxu0
        %v626 = vpop.f32.mrf.mxu0
        %v627 = vadd.f32 %v550, %v626
        %v628 = vpop.f32.mrf.mxu0
        %629 = vdwg.mxu0
        %v630 = vmul.f32 %v616, %v616
        %v631 = vmul.f32 %v619, %v619
        %v632 = vmul.f32 %v624, %v624
        %v633 = vmul.f32 %v627, %v627
        %v634 = vmul.f32 %v616, %v630
        %v635 = vmul.f32 %v619, %v631
        %v636 = vmul.f32 %v624, %v632
        %v637 = vmul.f32 %v627, %v633
        %v638 = vmul.f32 %v634, 0.044715
        %v639 = vmul.f32 %v635, 0.044715
        %v640 = vmul.f32 %v636, 0.044715
        %v641 = vmul.f32 %v637, 0.044715
        %v642 = vadd.f32 %v616, %v638
        %v643 = vadd.f32 %v619, %v639
        %v644 = vadd.f32 %v624, %v640
        %v645 = vadd.f32 %v627, %v641
        %v646 = vmul.f32 %v642, 0.7978846
        %v647 = vmul.f32 %v643, 0.7978846
        %v648 = vmul.f32 %v644, 0.7978846
        %v649 = vmul.f32 %v645, 0.7978846
        %v650 = vtanh.pop %v646
        %v651 = vtanh.pop %v647
        %v652 = vtanh.pop %v648
        %v653 = vtanh.pop %v649
        %v654 = vadd.f32 %v650, 1.0
        %v655 = vadd.f32 %v651, 1.0
        %v656 = vadd.f32 %v652, 1.0
        %v657 = vadd.f32 %v653, 1.0
        %v658 = vmul.f32 %v654, 0.5
        %v659 = vmul.f32 %v655, 0.5
        %v660 = vmul.f32 %v656, 0.5
        %v661 = vmul.f32 %v657, 0.5
        %v662 = vmul.f32 %v616, %v658
        %v663 = vmul.f32 %v619, %v659
        %v664 = vmul.f32 %v624, %v660
        %v665 = vmul.f32 %v627, %v661
        %v666 = vmul.f32 %v662, %v527
        %v667 = vmul.f32 %v663, %v530
        %v668 = vmul.f32 %v664, %v533
        %v669 = vmul.f32 %v665, %v536
        %v670 = vpack.c.bf16 %v667, %v666
        %v671 = vpack.c.bf16 %v669, %v668
        %v672 = vld [vmem:[%s397] sm:$0xf]
        %v673 = vld [vmem:[%s397 + $0x4] sm:$0xf]
        %v674 = vld [vmem:[%s397 + $0x8] sm:$0xf]
        %v675 = vld [vmem:[%s397 + $0xc] sm:$0xf]
        %v676 = vld [vmem:[%s397 + $0x10] sm:$0xf]
        %v677 = vld [vmem:[%s397 + $0x14] sm:$0xf]
        %v678 = vld [vmem:[%s397 + $0x18] sm:$0xf]
        %v679 = vld [vmem:[%s397 + $0x1c] sm:$0xf]
        %v680 = vld [vmem:[#allocation3] sm:$0xff]
        %v681 = vld [vmem:[#allocation3 + $0x8] sm:$0xff]
        %v682 = vld [vmem:[#allocation3 + $0x10] sm:$0xff]
        %v683 = vld [vmem:[#allocation3 + $0x18] sm:$0xff]
        %v684 = vld [vmem:[%s400] sm:$0x1]
        %v686 = vlaneseq
        %v687 = vshrl.u32 %v686, 7
        %v688 = vsub.s32 0, %v687
        %v689 = vrot.slane %v684, %v688
        %v691 = vmul.f32 %v527, %v689
        %v692 = vmul.f32 %v530, %v689
        %v693 = vmul.f32 %v533, %v689
        %v694 = vmul.f32 %v536, %v689
        %v703 = vunpack.c.l.b16 %v672
        %v704 = vunpack.c.l.b16 %v673
        %v705 = vunpack.c.l.b16 %v674
        %v706 = vunpack.c.l.b16 %v675
        %v707 = vunpack.c.l.b16 %v676
        %v708 = vunpack.c.l.b16 %v677
        %v709 = vunpack.c.l.b16 %v678
        %v710 = vunpack.c.l.b16 %v679
        %v711 = vpack.c.b16 %v704, %v703
        %v712 = vpack.c.b16 %v706, %v705
        %v713 = vpack.c.b16 %v708, %v707
        %v714 = vpack.c.b16 %v710, %v709
        %vm719 = vcmask 523264
        %v721 = vsel %vm719, %v670, 0
        %v724 = vsel %vm719, %v671, 0
        %726 = vmatprep.subr.bf16.mxu0 0
        %727 = vmatpush1.bf16.msra.mxu0 0
        %728 = vmatprep.subr.bf16.mxu0 0
        %729 = vmatpush1.bf16.msra.mxu0 0
        %730 = vmatprep.subr.bf16.mxu0 0
        %731 = vmatpush1.bf16.msra.mxu0 0
        %732 = vmatprep.subr.bf16.mxu0 0
        %733 = vmatpush1.bf16.msra.mxu0 0
        %734 = vmatprep.subr.bf16.mxu0 0
        %735 = vmatpush1.bf16.msra.mxu0 %v714
        %736 = vmatprep.subr.bf16.mxu0 0
        %737 = vmatpush1.bf16.msra.mxu0 %v713
        %738 = vmatprep.subr.bf16.mxu0 0
        %739 = vmatpush1.bf16.msra.mxu0 %v712
        %740 = vmatprep.subr.bf16.mxu0 0
        %741 = vmatpush1.bf16.msra.mxu0 %v711
        %742 = vmatprep.subr.bf16.mxu0 0
        %743 = vmatpush2.bf16.msra.mxu0 0
        %744 = vmatprep.subr.bf16.mxu0 0
        %745 = vmatpush2.bf16.msra.mxu0 0
        %746 = vmatprep.subr.bf16.mxu0 0
        %747 = vmatpush2.bf16.msra.mxu0 0
        %748 = vmatprep.subr.bf16.mxu0 0
        %749 = vmatpush2.bf16.msra.mxu0 0
        %750 = vmatprep.subr.bf16.mxu0 0
        %751 = vmatpush2.bf16.msra.mxu0 0
        %752 = vmatprep.subr.bf16.mxu0 0
        %753 = vmatpush2.bf16.msra.mxu0 0
        %754 = vmatprep.subr.bf16.mxu0 0
        %755 = vmatpush2.bf16.msra.mxu0 0
        %756 = vmatprep.subr.bf16.mxu0 0
        %757 = vmatpush2.bf16.msra.mxu0 0
        %758 = vmatprep.mubr.bf16.mxu0 0
        %759 = vmatmul.mubr.bf16.gmra.mxu0 %v721
        %v760 = vpop.f32.mrf.mxu0
        %v761 = vadd.f32 %v691, %v760
        %v762 = vpop.f32.mrf.mxu0
        %v763 = vpop.f32.mrf.mxu0
        %v764 = vadd.f32 %v692, %v763
        %v765 = vpop.f32.mrf.mxu0
        %766 = vmatprep.mubr.bf16.mxu0 0
        %767 = vmatmul.mubr.bf16.gmra.mxu0 %v724
        %v768 = vpop.f32.mrf.mxu0
        %v769 = vadd.f32 %v693, %v768
        %v770 = vpop.f32.mrf.mxu0
        %v771 = vpop.f32.mrf.mxu0
        %v772 = vadd.f32 %v694, %v771
        %v773 = vpop.f32.mrf.mxu0
        %774 = vdwg.mxu0
        %v775 = vadd.f32 %v680, %v761
        %v776 = vadd.f32 %v681, %v764
        %v777 = vadd.f32 %v682, %v769
        %v778 = vadd.f32 %v683, %v772
        %779 = vst.msk [vmem:[#allocation3] sm:$0xff] %vm574, %v775
        %780 = vst.msk [vmem:[#allocation3 + $0x8] sm:$0xff] %vm574, %v776
        %781 = vst.msk [vmem:[#allocation3 + $0x10] sm:$0xff] %vm574, %v777
        %782 = vst.msk [vmem:[#allocation3 + $0x18] sm:$0xff] %vm574, %v778
        %p783 = scmp.eq.s32.totalorder %s25, 3
        // Predicated region
        $region57: #{encoder_forward.19} parent=51 // pred_check
          %p784 = pneg %p783
        $region58: #{encoder_forward.19} parent=51 // pred_check_branch
          %786 = sbr.rel (%p784) target = $region60
        $region59: #{encoder_forward.19} parent=51 // pred_region
          %v787 = vld [vmem:[#allocation3] sm:$0xff]
          %v788 = vld [vmem:[#allocation3 + $0x8] sm:$0xff]
          %v789 = vld [vmem:[#allocation3 + $0x10] sm:$0xff]
          %v790 = vld [vmem:[#allocation3 + $0x18] sm:$0xff]
          %v791 = vld [vmem:[%s377] sm:$0xff]
          %v792 = vld [vmem:[%s377 + $0x8] sm:$0xff]
          %v793 = vld [vmem:[%s377 + $0x10] sm:$0xff]
          %v794 = vld [vmem:[%s377 + $0x18] sm:$0xff]
          %v795 = vadd.f32 %v787, %v791
          %v796 = vadd.f32 %v788, %v792
          %v797 = vadd.f32 %v789, %v793
          %v798 = vadd.f32 %v790, %v794
          %799 = vst.msk [vmem:[#allocation4] sm:$0xff] %vm574, %v795
          %800 = vst.msk [vmem:[#allocation4 + $0x8] sm:$0xff] %vm574, %v796
          %801 = vst.msk [vmem:[#allocation4 + $0x10] sm:$0xff] %vm574, %v797
          %802 = vst.msk [vmem:[#allocation4 + $0x18] sm:$0xff] %vm574, %v798
        $region60: #{encoder_forward.19} parent=51 // pred_fallthru
          _
        // Predicated region
        $region61: #{encoder_forward.19} parent=51 // pred_check
          %p803 = pneg %p248
        $region62: #{encoder_forward.19} parent=51 // pred_check_branch
          %805 = sbr.rel (%p803) target = $region64
        $region63: #{encoder_forward.19} parent=51 // pred_region
          %s806 = smul.u32 4, %s24
          %s808 = ssub.s32 512, 512
          %809 = vsyncadd [#allocation5], %s808
          %s810 = smul.addr %s806, 128
          %s811 = scalar_lea.hbm %s8, %s810
          %s812 = sshll.u32 [#allocation4], 4
          %s813 = int_to_ptr.vmem [resolvable:$true] %s812
          %818 = dma.vmem_to_hbm [thread:$0]  %s813, 512, %s811, [#allocation5], 128, 128, 8
        $region64: #{encoder_forward.19} parent=51 // pred_fallthru
          _
        // Predicated region
        $region65: #{encoder_forward.19} parent=51 // pred_check
          %p819 = pneg %p248
        $region66: #{encoder_forward.19} parent=51 // pred_check_branch
          %821 = sbr.rel (%p819) target = $region68
        $region67: #{encoder_forward.19} parent=51 // pred_region
          %822 = dma.done [#allocation5], 512
        $region68: #{encoder_forward.19} parent=51 // pred_fallthru
          _
      $region52: #{encoder_forward.19} parent=5 // pred_fallthru
        _
      %p823 = scmp.le.s32.totalorder 2, %s15
      // Predicated region
      $region69: #{encoder_forward.19} parent=5 // pred_check
        %p824 = pneg %p823
      $region70: #{encoder_forward.19} parent=5 // pred_check_branch
        %826 = sbr.rel (%p824) target = $region72
      $region71: #{encoder_forward.19} parent=5 // pred_region
        %s827 = ssub.s32 %s15, 2
      $region72: #{encoder_forward.19} parent=5 // pred_fallthru
        _
    $region6: #{encoder_forward.19} parent=1 // loop_footer
      %s19 = sadd.s32 1, %s15
    $region7: #{encoder_forward.19} parent=1 // loop_footer_branch
      %14 = sbr.rel target = $region3
    $region8: #{encoder_forward.19} parent=1 // loop_exit
      _
    %828 = vsyncpa [#allocation5], 1
    %s829 = scalar_lea.sflag [#allocation5], 1
    %830 = vsyncpa %s829, 1

</llo_original>
